<compile_context>
chip_gen: v5e
topology: v5e:2x2
jax: 0.10.0
libtpu: 0.0.40
codegen_flags: <defaults>
</compile_context>

<pallas_src>
import functools
import math

import jax
import jax.numpy as jnp
from jax.experimental import pallas as pl
from jax.experimental.pallas import tpu as pltpu

# ----------------------------- model config ---------------------------------
NUM_CLASSES = 10
NUM_BLOCKS = 2
IN_CHANNELS = 4
IMG_SIZE = 16
PATCH = 4
EMBED_DIM = 32
NUM_HEADS = 8
HEAD_DIM = EMBED_DIM // NUM_HEADS
MLP_DIM = 64
LN_EPS = 1e-5
ATTN_SCALE = 1.0 / math.sqrt(HEAD_DIM)
HEAD_PAD = 128          # lane-dense classifier output width (sliced to 10 outside)
MAX_TILE_B = 8          # max batch elements folded into one grid step
MXU_DTYPE = jnp.bfloat16  # matmul-operand dtype (jnp.float32 => exact-f32 matmuls)


# ----------------------------- fused kernel ----------------------------------
def _vit_kernel(
    patches_ref, pw_ref, cls_pos_ref, pos_patch_ref,
    tmat_ref, mmask_ref, gmat_ref,
    ln1g_ref, ln1b_ref, wqkv_ref, bqkv_ref, wo_ref, bo_ref,
    ln2g_ref, ln2b_ref, w1_ref, b1_ref, w2_ref, b2_ref,
    hlng_ref, hlnb_ref, hw_ref, hb_ref,
    out_ref,
):
    """One grid step == TILE_B batch elements. Everything stays in VMEM/vregs."""
    f32 = jnp.float32
    mxu = MXU_DTYPE
    TB = patches_ref.shape[0]          # batch elements folded into this step
    N = patches_ref.shape[1]           # patches per image
    S = N + 1                          # tokens (CLS + patches)
    D = EMBED_DIM

    def layer_norm(t, g, b):
        # fused single-pass mean / mean-of-squares
        mu = jnp.mean(t, axis=-1, keepdims=True)
        ms = jnp.mean(t * t, axis=-1, keepdims=True)
        inv = jax.lax.rsqrt(ms - mu * mu + LN_EPS)
        return (t - mu) * inv * g + b

    def gelu_exact(t):  # matches torch.nn.GELU default (erf)
        return 0.5 * t * (1.0 + jax.lax.erf(t * (1.0 / math.sqrt(2.0))))

    def mm(a, b):       # MXU matmul with bf16 operands, f32 accumulation
        return jnp.dot(a.astype(mxu), b.astype(mxu), preferred_element_type=f32)

    tmat = tmat_ref[...]     # (H*S, S)  per-head row-replication matrix * ATTN_SCALE
    mmask = mmask_ref[...]   # (H*S, D)  0/1 head-column mask (f32)
    gmat = gmat_ref[...]     # (S, H*S)  head-sum (re-assemble concat-of-heads)

    # --- patch embedding + CLS/pos: build the (TB*S, D) token slab ----------
    parts = []
    for b in range(TB):
        emb = mm(patches_ref[b], pw_ref[...]) + pos_patch_ref[...]   # (N, D)
        parts.append(cls_pos_ref[...])                               # (1, D) = pos[0]+cls
        parts.append(emb)
    x = jnp.concatenate(parts, axis=0)                               # (TB*S, D)

    # --- encoder blocks (statically unrolled, weights resident in VMEM) -----
    for blk in range(NUM_BLOCKS):
        # pre-LN multi-head self-attention
        h = layer_norm(x, ln1g_ref[blk], ln1b_ref[blk])
        qkv = mm(h, wqkv_ref[blk]) + bqkv_ref[blk]                   # (TB*S, 3D)

        attn_parts = []
        for b in range(TB):                # per-(batch) loop; heads fully batched
            r0 = b * S
            qb = qkv[r0:r0 + S, 0 * D:1 * D]                         # (S, D)
            kb = qkv[r0:r0 + S, 1 * D:2 * D]
            vb = qkv[r0:r0 + S, 2 * D:3 * D]
            # Replicate Q once per head and mask to that head's columns:
            # row (h, i) of qs holds scale * Q[i] restricted to head-h dims.
            qs = mm(tmat, qb) * mmask                                # (H*S, D)
            # One MXU call => all per-head score matrices stacked along rows.
            sc = jax.lax.dot_general(
                qs.astype(mxu), kb.astype(mxu),
                (((1,), (1,)), ((), ())), preferred_element_type=f32)  # (H*S, S)
            m = jnp.max(sc, axis=-1, keepdims=True)
            e = jnp.exp(sc - m)
            p = e * pl.reciprocal(jnp.sum(e, axis=-1, keepdims=True), approx=True)
            # One MXU call => all per-head P@V outputs; mask + head-sum re-assembles
            # the concatenated-heads (S, D) result with one more matmul.
            ob = mm(p, vb) * mmask                                   # (H*S, D)
            attn_parts.append(mm(gmat, ob))                          # (S, D)
        attn = jnp.concatenate(attn_parts, axis=0)                   # (TB*S, D)
        x = x + mm(attn, wo_ref[blk]) + bo_ref[blk]

        # pre-LN MLP (intermediate never leaves VMEM)
        h2 = layer_norm(x, ln2g_ref[blk], ln2b_ref[blk])
        m1 = gelu_exact(mm(h2, w1_ref[blk]) + b1_ref[blk])           # (TB*S, MLP_DIM)
        x = x + mm(m1, w2_ref[blk]) + b2_ref[blk]

    # --- classification head on the TB CLS rows (one batched matmul) --------
    cls_rows = jnp.concatenate([x[b * S:b * S + 1, :] for b in range(TB)], axis=0)
    hcls = layer_norm(cls_rows, hlng_ref[...], hlnb_ref[...])        # (TB, D)
    logits = mm(hcls, hw_ref[...]) + hb_ref[...]                     # (TB, HEAD_PAD)
    out_ref[0] = logits.astype(out_ref.dtype)


def _const_index_map(i, *, ndim):
    return (0,) * ndim


# ----------------------------- forward wrapper --------------------------------
def vit_forward(x, params):
    B, C, H, W = x.shape
    nH, nW = H // PATCH, W // PATCH
    N = nH * nW
    S = N + 1
    Cpp = C * PATCH * PATCH
    D = EMBED_DIM
    f32 = jnp.float32

    # Conv2d(k=p, s=p) as a matmul over channel-major patch vectors: (B, N, C*p*p).
    patches = (
        x.reshape(B, C, nH, PATCH, nW, PATCH)
        .transpose(0, 2, 4, 1, 3, 5)
        .reshape(B, N, Cpp)
    )

    # Batch folding: TILE_B elements per grid step, but keep >=2 parallel steps
    # whenever B >= 2 so both v7x TensorCores get work.
    tile_b = max(1, min(MAX_TILE_B, (B + 1) // 2))
    num_steps = (B + tile_b - 1) // tile_b
    b_pad = num_steps * tile_b
    if b_pad != B:
        patches = jnp.concatenate(
            [patches, jnp.zeros((b_pad - B, N, Cpp), patches.dtype)], axis=0)
    patches = patches.astype(MXU_DTYPE)

    # Fold CLS token / conv bias into the positional table (CLS row bypasses conv).
    cls_pos = params["pos_emb"][0:1, :] + params["cls_token"]          # (1, D)
    pos_patch = params["pos_emb"][1:, :] + params["patch_b"]           # (N, D)

    # Attention constants turning the per-head loop into 4 full-width MXU calls:
    #   tmat  (H*S, S): replicate Q per head (ATTN_SCALE folded in)
    #   mmask (H*S, D): 0/1 mask selecting head h's Dh columns for row block h
    #   gmat  (S, H*S): sum the disjoint head blocks back into concat-of-heads
    eye_s = jnp.eye(S, dtype=f32)
    tmat = (jnp.tile(eye_s, (NUM_HEADS, 1)) * ATTN_SCALE).astype(MXU_DTYPE)
    gmat = jnp.tile(eye_s, (1, NUM_HEADS)).astype(MXU_DTYPE)
    row_h = jnp.arange(NUM_HEADS * S) // S
    col_h = jnp.arange(D) // HEAD_DIM
    mmask = (row_h[:, None] == col_h[None, :]).astype(f32)

    # Lane-dense classifier head: pad output width 10 -> 128, slice after the kernel.
    head_w = jnp.pad(params["head_w"], ((0, 0), (0, HEAD_PAD - NUM_CLASSES)))
    head_b = jnp.pad(params["head_b"], ((0, 0), (0, HEAD_PAD - NUM_CLASSES)))

    def w16(a):  # matmul-operand weights -> MXU dtype (bf16 on v6e/v7x)
        return a.astype(MXU_DTYPE)

    weights = [
        w16(params["patch_w"]), cls_pos, pos_patch,
        tmat, mmask, gmat,
        params["ln1_g"], params["ln1_b"], w16(params["wqkv"]), params["bqkv"],
        w16(params["wo"]), params["bo"], params["ln2_g"], params["ln2_b"],
        w16(params["w1"]), params["b1"], w16(params["w2"]), params["b2"],
        params["head_ln_g"], params["head_ln_b"], w16(head_w), head_b,
    ]
    in_specs = [pl.BlockSpec((tile_b, N, Cpp), lambda i: (i, 0, 0))] + [
        pl.BlockSpec(w.shape, functools.partial(_const_index_map, ndim=w.ndim))
        for w in weights
    ]

    out = pl.pallas_call(
        _vit_kernel,
        out_shape=jax.ShapeDtypeStruct((num_steps, tile_b, HEAD_PAD), f32),
        grid=(num_steps,),
        in_specs=in_specs,
        out_specs=pl.BlockSpec((1, tile_b, HEAD_PAD), lambda i: (i, 0, 0)),
        compiler_params=pltpu.CompilerParams(dimension_semantics=("parallel",)),
    )(patches, *weights)

    return out.reshape(b_pad, HEAD_PAD)[:B, :NUM_CLASSES]


# ----------------------------- param init ------------------------------------
def init_params(key):
    ks = jax.random.split(key, 8)

    def w(k, shape, scale=0.02):
        return jax.random.normal(k, shape, jnp.float32) * scale

    D = EMBED_DIM
    NB = NUM_BLOCKS
    S = (IMG_SIZE // PATCH) ** 2 + 1
    Cpp = IN_CHANNELS * PATCH * PATCH

    return {
        "patch_w": w(ks[0], (Cpp, D)),
        "patch_b": jnp.zeros((1, D), jnp.float32),
        "cls_token": w(ks[1], (1, D)),
        "pos_emb": w(ks[2], (S, D)),
        # per-encoder-block weights stacked along a leading (NUM_BLOCKS, ...) axis
        "ln1_g": jnp.ones((NB, 1, D), jnp.float32),
        "ln1_b": jnp.zeros((NB, 1, D), jnp.float32),
        "wqkv": w(ks[3], (NB, D, 3 * D)),          # merged Q/K/V projection
        "bqkv": jnp.zeros((NB, 1, 3 * D), jnp.float32),
        "wo": w(ks[4], (NB, D, D)),
        "bo": jnp.zeros((NB, 1, D), jnp.float32),
        "ln2_g": jnp.ones((NB, 1, D), jnp.float32),
        "ln2_b": jnp.zeros((NB, 1, D), jnp.float32),
        "w1": w(ks[5], (NB, D, MLP_DIM)),
        "b1": jnp.zeros((NB, 1, MLP_DIM), jnp.float32),
        "w2": w(ks[6], (NB, MLP_DIM, D)),
        "b2": jnp.zeros((NB, 1, D), jnp.float32),
        "head_ln_g": jnp.ones((1, D), jnp.float32),
        "head_ln_b": jnp.zeros((1, D), jnp.float32),
        "head_w": w(ks[7], (D, NUM_CLASSES)),
        "head_b": jnp.zeros((1, NUM_CLASSES), jnp.float32),
    }


# ----------------------------- main -------------------------------------------
if __name__ == "__main__":
    key = jax.random.PRNGKey(0)
    k_x, k_p = jax.random.split(key)
    x = jax.random.normal(k_x, (2, IN_CHANNELS, IMG_SIZE, IMG_SIZE), jnp.float32)
    params = init_params(k_p)

    logits = jax.jit(vit_forward)(x, params)
    jax.block_until_ready(logits)

    assert logits.shape == (2, NUM_CLASSES), logits.shape
    assert bool(jnp.all(jnp.isfinite(logits)))
    print("KERNEL_OK")
</pallas_src>

<mosaic_0001>
module attributes {stable_mosaic.version = 11 : i64} {
  func.func @_vit_kernel(%arg0: i32, %arg1: memref<1x16x64xbf16, #tpu.memory_space<vmem>>, %arg2: memref<64x32xbf16, #tpu.memory_space<vmem>>, %arg3: memref<1x32xf32, #tpu.memory_space<vmem>>, %arg4: memref<16x32xf32, #tpu.memory_space<vmem>>, %arg5: memref<136x17xbf16, #tpu.memory_space<vmem>>, %arg6: memref<136x32xf32, #tpu.memory_space<vmem>>, %arg7: memref<17x136xbf16, #tpu.memory_space<vmem>>, %arg8: memref<2x1x32xf32, #tpu.memory_space<vmem>>, %arg9: memref<2x1x32xf32, #tpu.memory_space<vmem>>, %arg10: memref<2x32x96xbf16, #tpu.memory_space<vmem>>, %arg11: memref<2x1x96xf32, #tpu.memory_space<vmem>>, %arg12: memref<2x32x32xbf16, #tpu.memory_space<vmem>>, %arg13: memref<2x1x32xf32, #tpu.memory_space<vmem>>, %arg14: memref<2x1x32xf32, #tpu.memory_space<vmem>>, %arg15: memref<2x1x32xf32, #tpu.memory_space<vmem>>, %arg16: memref<2x32x64xbf16, #tpu.memory_space<vmem>>, %arg17: memref<2x1x64xf32, #tpu.memory_space<vmem>>, %arg18: memref<2x64x32xbf16, #tpu.memory_space<vmem>>, %arg19: memref<2x1x32xf32, #tpu.memory_space<vmem>>, %arg20: memref<1x32xf32, #tpu.memory_space<vmem>>, %arg21: memref<1x32xf32, #tpu.memory_space<vmem>>, %arg22: memref<32x128xbf16, #tpu.memory_space<vmem>>, %arg23: memref<1x128xf32, #tpu.memory_space<vmem>>, %arg24: memref<1x1x128xf32, #tpu.memory_space<vmem>>) attributes {dimension_semantics = [#tpu.dimension_semantics<parallel>], iteration_bounds = array<i64: 2>, scalar_prefetch = 0 : i64, scratch_operands = 0 : i64, tpu.core_type = #tpu.core_type<tc>, window_params = [{transform_indices = @transform_0, window_bounds = array<i64: 1, 16, 64>}, {pipeline_mode = #tpu.pipeline_mode<synchronous>, transform_indices = @transform_1, window_bounds = array<i64: 64, 32>}, {pipeline_mode = #tpu.pipeline_mode<synchronous>, transform_indices = @transform_2, window_bounds = array<i64: 1, 32>}, {pipeline_mode = #tpu.pipeline_mode<synchronous>, transform_indices = @transform_3, window_bounds = array<i64: 16, 32>}, {pipeline_mode = #tpu.pipeline_mode<synchronous>, transform_indices = @transform_4, window_bounds = array<i64: 136, 17>}, {pipeline_mode = #tpu.pipeline_mode<synchronous>, transform_indices = @transform_5, window_bounds = array<i64: 136, 32>}, {pipeline_mode = #tpu.pipeline_mode<synchronous>, transform_indices = @transform_6, window_bounds = array<i64: 17, 136>}, {pipeline_mode = #tpu.pipeline_mode<synchronous>, transform_indices = @transform_7, window_bounds = array<i64: 2, 1, 32>}, {pipeline_mode = #tpu.pipeline_mode<synchronous>, transform_indices = @transform_8, window_bounds = array<i64: 2, 1, 32>}, {pipeline_mode = #tpu.pipeline_mode<synchronous>, transform_indices = @transform_9, window_bounds = array<i64: 2, 32, 96>}, {pipeline_mode = #tpu.pipeline_mode<synchronous>, transform_indices = @transform_10, window_bounds = array<i64: 2, 1, 96>}, {pipeline_mode = #tpu.pipeline_mode<synchronous>, transform_indices = @transform_11, window_bounds = array<i64: 2, 32, 32>}, {pipeline_mode = #tpu.pipeline_mode<synchronous>, transform_indices = @transform_12, window_bounds = array<i64: 2, 1, 32>}, {pipeline_mode = #tpu.pipeline_mode<synchronous>, transform_indices = @transform_13, window_bounds = array<i64: 2, 1, 32>}, {pipeline_mode = #tpu.pipeline_mode<synchronous>, transform_indices = @transform_14, window_bounds = array<i64: 2, 1, 32>}, {pipeline_mode = #tpu.pipeline_mode<synchronous>, transform_indices = @transform_15, window_bounds = array<i64: 2, 32, 64>}, {pipeline_mode = #tpu.pipeline_mode<synchronous>, transform_indices = @transform_16, window_bounds = array<i64: 2, 1, 64>}, {pipeline_mode = #tpu.pipeline_mode<synchronous>, transform_indices = @transform_17, window_bounds = array<i64: 2, 64, 32>}, {pipeline_mode = #tpu.pipeline_mode<synchronous>, transform_indices = @transform_18, window_bounds = array<i64: 2, 1, 32>}, {pipeline_mode = #tpu.pipeline_mode<synchronous>, transform_indices = @transform_19, window_bounds = array<i64: 1, 32>}, {pipeline_mode = #tpu.pipeline_mode<synchronous>, transform_indices = @transform_20, window_bounds = array<i64: 1, 32>}, {pipeline_mode = #tpu.pipeline_mode<synchronous>, transform_indices = @transform_21, window_bounds = array<i64: 32, 128>}, {pipeline_mode = #tpu.pipeline_mode<synchronous>, transform_indices = @transform_22, window_bounds = array<i64: 1, 128>}, {transform_indices = @transform_23, window_bounds = array<i64: 1, 1, 128>}]} {
    %c0 = arith.constant 0 : index
    %c0_0 = arith.constant 0 : index
    %0 = vector.load %arg5[%c0, %c0_0] : memref<136x17xbf16, #tpu.memory_space<vmem>>, vector<136x17xbf16>
    %c0_1 = arith.constant 0 : index
    %c0_2 = arith.constant 0 : index
    %1 = vector.load %arg6[%c0_1, %c0_2] : memref<136x32xf32, #tpu.memory_space<vmem>>, vector<136x32xf32>
    %c0_3 = arith.constant 0 : index
    %c0_4 = arith.constant 0 : index
    %2 = vector.load %arg7[%c0_3, %c0_4] : memref<17x136xbf16, #tpu.memory_space<vmem>>, vector<17x136xbf16>
    %c0_5 = arith.constant 0 : index
    %c0_6 = arith.constant 0 : index
    %c0_7 = arith.constant 0 : index
    %3 = vector.load %arg1[%c0_5, %c0_6, %c0_7] : memref<1x16x64xbf16, #tpu.memory_space<vmem>>, vector<1x16x64xbf16>
    %4 = vector.shape_cast %3 : vector<1x16x64xbf16> to vector<16x64xbf16>
    %c0_8 = arith.constant 0 : index
    %c0_9 = arith.constant 0 : index
    %5 = vector.load %arg2[%c0_8, %c0_9] : memref<64x32xbf16, #tpu.memory_space<vmem>>, vector<64x32xbf16>
    %cst = arith.constant dense<0.000000e+00> : vector<16x32xf32>
    %6 = tpu.matmul %4, %5, %cst {dimension_numbers = #tpu.dot_dimension_numbers<[1], [0], [0], [1], [0, 0, 1, 1], [], []>} : vector<16x64xbf16>, vector<64x32xbf16>, vector<16x32xf32> -> vector<16x32xf32>
    %c0_10 = arith.constant 0 : index
    %c0_11 = arith.constant 0 : index
    %7 = vector.load %arg4[%c0_10, %c0_11] : memref<16x32xf32, #tpu.memory_space<vmem>>, vector<16x32xf32>
    %8 = arith.addf %6, %7 : vector<16x32xf32>
    %c0_12 = arith.constant 0 : index
    %c0_13 = arith.constant 0 : index
    %9 = vector.load %arg3[%c0_12, %c0_13] : memref<1x32xf32, #tpu.memory_space<vmem>>, vector<1x32xf32>
    %10 = tpu.concatenate %9, %8 in 0 : vector<1x32xf32>, vector<16x32xf32> -> vector<17x32xf32>
    %c0_14 = arith.constant 0 : index
    %c0_15 = arith.constant 0 : index
    %c0_16 = arith.constant 0 : index
    %11 = vector.load %arg8[%c0_14, %c0_15, %c0_16] : memref<2x1x32xf32, #tpu.memory_space<vmem>>, vector<1x1x32xf32>
    %12 = vector.shape_cast %11 : vector<1x1x32xf32> to vector<1x32xf32>
    %c0_17 = arith.constant 0 : index
    %c0_18 = arith.constant 0 : index
    %c0_19 = arith.constant 0 : index
    %13 = vector.load %arg9[%c0_17, %c0_18, %c0_19] : memref<2x1x32xf32, #tpu.memory_space<vmem>>, vector<1x1x32xf32>
    %14 = vector.shape_cast %13 : vector<1x1x32xf32> to vector<1x32xf32>
    %cst_20 = arith.constant dense<0.000000e+00> : vector<17xf32>
    %15 = vector.multi_reduction <add>, %10, %cst_20 [1] : vector<17x32xf32> to vector<17xf32>
    %16 = vector.shape_cast %15 : vector<17xf32> to vector<17x1xf32>
    %cst_21 = arith.constant 3.200000e+01 : f32
    %17 = vector.broadcast %cst_21 : f32 to vector<17x1xf32>
    %18 = arith.divf %16, %17 : vector<17x1xf32>
    %19 = arith.mulf %10, %10 : vector<17x32xf32>
    %cst_22 = arith.constant dense<0.000000e+00> : vector<17xf32>
    %20 = vector.multi_reduction <add>, %19, %cst_22 [1] : vector<17x32xf32> to vector<17xf32>
    %21 = vector.shape_cast %20 : vector<17xf32> to vector<17x1xf32>
    %cst_23 = arith.constant 3.200000e+01 : f32
    %22 = vector.broadcast %cst_23 : f32 to vector<17x1xf32>
    %23 = arith.divf %21, %22 : vector<17x1xf32>
    %24 = arith.mulf %18, %18 : vector<17x1xf32>
    %25 = arith.subf %23, %24 : vector<17x1xf32>
    %cst_24 = arith.constant 9.99999974E-6 : f32
    %26 = vector.broadcast %cst_24 : f32 to vector<17x1xf32>
    %27 = arith.addf %25, %26 : vector<17x1xf32>
    %28 = math.rsqrt %27 : vector<17x1xf32>
    %29 = vector.broadcast %18 : vector<17x1xf32> to vector<17x32xf32>
    %30 = arith.subf %10, %29 : vector<17x32xf32>
    %31 = vector.broadcast %28 : vector<17x1xf32> to vector<17x32xf32>
    %32 = arith.mulf %30, %31 : vector<17x32xf32>
    %33 = vector.broadcast %12 : vector<1x32xf32> to vector<17x32xf32>
    %34 = arith.mulf %32, %33 : vector<17x32xf32>
    %35 = vector.broadcast %14 : vector<1x32xf32> to vector<17x32xf32>
    %36 = arith.addf %34, %35 : vector<17x32xf32>
    %c0_25 = arith.constant 0 : index
    %c0_26 = arith.constant 0 : index
    %c0_27 = arith.constant 0 : index
    %37 = vector.load %arg10[%c0_25, %c0_26, %c0_27] : memref<2x32x96xbf16, #tpu.memory_space<vmem>>, vector<1x32x96xbf16>
    %38 = vector.shape_cast %37 : vector<1x32x96xbf16> to vector<32x96xbf16>
    %39 = arith.truncf %36 : vector<17x32xf32> to vector<17x32xbf16>
    %cst_28 = arith.constant dense<0.000000e+00> : vector<17x96xf32>
    %40 = tpu.matmul %39, %38, %cst_28 {dimension_numbers = #tpu.dot_dimension_numbers<[1], [0], [0], [1], [0, 0, 1, 1], [], []>} : vector<17x32xbf16>, vector<32x96xbf16>, vector<17x96xf32> -> vector<17x96xf32>
    %c0_29 = arith.constant 0 : index
    %c0_30 = arith.constant 0 : index
    %c0_31 = arith.constant 0 : index
    %41 = vector.load %arg11[%c0_29, %c0_30, %c0_31] : memref<2x1x96xf32, #tpu.memory_space<vmem>>, vector<1x1x96xf32>
    %42 = vector.shape_cast %41 : vector<1x1x96xf32> to vector<1x96xf32>
    %43 = vector.broadcast %42 : vector<1x96xf32> to vector<17x96xf32>
    %44 = arith.addf %40, %43 : vector<17x96xf32>
    %45 = vector.extract_strided_slice %44 {offsets = [0, 0], sizes = [17, 32], strides = [1, 1]} : vector<17x96xf32> to vector<17x32xf32>
    %46 = vector.extract_strided_slice %44 {offsets = [0, 32], sizes = [17, 32], strides = [1, 1]} : vector<17x96xf32> to vector<17x32xf32>
    %47 = vector.extract_strided_slice %44 {offsets = [0, 64], sizes = [17, 32], strides = [1, 1]} : vector<17x96xf32> to vector<17x32xf32>
    %48 = arith.truncf %45 : vector<17x32xf32> to vector<17x32xbf16>
    %cst_32 = arith.constant dense<0.000000e+00> : vector<136x32xf32>
    %49 = tpu.matmul %0, %48, %cst_32 {dimension_numbers = #tpu.dot_dimension_numbers<[1], [0], [0], [1], [0, 0, 1, 1], [], []>} : vector<136x17xbf16>, vector<17x32xbf16>, vector<136x32xf32> -> vector<136x32xf32>
    %50 = arith.mulf %49, %1 : vector<136x32xf32>
    %51 = arith.truncf %50 : vector<136x32xf32> to vector<136x32xbf16>
    %52 = arith.truncf %46 : vector<17x32xf32> to vector<17x32xbf16>
    %cst_33 = arith.constant dense<0.000000e+00> : vector<136x17xf32>
    %53 = tpu.matmul %51, %52, %cst_33 {dimension_numbers = #tpu.dot_dimension_numbers<[1], [1], [0], [0], [0, 0, 1, 0], [], []>} : vector<136x32xbf16>, vector<17x32xbf16>, vector<136x17xf32> -> vector<136x17xf32>
    %cst_34 = arith.constant dense<0xFF800000> : vector<136xf32>
    %54 = vector.multi_reduction <maximumf>, %53, %cst_34 [1] : vector<136x17xf32> to vector<136xf32>
    %55 = vector.shape_cast %54 : vector<136xf32> to vector<136x1xf32>
    %56 = vector.broadcast %55 : vector<136x1xf32> to vector<136x17xf32>
    %57 = arith.subf %53, %56 : vector<136x17xf32>
    %58 = math.exp %57 : vector<136x17xf32>
    %cst_35 = arith.constant dense<0.000000e+00> : vector<136xf32>
    %59 = vector.multi_reduction <add>, %58, %cst_35 [1] : vector<136x17xf32> to vector<136xf32>
    %60 = vector.shape_cast %59 : vector<136xf32> to vector<136x1xf32>
    %61 = tpu.reciprocal %60 {approx = true} : vector<136x1xf32> -> vector<136x1xf32>
    %62 = vector.broadcast %61 : vector<136x1xf32> to vector<136x17xf32>
    %63 = arith.mulf %58, %62 : vector<136x17xf32>
    %64 = arith.truncf %63 : vector<136x17xf32> to vector<136x17xbf16>
    %65 = arith.truncf %47 : vector<17x32xf32> to vector<17x32xbf16>
    %cst_36 = arith.constant dense<0.000000e+00> : vector<136x32xf32>
    %66 = tpu.matmul %64, %65, %cst_36 {dimension_numbers = #tpu.dot_dimension_numbers<[1], [0], [0], [1], [0, 0, 1, 1], [], []>} : vector<136x17xbf16>, vector<17x32xbf16>, vector<136x32xf32> -> vector<136x32xf32>
    %67 = arith.mulf %66, %1 : vector<136x32xf32>
    %68 = arith.truncf %67 : vector<136x32xf32> to vector<136x32xbf16>
    %cst_37 = arith.constant dense<0.000000e+00> : vector<17x32xf32>
    %69 = tpu.matmul %2, %68, %cst_37 {dimension_numbers = #tpu.dot_dimension_numbers<[1], [0], [0], [1], [0, 0, 1, 1], [], []>} : vector<17x136xbf16>, vector<136x32xbf16>, vector<17x32xf32> -> vector<17x32xf32>
    %c0_38 = arith.constant 0 : index
    %c0_39 = arith.constant 0 : index
    %c0_40 = arith.constant 0 : index
    %70 = vector.load %arg12[%c0_38, %c0_39, %c0_40] : memref<2x32x32xbf16, #tpu.memory_space<vmem>>, vector<1x32x32xbf16>
    %71 = vector.shape_cast %70 : vector<1x32x32xbf16> to vector<32x32xbf16>
    %72 = arith.truncf %69 : vector<17x32xf32> to vector<17x32xbf16>
    %cst_41 = arith.constant dense<0.000000e+00> : vector<17x32xf32>
    %73 = tpu.matmul %72, %71, %cst_41 {dimension_numbers = #tpu.dot_dimension_numbers<[1], [0], [0], [1], [0, 0, 1, 1], [], []>} : vector<17x32xbf16>, vector<32x32xbf16>, vector<17x32xf32> -> vector<17x32xf32>
    %74 = arith.addf %10, %73 : vector<17x32xf32>
    %c0_42 = arith.constant 0 : index
    %c0_43 = arith.constant 0 : index
    %c0_44 = arith.constant 0 : index
    %75 = vector.load %arg13[%c0_42, %c0_43, %c0_44] : memref<2x1x32xf32, #tpu.memory_space<vmem>>, vector<1x1x32xf32>
    %76 = vector.shape_cast %75 : vector<1x1x32xf32> to vector<1x32xf32>
    %77 = vector.broadcast %76 : vector<1x32xf32> to vector<17x32xf32>
    %78 = arith.addf %74, %77 : vector<17x32xf32>
    %c0_45 = arith.constant 0 : index
    %c0_46 = arith.constant 0 : index
    %c0_47 = arith.constant 0 : index
    %79 = vector.load %arg14[%c0_45, %c0_46, %c0_47] : memref<2x1x32xf32, #tpu.memory_space<vmem>>, vector<1x1x32xf32>
    %80 = vector.shape_cast %79 : vector<1x1x32xf32> to vector<1x32xf32>
    %c0_48 = arith.constant 0 : index
    %c0_49 = arith.constant 0 : index
    %c0_50 = arith.constant 0 : index
    %81 = vector.load %arg15[%c0_48, %c0_49, %c0_50] : memref<2x1x32xf32, #tpu.memory_space<vmem>>, vector<1x1x32xf32>
    %82 = vector.shape_cast %81 : vector<1x1x32xf32> to vector<1x32xf32>
    %cst_51 = arith.constant dense<0.000000e+00> : vector<17xf32>
    %83 = vector.multi_reduction <add>, %78, %cst_51 [1] : vector<17x32xf32> to vector<17xf32>
    %84 = vector.shape_cast %83 : vector<17xf32> to vector<17x1xf32>
    %cst_52 = arith.constant 3.200000e+01 : f32
    %85 = vector.broadcast %cst_52 : f32 to vector<17x1xf32>
    %86 = arith.divf %84, %85 : vector<17x1xf32>
    %87 = arith.mulf %78, %78 : vector<17x32xf32>
    %cst_53 = arith.constant dense<0.000000e+00> : vector<17xf32>
    %88 = vector.multi_reduction <add>, %87, %cst_53 [1] : vector<17x32xf32> to vector<17xf32>
    %89 = vector.shape_cast %88 : vector<17xf32> to vector<17x1xf32>
    %cst_54 = arith.constant 3.200000e+01 : f32
    %90 = vector.broadcast %cst_54 : f32 to vector<17x1xf32>
    %91 = arith.divf %89, %90 : vector<17x1xf32>
    %92 = arith.mulf %86, %86 : vector<17x1xf32>
    %93 = arith.subf %91, %92 : vector<17x1xf32>
    %cst_55 = arith.constant 9.99999974E-6 : f32
    %94 = vector.broadcast %cst_55 : f32 to vector<17x1xf32>
    %95 = arith.addf %93, %94 : vector<17x1xf32>
    %96 = math.rsqrt %95 : vector<17x1xf32>
    %97 = vector.broadcast %86 : vector<17x1xf32> to vector<17x32xf32>
    %98 = arith.subf %78, %97 : vector<17x32xf32>
    %99 = vector.broadcast %96 : vector<17x1xf32> to vector<17x32xf32>
    %100 = arith.mulf %98, %99 : vector<17x32xf32>
    %101 = vector.broadcast %80 : vector<1x32xf32> to vector<17x32xf32>
    %102 = arith.mulf %100, %101 : vector<17x32xf32>
    %103 = vector.broadcast %82 : vector<1x32xf32> to vector<17x32xf32>
    %104 = arith.addf %102, %103 : vector<17x32xf32>
    %c0_56 = arith.constant 0 : index
    %c0_57 = arith.constant 0 : index
    %c0_58 = arith.constant 0 : index
    %105 = vector.load %arg16[%c0_56, %c0_57, %c0_58] : memref<2x32x64xbf16, #tpu.memory_space<vmem>>, vector<1x32x64xbf16>
    %106 = vector.shape_cast %105 : vector<1x32x64xbf16> to vector<32x64xbf16>
    %107 = arith.truncf %104 : vector<17x32xf32> to vector<17x32xbf16>
    %cst_59 = arith.constant dense<0.000000e+00> : vector<17x64xf32>
    %108 = tpu.matmul %107, %106, %cst_59 {dimension_numbers = #tpu.dot_dimension_numbers<[1], [0], [0], [1], [0, 0, 1, 1], [], []>} : vector<17x32xbf16>, vector<32x64xbf16>, vector<17x64xf32> -> vector<17x64xf32>
    %c0_60 = arith.constant 0 : index
    %c0_61 = arith.constant 0 : index
    %c0_62 = arith.constant 0 : index
    %109 = vector.load %arg17[%c0_60, %c0_61, %c0_62] : memref<2x1x64xf32, #tpu.memory_space<vmem>>, vector<1x1x64xf32>
    %110 = vector.shape_cast %109 : vector<1x1x64xf32> to vector<1x64xf32>
    %111 = vector.broadcast %110 : vector<1x64xf32> to vector<17x64xf32>
    %112 = arith.addf %108, %111 : vector<17x64xf32>
    %cst_63 = arith.constant 5.000000e-01 : f32
    %113 = vector.broadcast %cst_63 : f32 to vector<17x64xf32>
    %114 = arith.mulf %113, %112 : vector<17x64xf32>
    %cst_64 = arith.constant 0.707106769 : f32
    %115 = vector.broadcast %cst_64 : f32 to vector<17x64xf32>
    %116 = arith.mulf %112, %115 : vector<17x64xf32>
    %117 = math.erf %116 : vector<17x64xf32>
    %cst_65 = arith.constant 1.000000e+00 : f32
    %118 = vector.broadcast %cst_65 : f32 to vector<17x64xf32>
    %119 = arith.addf %118, %117 : vector<17x64xf32>
    %120 = arith.mulf %114, %119 : vector<17x64xf32>
    %c0_66 = arith.constant 0 : index
    %c0_67 = arith.constant 0 : index
    %c0_68 = arith.constant 0 : index
    %121 = vector.load %arg18[%c0_66, %c0_67, %c0_68] : memref<2x64x32xbf16, #tpu.memory_space<vmem>>, vector<1x64x32xbf16>
    %122 = vector.shape_cast %121 : vector<1x64x32xbf16> to vector<64x32xbf16>
    %123 = arith.truncf %120 : vector<17x64xf32> to vector<17x64xbf16>
    %cst_69 = arith.constant dense<0.000000e+00> : vector<17x32xf32>
    %124 = tpu.matmul %123, %122, %cst_69 {dimension_numbers = #tpu.dot_dimension_numbers<[1], [0], [0], [1], [0, 0, 1, 1], [], []>} : vector<17x64xbf16>, vector<64x32xbf16>, vector<17x32xf32> -> vector<17x32xf32>
    %125 = arith.addf %78, %124 : vector<17x32xf32>
    %c0_70 = arith.constant 0 : index
    %c0_71 = arith.constant 0 : index
    %c0_72 = arith.constant 0 : index
    %126 = vector.load %arg19[%c0_70, %c0_71, %c0_72] : memref<2x1x32xf32, #tpu.memory_space<vmem>>, vector<1x1x32xf32>
    %127 = vector.shape_cast %126 : vector<1x1x32xf32> to vector<1x32xf32>
    %128 = vector.broadcast %127 : vector<1x32xf32> to vector<17x32xf32>
    %129 = arith.addf %125, %128 : vector<17x32xf32>
    %c1 = arith.constant 1 : index
    %c0_73 = arith.constant 0 : index
    %c0_74 = arith.constant 0 : index
    %130 = vector.load %arg8[%c1, %c0_73, %c0_74] : memref<2x1x32xf32, #tpu.memory_space<vmem>>, vector<1x1x32xf32>
    %131 = vector.shape_cast %130 : vector<1x1x32xf32> to vector<1x32xf32>
    %c1_75 = arith.constant 1 : index
    %c0_76 = arith.constant 0 : index
    %c0_77 = arith.constant 0 : index
    %132 = vector.load %arg9[%c1_75, %c0_76, %c0_77] : memref<2x1x32xf32, #tpu.memory_space<vmem>>, vector<1x1x32xf32>
    %133 = vector.shape_cast %132 : vector<1x1x32xf32> to vector<1x32xf32>
    %cst_78 = arith.constant dense<0.000000e+00> : vector<17xf32>
    %134 = vector.multi_reduction <add>, %129, %cst_78 [1] : vector<17x32xf32> to vector<17xf32>
    %135 = vector.shape_cast %134 : vector<17xf32> to vector<17x1xf32>
    %cst_79 = arith.constant 3.200000e+01 : f32
    %136 = vector.broadcast %cst_79 : f32 to vector<17x1xf32>
    %137 = arith.divf %135, %136 : vector<17x1xf32>
    %138 = arith.mulf %129, %129 : vector<17x32xf32>
    %cst_80 = arith.constant dense<0.000000e+00> : vector<17xf32>
    %139 = vector.multi_reduction <add>, %138, %cst_80 [1] : vector<17x32xf32> to vector<17xf32>
    %140 = vector.shape_cast %139 : vector<17xf32> to vector<17x1xf32>
    %cst_81 = arith.constant 3.200000e+01 : f32
    %141 = vector.broadcast %cst_81 : f32 to vector<17x1xf32>
    %142 = arith.divf %140, %141 : vector<17x1xf32>
    %143 = arith.mulf %137, %137 : vector<17x1xf32>
    %144 = arith.subf %142, %143 : vector<17x1xf32>
    %cst_82 = arith.constant 9.99999974E-6 : f32
    %145 = vector.broadcast %cst_82 : f32 to vector<17x1xf32>
    %146 = arith.addf %144, %145 : vector<17x1xf32>
    %147 = math.rsqrt %146 : vector<17x1xf32>
    %148 = vector.broadcast %137 : vector<17x1xf32> to vector<17x32xf32>
    %149 = arith.subf %129, %148 : vector<17x32xf32>
    %150 = vector.broadcast %147 : vector<17x1xf32> to vector<17x32xf32>
    %151 = arith.mulf %149, %150 : vector<17x32xf32>
    %152 = vector.broadcast %131 : vector<1x32xf32> to vector<17x32xf32>
    %153 = arith.mulf %151, %152 : vector<17x32xf32>
    %154 = vector.broadcast %133 : vector<1x32xf32> to vector<17x32xf32>
    %155 = arith.addf %153, %154 : vector<17x32xf32>
    %c1_83 = arith.constant 1 : index
    %c0_84 = arith.constant 0 : index
    %c0_85 = arith.constant 0 : index
    %156 = vector.load %arg10[%c1_83, %c0_84, %c0_85] : memref<2x32x96xbf16, #tpu.memory_space<vmem>>, vector<1x32x96xbf16>
    %157 = vector.shape_cast %156 : vector<1x32x96xbf16> to vector<32x96xbf16>
    %158 = arith.truncf %155 : vector<17x32xf32> to vector<17x32xbf16>
    %cst_86 = arith.constant dense<0.000000e+00> : vector<17x96xf32>
    %159 = tpu.matmul %158, %157, %cst_86 {dimension_numbers = #tpu.dot_dimension_numbers<[1], [0], [0], [1], [0, 0, 1, 1], [], []>} : vector<17x32xbf16>, vector<32x96xbf16>, vector<17x96xf32> -> vector<17x96xf32>
    %c1_87 = arith.constant 1 : index
    %c0_88 = arith.constant 0 : index
    %c0_89 = arith.constant 0 : index
    %160 = vector.load %arg11[%c1_87, %c0_88, %c0_89] : memref<2x1x96xf32, #tpu.memory_space<vmem>>, vector<1x1x96xf32>
    %161 = vector.shape_cast %160 : vector<1x1x96xf32> to vector<1x96xf32>
    %162 = vector.broadcast %161 : vector<1x96xf32> to vector<17x96xf32>
    %163 = arith.addf %159, %162 : vector<17x96xf32>
    %164 = vector.extract_strided_slice %163 {offsets = [0, 0], sizes = [17, 32], strides = [1, 1]} : vector<17x96xf32> to vector<17x32xf32>
    %165 = vector.extract_strided_slice %163 {offsets = [0, 32], sizes = [17, 32], strides = [1, 1]} : vector<17x96xf32> to vector<17x32xf32>
    %166 = vector.extract_strided_slice %163 {offsets = [0, 64], sizes = [17, 32], strides = [1, 1]} : vector<17x96xf32> to vector<17x32xf32>
    %167 = arith.truncf %164 : vector<17x32xf32> to vector<17x32xbf16>
    %cst_90 = arith.constant dense<0.000000e+00> : vector<136x32xf32>
    %168 = tpu.matmul %0, %167, %cst_90 {dimension_numbers = #tpu.dot_dimension_numbers<[1], [0], [0], [1], [0, 0, 1, 1], [], []>} : vector<136x17xbf16>, vector<17x32xbf16>, vector<136x32xf32> -> vector<136x32xf32>
    %169 = arith.mulf %168, %1 : vector<136x32xf32>
    %170 = arith.truncf %169 : vector<136x32xf32> to vector<136x32xbf16>
    %171 = arith.truncf %165 : vector<17x32xf32> to vector<17x32xbf16>
    %cst_91 = arith.constant dense<0.000000e+00> : vector<136x17xf32>
    %172 = tpu.matmul %170, %171, %cst_91 {dimension_numbers = #tpu.dot_dimension_numbers<[1], [1], [0], [0], [0, 0, 1, 0], [], []>} : vector<136x32xbf16>, vector<17x32xbf16>, vector<136x17xf32> -> vector<136x17xf32>
    %cst_92 = arith.constant dense<0xFF800000> : vector<136xf32>
    %173 = vector.multi_reduction <maximumf>, %172, %cst_92 [1] : vector<136x17xf32> to vector<136xf32>
    %174 = vector.shape_cast %173 : vector<136xf32> to vector<136x1xf32>
    %175 = vector.broadcast %174 : vector<136x1xf32> to vector<136x17xf32>
    %176 = arith.subf %172, %175 : vector<136x17xf32>
    %177 = math.exp %176 : vector<136x17xf32>
    %cst_93 = arith.constant dense<0.000000e+00> : vector<136xf32>
    %178 = vector.multi_reduction <add>, %177, %cst_93 [1] : vector<136x17xf32> to vector<136xf32>
    %179 = vector.shape_cast %178 : vector<136xf32> to vector<136x1xf32>
    %180 = tpu.reciprocal %179 {approx = true} : vector<136x1xf32> -> vector<136x1xf32>
    %181 = vector.broadcast %180 : vector<136x1xf32> to vector<136x17xf32>
    %182 = arith.mulf %177, %181 : vector<136x17xf32>
    %183 = arith.truncf %182 : vector<136x17xf32> to vector<136x17xbf16>
    %184 = arith.truncf %166 : vector<17x32xf32> to vector<17x32xbf16>
    %cst_94 = arith.constant dense<0.000000e+00> : vector<136x32xf32>
    %185 = tpu.matmul %183, %184, %cst_94 {dimension_numbers = #tpu.dot_dimension_numbers<[1], [0], [0], [1], [0, 0, 1, 1], [], []>} : vector<136x17xbf16>, vector<17x32xbf16>, vector<136x32xf32> -> vector<136x32xf32>
    %186 = arith.mulf %185, %1 : vector<136x32xf32>
    %187 = arith.truncf %186 : vector<136x32xf32> to vector<136x32xbf16>
    %cst_95 = arith.constant dense<0.000000e+00> : vector<17x32xf32>
    %188 = tpu.matmul %2, %187, %cst_95 {dimension_numbers = #tpu.dot_dimension_numbers<[1], [0], [0], [1], [0, 0, 1, 1], [], []>} : vector<17x136xbf16>, vector<136x32xbf16>, vector<17x32xf32> -> vector<17x32xf32>
    %c1_96 = arith.constant 1 : index
    %c0_97 = arith.constant 0 : index
    %c0_98 = arith.constant 0 : index
    %189 = vector.load %arg12[%c1_96, %c0_97, %c0_98] : memref<2x32x32xbf16, #tpu.memory_space<vmem>>, vector<1x32x32xbf16>
    %190 = vector.shape_cast %189 : vector<1x32x32xbf16> to vector<32x32xbf16>
    %191 = arith.truncf %188 : vector<17x32xf32> to vector<17x32xbf16>
    %cst_99 = arith.constant dense<0.000000e+00> : vector<17x32xf32>
    %192 = tpu.matmul %191, %190, %cst_99 {dimension_numbers = #tpu.dot_dimension_numbers<[1], [0], [0], [1], [0, 0, 1, 1], [], []>} : vector<17x32xbf16>, vector<32x32xbf16>, vector<17x32xf32> -> vector<17x32xf32>
    %193 = arith.addf %129, %192 : vector<17x32xf32>
    %c1_100 = arith.constant 1 : index
    %c0_101 = arith.constant 0 : index
    %c0_102 = arith.constant 0 : index
    %194 = vector.load %arg13[%c1_100, %c0_101, %c0_102] : memref<2x1x32xf32, #tpu.memory_space<vmem>>, vector<1x1x32xf32>
    %195 = vector.shape_cast %194 : vector<1x1x32xf32> to vector<1x32xf32>
    %196 = vector.broadcast %195 : vector<1x32xf32> to vector<17x32xf32>
    %197 = arith.addf %193, %196 : vector<17x32xf32>
    %c1_103 = arith.constant 1 : index
    %c0_104 = arith.constant 0 : index
    %c0_105 = arith.constant 0 : index
    %198 = vector.load %arg14[%c1_103, %c0_104, %c0_105] : memref<2x1x32xf32, #tpu.memory_space<vmem>>, vector<1x1x32xf32>
    %199 = vector.shape_cast %198 : vector<1x1x32xf32> to vector<1x32xf32>
    %c1_106 = arith.constant 1 : index
    %c0_107 = arith.constant 0 : index
    %c0_108 = arith.constant 0 : index
    %200 = vector.load %arg15[%c1_106, %c0_107, %c0_108] : memref<2x1x32xf32, #tpu.memory_space<vmem>>, vector<1x1x32xf32>
    %201 = vector.shape_cast %200 : vector<1x1x32xf32> to vector<1x32xf32>
    %cst_109 = arith.constant dense<0.000000e+00> : vector<17xf32>
    %202 = vector.multi_reduction <add>, %197, %cst_109 [1] : vector<17x32xf32> to vector<17xf32>
    %203 = vector.shape_cast %202 : vector<17xf32> to vector<17x1xf32>
    %cst_110 = arith.constant 3.200000e+01 : f32
    %204 = vector.broadcast %cst_110 : f32 to vector<17x1xf32>
    %205 = arith.divf %203, %204 : vector<17x1xf32>
    %206 = arith.mulf %197, %197 : vector<17x32xf32>
    %cst_111 = arith.constant dense<0.000000e+00> : vector<17xf32>
    %207 = vector.multi_reduction <add>, %206, %cst_111 [1] : vector<17x32xf32> to vector<17xf32>
    %208 = vector.shape_cast %207 : vector<17xf32> to vector<17x1xf32>
    %cst_112 = arith.constant 3.200000e+01 : f32
    %209 = vector.broadcast %cst_112 : f32 to vector<17x1xf32>
    %210 = arith.divf %208, %209 : vector<17x1xf32>
    %211 = arith.mulf %205, %205 : vector<17x1xf32>
    %212 = arith.subf %210, %211 : vector<17x1xf32>
    %cst_113 = arith.constant 9.99999974E-6 : f32
    %213 = vector.broadcast %cst_113 : f32 to vector<17x1xf32>
    %214 = arith.addf %212, %213 : vector<17x1xf32>
    %215 = math.rsqrt %214 : vector<17x1xf32>
    %216 = vector.broadcast %205 : vector<17x1xf32> to vector<17x32xf32>
    %217 = arith.subf %197, %216 : vector<17x32xf32>
    %218 = vector.broadcast %215 : vector<17x1xf32> to vector<17x32xf32>
    %219 = arith.mulf %217, %218 : vector<17x32xf32>
    %220 = vector.broadcast %199 : vector<1x32xf32> to vector<17x32xf32>
    %221 = arith.mulf %219, %220 : vector<17x32xf32>
    %222 = vector.broadcast %201 : vector<1x32xf32> to vector<17x32xf32>
    %223 = arith.addf %221, %222 : vector<17x32xf32>
    %c1_114 = arith.constant 1 : index
    %c0_115 = arith.constant 0 : index
    %c0_116 = arith.constant 0 : index
    %224 = vector.load %arg16[%c1_114, %c0_115, %c0_116] : memref<2x32x64xbf16, #tpu.memory_space<vmem>>, vector<1x32x64xbf16>
    %225 = vector.shape_cast %224 : vector<1x32x64xbf16> to vector<32x64xbf16>
    %226 = arith.truncf %223 : vector<17x32xf32> to vector<17x32xbf16>
    %cst_117 = arith.constant dense<0.000000e+00> : vector<17x64xf32>
    %227 = tpu.matmul %226, %225, %cst_117 {dimension_numbers = #tpu.dot_dimension_numbers<[1], [0], [0], [1], [0, 0, 1, 1], [], []>} : vector<17x32xbf16>, vector<32x64xbf16>, vector<17x64xf32> -> vector<17x64xf32>
    %c1_118 = arith.constant 1 : index
    %c0_119 = arith.constant 0 : index
    %c0_120 = arith.constant 0 : index
    %228 = vector.load %arg17[%c1_118, %c0_119, %c0_120] : memref<2x1x64xf32, #tpu.memory_space<vmem>>, vector<1x1x64xf32>
    %229 = vector.shape_cast %228 : vector<1x1x64xf32> to vector<1x64xf32>
    %230 = vector.broadcast %229 : vector<1x64xf32> to vector<17x64xf32>
    %231 = arith.addf %227, %230 : vector<17x64xf32>
    %cst_121 = arith.constant 5.000000e-01 : f32
    %232 = vector.broadcast %cst_121 : f32 to vector<17x64xf32>
    %233 = arith.mulf %232, %231 : vector<17x64xf32>
    %cst_122 = arith.constant 0.707106769 : f32
    %234 = vector.broadcast %cst_122 : f32 to vector<17x64xf32>
    %235 = arith.mulf %231, %234 : vector<17x64xf32>
    %236 = math.erf %235 : vector<17x64xf32>
    %cst_123 = arith.constant 1.000000e+00 : f32
    %237 = vector.broadcast %cst_123 : f32 to vector<17x64xf32>
    %238 = arith.addf %237, %236 : vector<17x64xf32>
    %239 = arith.mulf %233, %238 : vector<17x64xf32>
    %c1_124 = arith.constant 1 : index
    %c0_125 = arith.constant 0 : index
    %c0_126 = arith.constant 0 : index
    %240 = vector.load %arg18[%c1_124, %c0_125, %c0_126] : memref<2x64x32xbf16, #tpu.memory_space<vmem>>, vector<1x64x32xbf16>
    %241 = vector.shape_cast %240 : vector<1x64x32xbf16> to vector<64x32xbf16>
    %242 = arith.truncf %239 : vector<17x64xf32> to vector<17x64xbf16>
    %cst_127 = arith.constant dense<0.000000e+00> : vector<17x32xf32>
    %243 = tpu.matmul %242, %241, %cst_127 {dimension_numbers = #tpu.dot_dimension_numbers<[1], [0], [0], [1], [0, 0, 1, 1], [], []>} : vector<17x64xbf16>, vector<64x32xbf16>, vector<17x32xf32> -> vector<17x32xf32>
    %244 = arith.addf %197, %243 : vector<17x32xf32>
    %c1_128 = arith.constant 1 : index
    %c0_129 = arith.constant 0 : index
    %c0_130 = arith.constant 0 : index
    %245 = vector.load %arg19[%c1_128, %c0_129, %c0_130] : memref<2x1x32xf32, #tpu.memory_space<vmem>>, vector<1x1x32xf32>
    %246 = vector.shape_cast %245 : vector<1x1x32xf32> to vector<1x32xf32>
    %247 = vector.broadcast %246 : vector<1x32xf32> to vector<17x32xf32>
    %248 = arith.addf %244, %247 : vector<17x32xf32>
    %249 = vector.extract_strided_slice %248 {offsets = [0, 0], sizes = [1, 32], strides = [1, 1]} : vector<17x32xf32> to vector<1x32xf32>
    %c0_131 = arith.constant 0 : index
    %c0_132 = arith.constant 0 : index
    %250 = vector.load %arg20[%c0_131, %c0_132] : memref<1x32xf32, #tpu.memory_space<vmem>>, vector<1x32xf32>
    %c0_133 = arith.constant 0 : index
    %c0_134 = arith.constant 0 : index
    %251 = vector.load %arg21[%c0_133, %c0_134] : memref<1x32xf32, #tpu.memory_space<vmem>>, vector<1x32xf32>
    %cst_135 = arith.constant dense<0.000000e+00> : vector<1xf32>
    %252 = vector.multi_reduction <add>, %249, %cst_135 [1] : vector<1x32xf32> to vector<1xf32>
    %253 = vector.shape_cast %252 : vector<1xf32> to vector<1x1xf32>
    %cst_136 = arith.constant 3.200000e+01 : f32
    %254 = vector.broadcast %cst_136 : f32 to vector<1x1xf32>
    %255 = arith.divf %253, %254 : vector<1x1xf32>
    %256 = arith.mulf %249, %249 : vector<1x32xf32>
    %cst_137 = arith.constant dense<0.000000e+00> : vector<1xf32>
    %257 = vector.multi_reduction <add>, %256, %cst_137 [1] : vector<1x32xf32> to vector<1xf32>
    %258 = vector.shape_cast %257 : vector<1xf32> to vector<1x1xf32>
    %cst_138 = arith.constant 3.200000e+01 : f32
    %259 = vector.broadcast %cst_138 : f32 to vector<1x1xf32>
    %260 = arith.divf %258, %259 : vector<1x1xf32>
    %261 = arith.mulf %255, %255 : vector<1x1xf32>
    %262 = arith.subf %260, %261 : vector<1x1xf32>
    %cst_139 = arith.constant 9.99999974E-6 : f32
    %263 = vector.broadcast %cst_139 : f32 to vector<1x1xf32>
    %264 = arith.addf %262, %263 : vector<1x1xf32>
    %265 = math.rsqrt %264 : vector<1x1xf32>
    %266 = vector.broadcast %255 : vector<1x1xf32> to vector<1x32xf32>
    %267 = arith.subf %249, %266 : vector<1x32xf32>
    %268 = vector.broadcast %265 : vector<1x1xf32> to vector<1x32xf32>
    %269 = arith.mulf %267, %268 : vector<1x32xf32>
    %270 = arith.mulf %269, %250 : vector<1x32xf32>
    %271 = arith.addf %270, %251 : vector<1x32xf32>
    %c0_140 = arith.constant 0 : index
    %c0_141 = arith.constant 0 : index
    %272 = vector.load %arg22[%c0_140, %c0_141] : memref<32x128xbf16, #tpu.memory_space<vmem>>, vector<32x128xbf16>
    %273 = arith.truncf %271 : vector<1x32xf32> to vector<1x32xbf16>
    %cst_142 = arith.constant dense<0.000000e+00> : vector<1x128xf32>
    %274 = tpu.matmul %273, %272, %cst_142 {dimension_numbers = #tpu.dot_dimension_numbers<[1], [0], [0], [1], [0, 0, 1, 1], [], []>} : vector<1x32xbf16>, vector<32x128xbf16>, vector<1x128xf32> -> vector<1x128xf32>
    %c0_143 = arith.constant 0 : index
    %c0_144 = arith.constant 0 : index
    %275 = vector.load %arg23[%c0_143, %c0_144] : memref<1x128xf32, #tpu.memory_space<vmem>>, vector<1x128xf32>
    %276 = arith.addf %274, %275 : vector<1x128xf32>
    %c0_145 = arith.constant 0 : index
    %c0_146 = arith.constant 0 : index
    %c0_147 = arith.constant 0 : index
    %277 = vector.load %arg24[%c0_145, %c0_146, %c0_147] : memref<1x1x128xf32, #tpu.memory_space<vmem>>, vector<1x1x128xf32>
    %278 = vector.shape_cast %277 : vector<1x1x128xf32> to vector<1x128xf32>
    %279 = vector.shape_cast %276 : vector<1x128xf32> to vector<1x1x128xf32>
    tpu.vector_store %arg24[%c0_145, %c0_146, %c0_147], %279 {strides = array<i32>} : memref<1x1x128xf32, #tpu.memory_space<vmem>>, vector<1x1x128xf32>,
    return
  }
  func.func @transform_0(%arg0: i32) -> (i32, i32, i32) {
    %c0_i32 = arith.constant 0 : i32
    %c0_i32_0 = arith.constant 0 : i32
    %c0_i32_1 = arith.constant 0 : i32
    return %arg0, %c0_i32, %c0_i32_0 : i32, i32, i32
  }
  func.func @transform_1(%arg0: i32) -> (i32, i32) {
    %c0_i32 = arith.constant 0 : i32
    %c0_i32_0 = arith.constant 0 : i32
    %c0_i32_1 = arith.constant 0 : i32
    return %c0_i32, %c0_i32_0 : i32, i32
  }
  func.func @transform_2(%arg0: i32) -> (i32, i32) {
    %c0_i32 = arith.constant 0 : i32
    %c0_i32_0 = arith.constant 0 : i32
    %c0_i32_1 = arith.constant 0 : i32
    return %c0_i32, %c0_i32_0 : i32, i32
  }
  func.func @transform_3(%arg0: i32) -> (i32, i32) {
    %c0_i32 = arith.constant 0 : i32
    %c0_i32_0 = arith.constant 0 : i32
    %c0_i32_1 = arith.constant 0 : i32
    return %c0_i32, %c0_i32_0 : i32, i32
  }
  func.func @transform_4(%arg0: i32) -> (i32, i32) {
    %c0_i32 = arith.constant 0 : i32
    %c0_i32_0 = arith.constant 0 : i32
    %c0_i32_1 = arith.constant 0 : i32
    return %c0_i32, %c0_i32_0 : i32, i32
  }
  func.func @transform_5(%arg0: i32) -> (i32, i32) {
    %c0_i32 = arith.constant 0 : i32
    %c0_i32_0 = arith.constant 0 : i32
    %c0_i32_1 = arith.constant 0 : i32
    return %c0_i32, %c0_i32_0 : i32, i32
  }
  func.func @transform_6(%arg0: i32) -> (i32, i32) {
    %c0_i32 = arith.constant 0 : i32
    %c0_i32_0 = arith.constant 0 : i32
    %c0_i32_1 = arith.constant 0 : i32
    return %c0_i32, %c0_i32_0 : i32, i32
  }
  func.func @transform_7(%arg0: i32) -> (i32, i32, i32) {
    %c0_i32 = arith.constant 0 : i32
    %c0_i32_0 = arith.constant 0 : i32
    %c0_i32_1 = arith.constant 0 : i32
    %c0_i32_2 = arith.constant 0 : i32
    return %c0_i32, %c0_i32_0, %c0_i32_1 : i32, i32, i32
  }
  func.func @transform_8(%arg0: i32) -> (i32, i32, i32) {
    %c0_i32 = arith.constant 0 : i32
    %c0_i32_0 = arith.constant 0 : i32
    %c0_i32_1 = arith.constant 0 : i32
    %c0_i32_2 = arith.constant 0 : i32
    return %c0_i32, %c0_i32_0, %c0_i32_1 : i32, i32, i32
  }
  func.func @transform_9(%arg0: i32) -> (i32, i32, i32) {
    %c0_i32 = arith.constant 0 : i32
    %c0_i32_0 = arith.constant 0 : i32
    %c0_i32_1 = arith.constant 0 : i32
    %c0_i32_2 = arith.constant 0 : i32
    return %c0_i32, %c0_i32_0, %c0_i32_1 : i32, i32, i32
  }
  func.func @transform_10(%arg0: i32) -> (i32, i32, i32) {
    %c0_i32 = arith.constant 0 : i32
    %c0_i32_0 = arith.constant 0 : i32
    %c0_i32_1 = arith.constant 0 : i32
    %c0_i32_2 = arith.constant 0 : i32
    return %c0_i32, %c0_i32_0, %c0_i32_1 : i32, i32, i32
  }
  func.func @transform_11(%arg0: i32) -> (i32, i32, i32) {
    %c0_i32 = arith.constant 0 : i32
    %c0_i32_0 = arith.constant 0 : i32
    %c0_i32_1 = arith.constant 0 : i32
    %c0_i32_2 = arith.constant 0 : i32
    return %c0_i32, %c0_i32_0, %c0_i32_1 : i32, i32, i32
  }
  func.func @transform_12(%arg0: i32) -> (i32, i32, i32) {
    %c0_i32 = arith.constant 0 : i32
    %c0_i32_0 = arith.constant 0 : i32
    %c0_i32_1 = arith.constant 0 : i32
    %c0_i32_2 = arith.constant 0 : i32
    return %c0_i32, %c0_i32_0, %c0_i32_1 : i32, i32, i32
  }
  func.func @transform_13(%arg0: i32) -> (i32, i32, i32) {
    %c0_i32 = arith.constant 0 : i32
    %c0_i32_0 = arith.constant 0 : i32
    %c0_i32_1 = arith.constant 0 : i32
    %c0_i32_2 = arith.constant 0 : i32
    return %c0_i32, %c0_i32_0, %c0_i32_1 : i32, i32, i32
  }
  func.func @transform_14(%arg0: i32) -> (i32, i32, i32) {
    %c0_i32 = arith.constant 0 : i32
    %c0_i32_0 = arith.constant 0 : i32
    %c0_i32_1 = arith.constant 0 : i32
    %c0_i32_2 = arith.constant 0 : i32
    return %c0_i32, %c0_i32_0, %c0_i32_1 : i32, i32, i32
  }
  func.func @transform_15(%arg0: i32) -> (i32, i32, i32) {
    %c0_i32 = arith.constant 0 : i32
    %c0_i32_0 = arith.constant 0 : i32
    %c0_i32_1 = arith.constant 0 : i32
    %c0_i32_2 = arith.constant 0 : i32
    return %c0_i32, %c0_i32_0, %c0_i32_1 : i32, i32, i32
  }
  func.func @transform_16(%arg0: i32) -> (i32, i32, i32) {
    %c0_i32 = arith.constant 0 : i32
    %c0_i32_0 = arith.constant 0 : i32
    %c0_i32_1 = arith.constant 0 : i32
    %c0_i32_2 = arith.constant 0 : i32
    return %c0_i32, %c0_i32_0, %c0_i32_1 : i32, i32, i32
  }
  func.func @transform_17(%arg0: i32) -> (i32, i32, i32) {
    %c0_i32 = arith.constant 0 : i32
    %c0_i32_0 = arith.constant 0 : i32
    %c0_i32_1 = arith.constant 0 : i32
    %c0_i32_2 = arith.constant 0 : i32
    return %c0_i32, %c0_i32_0, %c0_i32_1 : i32, i32, i32
  }
  func.func @transform_18(%arg0: i32) -> (i32, i32, i32) {
    %c0_i32 = arith.constant 0 : i32
    %c0_i32_0 = arith.constant 0 : i32
    %c0_i32_1 = arith.constant 0 : i32
    %c0_i32_2 = arith.constant 0 : i32
    return %c0_i32, %c0_i32_0, %c0_i32_1 : i32, i32, i32
  }
  func.func @transform_19(%arg0: i32) -> (i32, i32) {
    %c0_i32 = arith.constant 0 : i32
    %c0_i32_0 = arith.constant 0 : i32
    %c0_i32_1 = arith.constant 0 : i32
    return %c0_i32, %c0_i32_0 : i32, i32
  }
  func.func @transform_20(%arg0: i32) -> (i32, i32) {
    %c0_i32 = arith.constant 0 : i32
    %c0_i32_0 = arith.constant 0 : i32
    %c0_i32_1 = arith.constant 0 : i32
    return %c0_i32, %c0_i32_0 : i32, i32
  }
  func.func @transform_21(%arg0: i32) -> (i32, i32) {
    %c0_i32 = arith.constant 0 : i32
    %c0_i32_0 = arith.constant 0 : i32
    %c0_i32_1 = arith.constant 0 : i32
    return %c0_i32, %c0_i32_0 : i32, i32
  }
  func.func @transform_22(%arg0: i32) -> (i32, i32) {
    %c0_i32 = arith.constant 0 : i32
    %c0_i32_0 = arith.constant 0 : i32
    %c0_i32_1 = arith.constant 0 : i32
    return %c0_i32, %c0_i32_0 : i32, i32
  }
  func.func @transform_23(%arg0: i32) -> (i32, i32, i32) {
    %c0_i32 = arith.constant 0 : i32
    %c0_i32_0 = arith.constant 0 : i32
    %c0_i32_1 = arith.constant 0 : i32
    return %arg0, %c0_i32, %c0_i32_0 : i32, i32, i32
  }
}

</mosaic_0001>

<llo_original>
// kernel: vit_forward.1
$region0: #{vit_forward.1}
  #allocation0 [shape = 'u32[]', space=smem, size = 0x4, offset = 0x4, fixed_abs, tag = 'smem constant byte address 0x4 - core index']
  #allocation1 [shape = 'u32[72,128]{1,0:T(1,128)}', space=vmem, size = 0x9000, scoped, tag = 'internal scratch']
  %s0 = inlined_call_operand.vmem [shape: bf16[2,16,64], index: 0, kind: input, shape index: {}]
  %s1 = inlined_call_operand.vmem [shape: bf16[64,32], index: 1, kind: input, shape index: {}]
  %s2 = inlined_call_operand.vmem [shape: f32[1,32], index: 2, kind: input, shape index: {}]
  %s3 = inlined_call_operand.vmem [shape: f32[16,32], index: 3, kind: input, shape index: {}]
  %s4 = inlined_call_operand.vmem [shape: bf16[136,17], index: 4, kind: input, shape index: {}]
  %s5 = inlined_call_operand.vmem [shape: f32[136,32], index: 5, kind: input, shape index: {}]
  %s6 = inlined_call_operand.vmem [shape: bf16[17,136], index: 6, kind: input, shape index: {}]
  %s7 = inlined_call_operand.vmem [shape: f32[2,1,32], index: 7, kind: input, shape index: {}]
  %s8 = inlined_call_operand.vmem [shape: f32[2,1,32], index: 8, kind: input, shape index: {}]
  %s9 = inlined_call_operand.vmem [shape: bf16[2,32,96], index: 9, kind: input, shape index: {}]
  %s10 = inlined_call_operand.vmem [shape: f32[2,1,96], index: 10, kind: input, shape index: {}]
  %s11 = inlined_call_operand.vmem [shape: bf16[2,32,32], index: 11, kind: input, shape index: {}]
  %s12 = inlined_call_operand.vmem [shape: f32[2,1,32], index: 12, kind: input, shape index: {}]
  %s13 = inlined_call_operand.vmem [shape: f32[2,1,32], index: 13, kind: input, shape index: {}]
  %s14 = inlined_call_operand.vmem [shape: f32[2,1,32], index: 14, kind: input, shape index: {}]
  %s15 = inlined_call_operand.vmem [shape: bf16[2,32,64], index: 15, kind: input, shape index: {}]
  %s16 = inlined_call_operand.vmem [shape: f32[2,1,64], index: 16, kind: input, shape index: {}]
  %s17 = inlined_call_operand.vmem [shape: bf16[2,64,32], index: 17, kind: input, shape index: {}]
  %s18 = inlined_call_operand.vmem [shape: f32[2,1,32], index: 18, kind: input, shape index: {}]
  %s19 = inlined_call_operand.vmem [shape: f32[1,32], index: 19, kind: input, shape index: {}]
  %s20 = inlined_call_operand.vmem [shape: f32[1,32], index: 20, kind: input, shape index: {}]
  %s21 = inlined_call_operand.vmem [shape: bf16[32,128], index: 21, kind: input, shape index: {}]
  %s22 = inlined_call_operand.vmem [shape: f32[1,128], index: 22, kind: input, shape index: {}]
  %s23 = inlined_call_operand.hbm [shape: f32[2,1,128], index: 23, kind: output, shape index: {}]
  %s24 = sld [smem:[#allocation0]]
  $region125: #{vit_forward.1} parent=0
    _
  %s26 = ssub.s32 1, %s24
  %s27 = scalar_select 0, %s26, %s24
  $region1: #{vit_forward.1} parent=0
    #allocation2 [shape = 'u8[1024]{0}', space=vmem, size = 0x400, scoped, tag = 'output window, operand 0']
    #allocation3 [shape = 's32[2]{0}', space=sflag, size = 0x8, scoped, tag = 'scoped memory for vit_forward.1']
    %28 = vsyncpa [#allocation3], 0
    %s29 = scalar_lea.sflag [#allocation3], 1
    %30 = vsyncpa %s29, 0
    loop: start=0, step=1, limit=4
    $region2: #{vit_forward.1} parent=1 // loop_pre_header
      _
    $region3: #{vit_forward.1} parent=1 // loop_header
      %s32 = sphi 0, %s36
      %p33 = scmp.ge.s32.totalorder %s32, 4
      %s42 = sphi 0, %s44
      %s45 = sphi 0, %s42
      %s46 = sphi 0, %s45
      %s62 = sphi 0, %s46
      %s66 = sphi 0, %s66
      %s68 = sphi 0, %s66
      %s69 = sphi 0, %s68
      %s83 = sphi 0, %s69
      %s87 = sphi 0, %s87
      %s89 = sphi 0, %s87
      %s90 = sphi 0, %s89
      %s104 = sphi 0, %s90
      %s108 = sphi 0, %s108
      %s110 = sphi 0, %s108
      %s111 = sphi 0, %s110
      %s125 = sphi 0, %s111
      %s129 = sphi 0, %s129
      %s131 = sphi 0, %s129
      %s132 = sphi 0, %s131
      %s146 = sphi 0, %s132
      %s150 = sphi 0, %s150
      %s152 = sphi 0, %s150
      %s153 = sphi 0, %s152
      %s167 = sphi 0, %s153
      %s171 = sphi 0, %s171
      %s173 = sphi 0, %s171
      %s174 = sphi 0, %s173
      %s188 = sphi 0, %s174
      %s192 = sphi 0, %s192
      %s194 = sphi 0, %s192
      %s195 = sphi 0, %s194
      %s209 = sphi 0, %s195
      %s213 = sphi 0, %s213
      %s215 = sphi 0, %s213
      %s216 = sphi 0, %s215
      %s230 = sphi 0, %s216
      %s234 = sphi 0, %s234
      %s236 = sphi 0, %s234
      %s237 = sphi 0, %s236
      %s251 = sphi 0, %s237
      %s255 = sphi 0, %s255
      %s257 = sphi 0, %s255
      %s258 = sphi 0, %s257
      %s272 = sphi 0, %s258
      %s276 = sphi 0, %s276
      %s278 = sphi 0, %s276
      %s279 = sphi 0, %s278
      %s293 = sphi 0, %s279
      %s297 = sphi 0, %s297
      %s299 = sphi 0, %s297
      %s300 = sphi 0, %s299
      %s314 = sphi 0, %s300
      %s318 = sphi 0, %s318
      %s320 = sphi 0, %s318
      %s321 = sphi 0, %s320
      %s335 = sphi 0, %s321
      %s339 = sphi 0, %s339
      %s341 = sphi 0, %s339
      %s342 = sphi 0, %s341
      %s356 = sphi 0, %s342
      %s360 = sphi 0, %s360
      %s362 = sphi 0, %s360
      %s363 = sphi 0, %s362
      %s377 = sphi 0, %s363
      %s381 = sphi 0, %s381
      %s383 = sphi 0, %s381
      %s384 = sphi 0, %s383
      %s398 = sphi 0, %s384
      %s402 = sphi 0, %s402
      %s404 = sphi 0, %s402
      %s405 = sphi 0, %s404
      %s419 = sphi 0, %s405
      %s423 = sphi 0, %s423
      %s425 = sphi 0, %s423
      %s426 = sphi 0, %s425
      %s440 = sphi 0, %s426
      %s444 = sphi 0, %s444
      %s446 = sphi 0, %s444
      %s447 = sphi 0, %s446
      %s461 = sphi 0, %s447
      %s465 = sphi 0, %s465
      %s467 = sphi 0, %s465
      %s468 = sphi 0, %s467
      %s482 = sphi 0, %s468
      %s486 = sphi 0, %s486
      %s488 = sphi 0, %s486
      %s489 = sphi 0, %s488
      %s503 = sphi 0, %s489
      %s507 = sphi 0, %s507
      %s509 = sphi 0, %s507
      %s510 = sphi 0, %s509
      %s524 = sphi 0, %s510
      %s530 = sphi 0, %s532
      %s533 = sphi 0, %s530
      %s534 = sphi 0, %s533
      %s550 = sphi 0, %s534
    $region4: #{vit_forward.1} parent=1 // loop_header_branch
      %35 = sbr.rel (%p33) target = $region8
    $region5: #{vit_forward.1} parent=1 // loop_body
      %s37 = ssub.s32 %s32, 1
      %s38 = ssub.s32 %s32, 2
      %s39 = sadd.s32 %s32, 1
      %s40 = ssub.s32 %s32, %s39
      %p41 = scmp.eq.s32.totalorder %s40, 0
      %s43 = sadd.s32 %s42, 1
      %s44 = scalar_select %p41, %s42, %s43
      %p47 = pneg %p41
      %p48 = scmp.eq.s32.totalorder %s32, 1
      %p49 = por %p47, %p48
      %p50 = scmp.ne.s32.totalorder %s42, %s45
      %p51 = scmp.eq.s32.totalorder %s32, 0
      %p52 = por %p50, %p51
      %p53 = scmp.ne.s32.totalorder %s42, %s45
      %p54 = scmp.eq.s32.totalorder %s37, 1
      %p55 = por %p53, %p54
      %p56 = scmp.ne.s32.totalorder %s45, %s46
      %p57 = scmp.eq.s32.totalorder %s37, 0
      %p58 = por %p56, %p57
      %p59 = scmp.ne.s32.totalorder %s45, %s46
      %p60 = scmp.eq.s32.totalorder %s38, 1
      %p61 = por %p59, %p60
      %p63 = scmp.ne.s32.totalorder %s46, %s62
      %p64 = scmp.eq.s32.totalorder %s38, 0
      %p65 = por %p63, %p64
      %s67 = sadd.s32 %s66, 1
      %p70 = scmp.eq.s32.totalorder %s32, 1
      %p71 = scmp.ne.s32.totalorder %s66, %s68
      %p72 = scmp.eq.s32.totalorder %s32, 0
      %p73 = por %p71, %p72
      %p74 = scmp.ne.s32.totalorder %s66, %s68
      %p75 = scmp.eq.s32.totalorder %s37, 1
      %p76 = por %p74, %p75
      %p77 = scmp.ne.s32.totalorder %s68, %s69
      %p78 = scmp.eq.s32.totalorder %s37, 0
      %p79 = por %p77, %p78
      %p80 = scmp.ne.s32.totalorder %s68, %s69
      %p81 = scmp.eq.s32.totalorder %s38, 1
      %p82 = por %p80, %p81
      %p84 = scmp.ne.s32.totalorder %s69, %s83
      %p85 = scmp.eq.s32.totalorder %s38, 0
      %p86 = por %p84, %p85
      %s88 = sadd.s32 %s87, 1
      %p91 = scmp.eq.s32.totalorder %s32, 1
      %p92 = scmp.ne.s32.totalorder %s87, %s89
      %p93 = scmp.eq.s32.totalorder %s32, 0
      %p94 = por %p92, %p93
      %p95 = scmp.ne.s32.totalorder %s87, %s89
      %p96 = scmp.eq.s32.totalorder %s37, 1
      %p97 = por %p95, %p96
      %p98 = scmp.ne.s32.totalorder %s89, %s90
      %p99 = scmp.eq.s32.totalorder %s37, 0
      %p100 = por %p98, %p99
      %p101 = scmp.ne.s32.totalorder %s89, %s90
      %p102 = scmp.eq.s32.totalorder %s38, 1
      %p103 = por %p101, %p102
      %p105 = scmp.ne.s32.totalorder %s90, %s104
      %p106 = scmp.eq.s32.totalorder %s38, 0
      %p107 = por %p105, %p106
      %s109 = sadd.s32 %s108, 1
      %p112 = scmp.eq.s32.totalorder %s32, 1
      %p113 = scmp.ne.s32.totalorder %s108, %s110
      %p114 = scmp.eq.s32.totalorder %s32, 0
      %p115 = por %p113, %p114
      %p116 = scmp.ne.s32.totalorder %s108, %s110
      %p117 = scmp.eq.s32.totalorder %s37, 1
      %p118 = por %p116, %p117
      %p119 = scmp.ne.s32.totalorder %s110, %s111
      %p120 = scmp.eq.s32.totalorder %s37, 0
      %p121 = por %p119, %p120
      %p122 = scmp.ne.s32.totalorder %s110, %s111
      %p123 = scmp.eq.s32.totalorder %s38, 1
      %p124 = por %p122, %p123
      %p126 = scmp.ne.s32.totalorder %s111, %s125
      %p127 = scmp.eq.s32.totalorder %s38, 0
      %p128 = por %p126, %p127
      %s130 = sadd.s32 %s129, 1
      %p133 = scmp.eq.s32.totalorder %s32, 1
      %p134 = scmp.ne.s32.totalorder %s129, %s131
      %p135 = scmp.eq.s32.totalorder %s32, 0
      %p136 = por %p134, %p135
      %p137 = scmp.ne.s32.totalorder %s129, %s131
      %p138 = scmp.eq.s32.totalorder %s37, 1
      %p139 = por %p137, %p138
      %p140 = scmp.ne.s32.totalorder %s131, %s132
      %p141 = scmp.eq.s32.totalorder %s37, 0
      %p142 = por %p140, %p141
      %p143 = scmp.ne.s32.totalorder %s131, %s132
      %p144 = scmp.eq.s32.totalorder %s38, 1
      %p145 = por %p143, %p144
      %p147 = scmp.ne.s32.totalorder %s132, %s146
      %p148 = scmp.eq.s32.totalorder %s38, 0
      %p149 = por %p147, %p148
      %s151 = sadd.s32 %s150, 1
      %p154 = scmp.eq.s32.totalorder %s32, 1
      %p155 = scmp.ne.s32.totalorder %s150, %s152
      %p156 = scmp.eq.s32.totalorder %s32, 0
      %p157 = por %p155, %p156
      %p158 = scmp.ne.s32.totalorder %s150, %s152
      %p159 = scmp.eq.s32.totalorder %s37, 1
      %p160 = por %p158, %p159
      %p161 = scmp.ne.s32.totalorder %s152, %s153
      %p162 = scmp.eq.s32.totalorder %s37, 0
      %p163 = por %p161, %p162
      %p164 = scmp.ne.s32.totalorder %s152, %s153
      %p165 = scmp.eq.s32.totalorder %s38, 1
      %p166 = por %p164, %p165
      %p168 = scmp.ne.s32.totalorder %s153, %s167
      %p169 = scmp.eq.s32.totalorder %s38, 0
      %p170 = por %p168, %p169
      %s172 = sadd.s32 %s171, 1
      %p175 = scmp.eq.s32.totalorder %s32, 1
      %p176 = scmp.ne.s32.totalorder %s171, %s173
      %p177 = scmp.eq.s32.totalorder %s32, 0
      %p178 = por %p176, %p177
      %p179 = scmp.ne.s32.totalorder %s171, %s173
      %p180 = scmp.eq.s32.totalorder %s37, 1
      %p181 = por %p179, %p180
      %p182 = scmp.ne.s32.totalorder %s173, %s174
      %p183 = scmp.eq.s32.totalorder %s37, 0
      %p184 = por %p182, %p183
      %p185 = scmp.ne.s32.totalorder %s173, %s174
      %p186 = scmp.eq.s32.totalorder %s38, 1
      %p187 = por %p185, %p186
      %p189 = scmp.ne.s32.totalorder %s174, %s188
      %p190 = scmp.eq.s32.totalorder %s38, 0
      %p191 = por %p189, %p190
      %s193 = sadd.s32 %s192, 1
      %p196 = scmp.eq.s32.totalorder %s32, 1
      %p197 = scmp.ne.s32.totalorder %s192, %s194
      %p198 = scmp.eq.s32.totalorder %s32, 0
      %p199 = por %p197, %p198
      %p200 = scmp.ne.s32.totalorder %s192, %s194
      %p201 = scmp.eq.s32.totalorder %s37, 1
      %p202 = por %p200, %p201
      %p203 = scmp.ne.s32.totalorder %s194, %s195
      %p204 = scmp.eq.s32.totalorder %s37, 0
      %p205 = por %p203, %p204
      %p206 = scmp.ne.s32.totalorder %s194, %s195
      %p207 = scmp.eq.s32.totalorder %s38, 1
      %p208 = por %p206, %p207
      %p210 = scmp.ne.s32.totalorder %s195, %s209
      %p211 = scmp.eq.s32.totalorder %s38, 0
      %p212 = por %p210, %p211
      %s214 = sadd.s32 %s213, 1
      %p217 = scmp.eq.s32.totalorder %s32, 1
      %p218 = scmp.ne.s32.totalorder %s213, %s215
      %p219 = scmp.eq.s32.totalorder %s32, 0
      %p220 = por %p218, %p219
      %p221 = scmp.ne.s32.totalorder %s213, %s215
      %p222 = scmp.eq.s32.totalorder %s37, 1
      %p223 = por %p221, %p222
      %p224 = scmp.ne.s32.totalorder %s215, %s216
      %p225 = scmp.eq.s32.totalorder %s37, 0
      %p226 = por %p224, %p225
      %p227 = scmp.ne.s32.totalorder %s215, %s216
      %p228 = scmp.eq.s32.totalorder %s38, 1
      %p229 = por %p227, %p228
      %p231 = scmp.ne.s32.totalorder %s216, %s230
      %p232 = scmp.eq.s32.totalorder %s38, 0
      %p233 = por %p231, %p232
      %s235 = sadd.s32 %s234, 1
      %p238 = scmp.eq.s32.totalorder %s32, 1
      %p239 = scmp.ne.s32.totalorder %s234, %s236
      %p240 = scmp.eq.s32.totalorder %s32, 0
      %p241 = por %p239, %p240
      %p242 = scmp.ne.s32.totalorder %s234, %s236
      %p243 = scmp.eq.s32.totalorder %s37, 1
      %p244 = por %p242, %p243
      %p245 = scmp.ne.s32.totalorder %s236, %s237
      %p246 = scmp.eq.s32.totalorder %s37, 0
      %p247 = por %p245, %p246
      %p248 = scmp.ne.s32.totalorder %s236, %s237
      %p249 = scmp.eq.s32.totalorder %s38, 1
      %p250 = por %p248, %p249
      %p252 = scmp.ne.s32.totalorder %s237, %s251
      %p253 = scmp.eq.s32.totalorder %s38, 0
      %p254 = por %p252, %p253
      %s256 = sadd.s32 %s255, 1
      %p259 = scmp.eq.s32.totalorder %s32, 1
      %p260 = scmp.ne.s32.totalorder %s255, %s257
      %p261 = scmp.eq.s32.totalorder %s32, 0
      %p262 = por %p260, %p261
      %p263 = scmp.ne.s32.totalorder %s255, %s257
      %p264 = scmp.eq.s32.totalorder %s37, 1
      %p265 = por %p263, %p264
      %p266 = scmp.ne.s32.totalorder %s257, %s258
      %p267 = scmp.eq.s32.totalorder %s37, 0
      %p268 = por %p266, %p267
      %p269 = scmp.ne.s32.totalorder %s257, %s258
      %p270 = scmp.eq.s32.totalorder %s38, 1
      %p271 = por %p269, %p270
      %p273 = scmp.ne.s32.totalorder %s258, %s272
      %p274 = scmp.eq.s32.totalorder %s38, 0
      %p275 = por %p273, %p274
      %s277 = sadd.s32 %s276, 1
      %p280 = scmp.eq.s32.totalorder %s32, 1
      %p281 = scmp.ne.s32.totalorder %s276, %s278
      %p282 = scmp.eq.s32.totalorder %s32, 0
      %p283 = por %p281, %p282
      %p284 = scmp.ne.s32.totalorder %s276, %s278
      %p285 = scmp.eq.s32.totalorder %s37, 1
      %p286 = por %p284, %p285
      %p287 = scmp.ne.s32.totalorder %s278, %s279
      %p288 = scmp.eq.s32.totalorder %s37, 0
      %p289 = por %p287, %p288
      %p290 = scmp.ne.s32.totalorder %s278, %s279
      %p291 = scmp.eq.s32.totalorder %s38, 1
      %p292 = por %p290, %p291
      %p294 = scmp.ne.s32.totalorder %s279, %s293
      %p295 = scmp.eq.s32.totalorder %s38, 0
      %p296 = por %p294, %p295
      %s298 = sadd.s32 %s297, 1
      %p301 = scmp.eq.s32.totalorder %s32, 1
      %p302 = scmp.ne.s32.totalorder %s297, %s299
      %p303 = scmp.eq.s32.totalorder %s32, 0
      %p304 = por %p302, %p303
      %p305 = scmp.ne.s32.totalorder %s297, %s299
      %p306 = scmp.eq.s32.totalorder %s37, 1
      %p307 = por %p305, %p306
      %p308 = scmp.ne.s32.totalorder %s299, %s300
      %p309 = scmp.eq.s32.totalorder %s37, 0
      %p310 = por %p308, %p309
      %p311 = scmp.ne.s32.totalorder %s299, %s300
      %p312 = scmp.eq.s32.totalorder %s38, 1
      %p313 = por %p311, %p312
      %p315 = scmp.ne.s32.totalorder %s300, %s314
      %p316 = scmp.eq.s32.totalorder %s38, 0
      %p317 = por %p315, %p316
      %s319 = sadd.s32 %s318, 1
      %p322 = scmp.eq.s32.totalorder %s32, 1
      %p323 = scmp.ne.s32.totalorder %s318, %s320
      %p324 = scmp.eq.s32.totalorder %s32, 0
      %p325 = por %p323, %p324
      %p326 = scmp.ne.s32.totalorder %s318, %s320
      %p327 = scmp.eq.s32.totalorder %s37, 1
      %p328 = por %p326, %p327
      %p329 = scmp.ne.s32.totalorder %s320, %s321
      %p330 = scmp.eq.s32.totalorder %s37, 0
      %p331 = por %p329, %p330
      %p332 = scmp.ne.s32.totalorder %s320, %s321
      %p333 = scmp.eq.s32.totalorder %s38, 1
      %p334 = por %p332, %p333
      %p336 = scmp.ne.s32.totalorder %s321, %s335
      %p337 = scmp.eq.s32.totalorder %s38, 0
      %p338 = por %p336, %p337
      %s340 = sadd.s32 %s339, 1
      %p343 = scmp.eq.s32.totalorder %s32, 1
      %p344 = scmp.ne.s32.totalorder %s339, %s341
      %p345 = scmp.eq.s32.totalorder %s32, 0
      %p346 = por %p344, %p345
      %p347 = scmp.ne.s32.totalorder %s339, %s341
      %p348 = scmp.eq.s32.totalorder %s37, 1
      %p349 = por %p347, %p348
      %p350 = scmp.ne.s32.totalorder %s341, %s342
      %p351 = scmp.eq.s32.totalorder %s37, 0
      %p352 = por %p350, %p351
      %p353 = scmp.ne.s32.totalorder %s341, %s342
      %p354 = scmp.eq.s32.totalorder %s38, 1
      %p355 = por %p353, %p354
      %p357 = scmp.ne.s32.totalorder %s342, %s356
      %p358 = scmp.eq.s32.totalorder %s38, 0
      %p359 = por %p357, %p358
      %s361 = sadd.s32 %s360, 1
      %p364 = scmp.eq.s32.totalorder %s32, 1
      %p365 = scmp.ne.s32.totalorder %s360, %s362
      %p366 = scmp.eq.s32.totalorder %s32, 0
      %p367 = por %p365, %p366
      %p368 = scmp.ne.s32.totalorder %s360, %s362
      %p369 = scmp.eq.s32.totalorder %s37, 1
      %p370 = por %p368, %p369
      %p371 = scmp.ne.s32.totalorder %s362, %s363
      %p372 = scmp.eq.s32.totalorder %s37, 0
      %p373 = por %p371, %p372
      %p374 = scmp.ne.s32.totalorder %s362, %s363
      %p375 = scmp.eq.s32.totalorder %s38, 1
      %p376 = por %p374, %p375
      %p378 = scmp.ne.s32.totalorder %s363, %s377
      %p379 = scmp.eq.s32.totalorder %s38, 0
      %p380 = por %p378, %p379
      %s382 = sadd.s32 %s381, 1
      %p385 = scmp.eq.s32.totalorder %s32, 1
      %p386 = scmp.ne.s32.totalorder %s381, %s383
      %p387 = scmp.eq.s32.totalorder %s32, 0
      %p388 = por %p386, %p387
      %p389 = scmp.ne.s32.totalorder %s381, %s383
      %p390 = scmp.eq.s32.totalorder %s37, 1
      %p391 = por %p389, %p390
      %p392 = scmp.ne.s32.totalorder %s383, %s384
      %p393 = scmp.eq.s32.totalorder %s37, 0
      %p394 = por %p392, %p393
      %p395 = scmp.ne.s32.totalorder %s383, %s384
      %p396 = scmp.eq.s32.totalorder %s38, 1
      %p397 = por %p395, %p396
      %p399 = scmp.ne.s32.totalorder %s384, %s398
      %p400 = scmp.eq.s32.totalorder %s38, 0
      %p401 = por %p399, %p400
      %s403 = sadd.s32 %s402, 1
      %p406 = scmp.eq.s32.totalorder %s32, 1
      %p407 = scmp.ne.s32.totalorder %s402, %s404
      %p408 = scmp.eq.s32.totalorder %s32, 0
      %p409 = por %p407, %p408
      %p410 = scmp.ne.s32.totalorder %s402, %s404
      %p411 = scmp.eq.s32.totalorder %s37, 1
      %p412 = por %p410, %p411
      %p413 = scmp.ne.s32.totalorder %s404, %s405
      %p414 = scmp.eq.s32.totalorder %s37, 0
      %p415 = por %p413, %p414
      %p416 = scmp.ne.s32.totalorder %s404, %s405
      %p417 = scmp.eq.s32.totalorder %s38, 1
      %p418 = por %p416, %p417
      %p420 = scmp.ne.s32.totalorder %s405, %s419
      %p421 = scmp.eq.s32.totalorder %s38, 0
      %p422 = por %p420, %p421
      %s424 = sadd.s32 %s423, 1
      %p427 = scmp.eq.s32.totalorder %s32, 1
      %p428 = scmp.ne.s32.totalorder %s423, %s425
      %p429 = scmp.eq.s32.totalorder %s32, 0
      %p430 = por %p428, %p429
      %p431 = scmp.ne.s32.totalorder %s423, %s425
      %p432 = scmp.eq.s32.totalorder %s37, 1
      %p433 = por %p431, %p432
      %p434 = scmp.ne.s32.totalorder %s425, %s426
      %p435 = scmp.eq.s32.totalorder %s37, 0
      %p436 = por %p434, %p435
      %p437 = scmp.ne.s32.totalorder %s425, %s426
      %p438 = scmp.eq.s32.totalorder %s38, 1
      %p439 = por %p437, %p438
      %p441 = scmp.ne.s32.totalorder %s426, %s440
      %p442 = scmp.eq.s32.totalorder %s38, 0
      %p443 = por %p441, %p442
      %s445 = sadd.s32 %s444, 1
      %p448 = scmp.eq.s32.totalorder %s32, 1
      %p449 = scmp.ne.s32.totalorder %s444, %s446
      %p450 = scmp.eq.s32.totalorder %s32, 0
      %p451 = por %p449, %p450
      %p452 = scmp.ne.s32.totalorder %s444, %s446
      %p453 = scmp.eq.s32.totalorder %s37, 1
      %p454 = por %p452, %p453
      %p455 = scmp.ne.s32.totalorder %s446, %s447
      %p456 = scmp.eq.s32.totalorder %s37, 0
      %p457 = por %p455, %p456
      %p458 = scmp.ne.s32.totalorder %s446, %s447
      %p459 = scmp.eq.s32.totalorder %s38, 1
      %p460 = por %p458, %p459
      %p462 = scmp.ne.s32.totalorder %s447, %s461
      %p463 = scmp.eq.s32.totalorder %s38, 0
      %p464 = por %p462, %p463
      %s466 = sadd.s32 %s465, 1
      %p469 = scmp.eq.s32.totalorder %s32, 1
      %p470 = scmp.ne.s32.totalorder %s465, %s467
      %p471 = scmp.eq.s32.totalorder %s32, 0
      %p472 = por %p470, %p471
      %p473 = scmp.ne.s32.totalorder %s465, %s467
      %p474 = scmp.eq.s32.totalorder %s37, 1
      %p475 = por %p473, %p474
      %p476 = scmp.ne.s32.totalorder %s467, %s468
      %p477 = scmp.eq.s32.totalorder %s37, 0
      %p478 = por %p476, %p477
      %p479 = scmp.ne.s32.totalorder %s467, %s468
      %p480 = scmp.eq.s32.totalorder %s38, 1
      %p481 = por %p479, %p480
      %p483 = scmp.ne.s32.totalorder %s468, %s482
      %p484 = scmp.eq.s32.totalorder %s38, 0
      %p485 = por %p483, %p484
      %s487 = sadd.s32 %s486, 1
      %p490 = scmp.eq.s32.totalorder %s32, 1
      %p491 = scmp.ne.s32.totalorder %s486, %s488
      %p492 = scmp.eq.s32.totalorder %s32, 0
      %p493 = por %p491, %p492
      %p494 = scmp.ne.s32.totalorder %s486, %s488
      %p495 = scmp.eq.s32.totalorder %s37, 1
      %p496 = por %p494, %p495
      %p497 = scmp.ne.s32.totalorder %s488, %s489
      %p498 = scmp.eq.s32.totalorder %s37, 0
      %p499 = por %p497, %p498
      %p500 = scmp.ne.s32.totalorder %s488, %s489
      %p501 = scmp.eq.s32.totalorder %s38, 1
      %p502 = por %p500, %p501
      %p504 = scmp.ne.s32.totalorder %s489, %s503
      %p505 = scmp.eq.s32.totalorder %s38, 0
      %p506 = por %p504, %p505
      %s508 = sadd.s32 %s507, 1
      %p511 = scmp.eq.s32.totalorder %s32, 1
      %p512 = scmp.ne.s32.totalorder %s507, %s509
      %p513 = scmp.eq.s32.totalorder %s32, 0
      %p514 = por %p512, %p513
      %p515 = scmp.ne.s32.totalorder %s507, %s509
      %p516 = scmp.eq.s32.totalorder %s37, 1
      %p517 = por %p515, %p516
      %p518 = scmp.ne.s32.totalorder %s509, %s510
      %p519 = scmp.eq.s32.totalorder %s37, 0
      %p520 = por %p518, %p519
      %p521 = scmp.ne.s32.totalorder %s509, %s510
      %p522 = scmp.eq.s32.totalorder %s38, 1
      %p523 = por %p521, %p522
      %p525 = scmp.ne.s32.totalorder %s510, %s524
      %p526 = scmp.eq.s32.totalorder %s38, 0
      %p527 = por %p525, %p526
      %s528 = ssub.s32 %s32, %s39
      %p529 = scmp.eq.s32.totalorder %s528, 0
      %s531 = sadd.s32 %s530, 1
      %s532 = scalar_select %p529, %s530, %s531
      %p535 = pneg %p529
      %p536 = scmp.eq.s32.totalorder %s32, 1
      %p537 = por %p535, %p536
      %p538 = scmp.ne.s32.totalorder %s530, %s533
      %p539 = scmp.eq.s32.totalorder %s32, 0
      %p540 = por %p538, %p539
      %p541 = scmp.ne.s32.totalorder %s530, %s533
      %p542 = scmp.eq.s32.totalorder %s37, 1
      %p543 = por %p541, %p542
      %p544 = scmp.ne.s32.totalorder %s533, %s534
      %p545 = scmp.eq.s32.totalorder %s37, 0
      %p546 = por %p544, %p545
      %p547 = scmp.ne.s32.totalorder %s533, %s534
      %p548 = scmp.eq.s32.totalorder %s38, 1
      %p549 = por %p547, %p548
      %p551 = scmp.ne.s32.totalorder %s534, %s550
      %p552 = scmp.eq.s32.totalorder %s38, 0
      %p553 = por %p551, %p552
      %p554 = scmp.le.s32.totalorder 1, %s32
      %p555 = scmp.lt.s32.totalorder %s32, 3
      %p556 = pnand %p554, %p555
      %p557 = pneg %p556
      // Predicated region
      $region9: #{vit_forward.1} parent=5 // pred_check
        _
      $region10: #{vit_forward.1} parent=5 // pred_check_branch
        %559 = sbr.rel (%p556) target = $region12
      $region11: #{vit_forward.1} parent=5 // pred_region
        %s560 = ssub.s32 %s32, 1
        // Predicated region
        $region13: #{vit_forward.1} parent=11 // pred_check
          %p561 = pneg %p79
        $region14: #{vit_forward.1} parent=11 // pred_check_branch
          %563 = sbr.rel (%p561) target = $region16
        $region15: #{vit_forward.1} parent=11 // pred_region
          _
        $region16: #{vit_forward.1} parent=11 // pred_fallthru
          _
        // Predicated region
        $region17: #{vit_forward.1} parent=11 // pred_check
          %p564 = pneg %p100
        $region18: #{vit_forward.1} parent=11 // pred_check_branch
          %566 = sbr.rel (%p564) target = $region20
        $region19: #{vit_forward.1} parent=11 // pred_region
          _
        $region20: #{vit_forward.1} parent=11 // pred_fallthru
          _
        // Predicated region
        $region21: #{vit_forward.1} parent=11 // pred_check
          %p567 = pneg %p121
        $region22: #{vit_forward.1} parent=11 // pred_check_branch
          %569 = sbr.rel (%p567) target = $region24
        $region23: #{vit_forward.1} parent=11 // pred_region
          _
        $region24: #{vit_forward.1} parent=11 // pred_fallthru
          _
        // Predicated region
        $region25: #{vit_forward.1} parent=11 // pred_check
          %p570 = pneg %p142
        $region26: #{vit_forward.1} parent=11 // pred_check_branch
          %572 = sbr.rel (%p570) target = $region28
        $region27: #{vit_forward.1} parent=11 // pred_region
          _
        $region28: #{vit_forward.1} parent=11 // pred_fallthru
          _
        // Predicated region
        $region29: #{vit_forward.1} parent=11 // pred_check
          %p573 = pneg %p163
        $region30: #{vit_forward.1} parent=11 // pred_check_branch
          %575 = sbr.rel (%p573) target = $region32
        $region31: #{vit_forward.1} parent=11 // pred_region
          _
        $region32: #{vit_forward.1} parent=11 // pred_fallthru
          _
        // Predicated region
        $region33: #{vit_forward.1} parent=11 // pred_check
          %p576 = pneg %p184
        $region34: #{vit_forward.1} parent=11 // pred_check_branch
          %578 = sbr.rel (%p576) target = $region36
        $region35: #{vit_forward.1} parent=11 // pred_region
          _
        $region36: #{vit_forward.1} parent=11 // pred_fallthru
          _
        // Predicated region
        $region37: #{vit_forward.1} parent=11 // pred_check
          %p579 = pneg %p205
        $region38: #{vit_forward.1} parent=11 // pred_check_branch
          %581 = sbr.rel (%p579) target = $region40
        $region39: #{vit_forward.1} parent=11 // pred_region
          _
        $region40: #{vit_forward.1} parent=11 // pred_fallthru
          _
        // Predicated region
        $region41: #{vit_forward.1} parent=11 // pred_check
          %p582 = pneg %p226
        $region42: #{vit_forward.1} parent=11 // pred_check_branch
          %584 = sbr.rel (%p582) target = $region44
        $region43: #{vit_forward.1} parent=11 // pred_region
          _
        $region44: #{vit_forward.1} parent=11 // pred_fallthru
          _
        // Predicated region
        $region45: #{vit_forward.1} parent=11 // pred_check
          %p585 = pneg %p247
        $region46: #{vit_forward.1} parent=11 // pred_check_branch
          %587 = sbr.rel (%p585) target = $region48
        $region47: #{vit_forward.1} parent=11 // pred_region
          _
        $region48: #{vit_forward.1} parent=11 // pred_fallthru
          _
        // Predicated region
        $region49: #{vit_forward.1} parent=11 // pred_check
          %p588 = pneg %p268
        $region50: #{vit_forward.1} parent=11 // pred_check_branch
          %590 = sbr.rel (%p588) target = $region52
        $region51: #{vit_forward.1} parent=11 // pred_region
          _
        $region52: #{vit_forward.1} parent=11 // pred_fallthru
          _
        // Predicated region
        $region53: #{vit_forward.1} parent=11 // pred_check
          %p591 = pneg %p289
        $region54: #{vit_forward.1} parent=11 // pred_check_branch
          %593 = sbr.rel (%p591) target = $region56
        $region55: #{vit_forward.1} parent=11 // pred_region
          _
        $region56: #{vit_forward.1} parent=11 // pred_fallthru
          _
        // Predicated region
        $region57: #{vit_forward.1} parent=11 // pred_check
          %p594 = pneg %p310
        $region58: #{vit_forward.1} parent=11 // pred_check_branch
          %596 = sbr.rel (%p594) target = $region60
        $region59: #{vit_forward.1} parent=11 // pred_region
          _
        $region60: #{vit_forward.1} parent=11 // pred_fallthru
          _
        // Predicated region
        $region61: #{vit_forward.1} parent=11 // pred_check
          %p597 = pneg %p331
        $region62: #{vit_forward.1} parent=11 // pred_check_branch
          %599 = sbr.rel (%p597) target = $region64
        $region63: #{vit_forward.1} parent=11 // pred_region
          _
        $region64: #{vit_forward.1} parent=11 // pred_fallthru
          _
        // Predicated region
        $region65: #{vit_forward.1} parent=11 // pred_check
          %p600 = pneg %p352
        $region66: #{vit_forward.1} parent=11 // pred_check_branch
          %602 = sbr.rel (%p600) target = $region68
        $region67: #{vit_forward.1} parent=11 // pred_region
          _
        $region68: #{vit_forward.1} parent=11 // pred_fallthru
          _
        // Predicated region
        $region69: #{vit_forward.1} parent=11 // pred_check
          %p603 = pneg %p373
        $region70: #{vit_forward.1} parent=11 // pred_check_branch
          %605 = sbr.rel (%p603) target = $region72
        $region71: #{vit_forward.1} parent=11 // pred_region
          _
        $region72: #{vit_forward.1} parent=11 // pred_fallthru
          _
        // Predicated region
        $region73: #{vit_forward.1} parent=11 // pred_check
          %p606 = pneg %p394
        $region74: #{vit_forward.1} parent=11 // pred_check_branch
          %608 = sbr.rel (%p606) target = $region76
        $region75: #{vit_forward.1} parent=11 // pred_region
          _
        $region76: #{vit_forward.1} parent=11 // pred_fallthru
          _
        // Predicated region
        $region77: #{vit_forward.1} parent=11 // pred_check
          %p609 = pneg %p415
        $region78: #{vit_forward.1} parent=11 // pred_check_branch
          %611 = sbr.rel (%p609) target = $region80
        $region79: #{vit_forward.1} parent=11 // pred_region
          _
        $region80: #{vit_forward.1} parent=11 // pred_fallthru
          _
        // Predicated region
        $region81: #{vit_forward.1} parent=11 // pred_check
          %p612 = pneg %p436
        $region82: #{vit_forward.1} parent=11 // pred_check_branch
          %614 = sbr.rel (%p612) target = $region84
        $region83: #{vit_forward.1} parent=11 // pred_region
          _
        $region84: #{vit_forward.1} parent=11 // pred_fallthru
          _
        // Predicated region
        $region85: #{vit_forward.1} parent=11 // pred_check
          %p615 = pneg %p457
        $region86: #{vit_forward.1} parent=11 // pred_check_branch
          %617 = sbr.rel (%p615) target = $region88
        $region87: #{vit_forward.1} parent=11 // pred_region
          _
        $region88: #{vit_forward.1} parent=11 // pred_fallthru
          _
        // Predicated region
        $region89: #{vit_forward.1} parent=11 // pred_check
          %p618 = pneg %p478
        $region90: #{vit_forward.1} parent=11 // pred_check_branch
          %620 = sbr.rel (%p618) target = $region92
        $region91: #{vit_forward.1} parent=11 // pred_region
          _
        $region92: #{vit_forward.1} parent=11 // pred_fallthru
          _
        // Predicated region
        $region93: #{vit_forward.1} parent=11 // pred_check
          %p621 = pneg %p499
        $region94: #{vit_forward.1} parent=11 // pred_check_branch
          %623 = sbr.rel (%p621) target = $region96
        $region95: #{vit_forward.1} parent=11 // pred_region
          _
        $region96: #{vit_forward.1} parent=11 // pred_fallthru
          _
        // Predicated region
        $region97: #{vit_forward.1} parent=11 // pred_check
          %p624 = pneg %p520
        $region98: #{vit_forward.1} parent=11 // pred_check_branch
          %626 = sbr.rel (%p624) target = $region100
        $region99: #{vit_forward.1} parent=11 // pred_region
          _
        $region100: #{vit_forward.1} parent=11 // pred_fallthru
          _
      $region12: #{vit_forward.1} parent=5 // pred_fallthru
        _
      %p627 = scmp.lt.s32.totalorder %s32, 2
      // Predicated region
      $region101: #{vit_forward.1} parent=5 // pred_check
        %p628 = pneg %p627
      $region102: #{vit_forward.1} parent=5 // pred_check_branch
        %630 = sbr.rel (%p628) target = $region104
      $region103: #{vit_forward.1} parent=5 // pred_region
        // Predicated region
        $region105: #{vit_forward.1} parent=103 // pred_check
          %p631 = pneg %p52
        $region106: #{vit_forward.1} parent=103 // pred_check_branch
          %633 = sbr.rel (%p631) target = $region108
        $region107: #{vit_forward.1} parent=103 // pred_region
          %p634 = scmp.lt.s32.totalorder %s32, 1
          %s635 = scalar_select %p634, %s32, 1
          %s636 = smul.addr %s635, 2
          %s637 = smul.addr %s636, 4
          %s638 = scalar_lea.vmem %s0, %s637
        $region108: #{vit_forward.1} parent=103 // pred_fallthru
          _
      $region104: #{vit_forward.1} parent=5 // pred_fallthru
        _
      %p639 = scmp.le.s32.totalorder 1, %s32
      %p640 = scmp.lt.s32.totalorder %s32, 3
      %p641 = pnand %p639, %p640
      %p642 = pneg %p641
      // Predicated region
      $region109: #{vit_forward.1} parent=5 // pred_check
        _
      $region110: #{vit_forward.1} parent=5 // pred_check_branch
        %644 = sbr.rel (%p641) target = $region112
      $region111: #{vit_forward.1} parent=5 // pred_region
        %s645 = ssub.s32 %s32, 1
        %p646 = scmp.lt.s32.totalorder %s37, 1
        %s647 = scalar_select %p646, %s37, 1
        %s648 = smul.addr %s647, 2
        %s649 = smul.addr %s648, 4
        %s650 = scalar_lea.vmem %s0, %s649
        %p651 = pneg %p58
        %p652 = pneg %p55
        %p653 = pneg %p79
        %p654 = pneg %p76
        %p655 = pneg %p100
        %p656 = pneg %p97
        %p657 = pneg %p121
        %p658 = pneg %p118
        %p659 = pneg %p142
        %p660 = pneg %p139
        %p661 = pneg %p163
        %p662 = pneg %p160
        %p663 = pneg %p184
        %p664 = pneg %p181
        %p665 = pneg %p205
        %p666 = pneg %p202
        %p667 = pneg %p226
        %p668 = pneg %p223
        %p669 = pneg %p247
        %p670 = pneg %p244
        %p671 = pneg %p268
        %p672 = pneg %p265
        %p673 = pneg %p289
        %p674 = pneg %p286
        %p675 = pneg %p310
        %p676 = pneg %p307
        %p677 = pneg %p331
        %p678 = pneg %p328
        %p679 = pneg %p352
        %p680 = pneg %p349
        %p681 = pneg %p373
        %p682 = pneg %p370
        %p683 = pneg %p394
        %p684 = pneg %p391
        %p685 = pneg %p415
        %p686 = pneg %p412
        %p687 = pneg %p436
        %p688 = pneg %p433
        %p689 = pneg %p457
        %p690 = pneg %p454
        %p691 = pneg %p478
        %p692 = pneg %p475
        %p693 = pneg %p499
        %p694 = pneg %p496
        %p695 = pneg %p520
        %p696 = pneg %p517
        %p697 = pneg %p546
        %p698 = pneg %p543
        %s699 = sand.u32 %s533, 1
        %s700 = scalar_lea.sflag [#allocation3], %s699
        %s701 = sand.u32 %s533, 1
        %s702 = scalar_lea.vmem [#allocation2], %s701
        %p703 = scmp.lt.s32.totalorder %s37, 1
        %s704 = scalar_select %p703, %s37, 1
        %s705 = smul.addr %s704, 2
        %s706 = smul.addr %s705, 4
        %s707 = scalar_lea.vmem %s0, %s706
        %v709 = vld [vmem:[%s4] sm:$0xf]
        %v710 = vld [vmem:[%s4 + $0x4] sm:$0xf]
        %v711 = vld [vmem:[%s4 + $0x8] sm:$0xf]
        %v712 = vld [vmem:[%s4 + $0xc] sm:$0xf]
        %v713 = vld [vmem:[%s4 + $0x10] sm:$0xf]
        %v714 = vld [vmem:[%s4 + $0x14] sm:$0xf]
        %v715 = vld [vmem:[%s4 + $0x18] sm:$0xf]
        %v716 = vld [vmem:[%s4 + $0x1c] sm:$0xf]
        %v717 = vld [vmem:[%s4 + $0x20] sm:$0xf]
        %v718 = vld [vmem:[%s4 + $0x24] sm:$0xf]
        %v719 = vld [vmem:[%s4 + $0x28] sm:$0xf]
        %v720 = vld [vmem:[%s4 + $0x2c] sm:$0xf]
        %v721 = vld [vmem:[%s4 + $0x30] sm:$0xf]
        %v722 = vld [vmem:[%s4 + $0x34] sm:$0xf]
        %v723 = vld [vmem:[%s4 + $0x38] sm:$0xf]
        %v724 = vld [vmem:[%s4 + $0x3c] sm:$0xf]
        %v725 = vld [vmem:[%s4 + $0x40] sm:$0xf]
        %v726 = vld [vmem:[%s5] sm:$0xff]
        %v727 = vld [vmem:[%s5 + $0x8] sm:$0xff]
        %v728 = vld [vmem:[%s5 + $0x10] sm:$0xff]
        %v729 = vld [vmem:[%s5 + $0x18] sm:$0xff]
        %v730 = vld [vmem:[%s5 + $0x20] sm:$0xff]
        %v731 = vld [vmem:[%s5 + $0x28] sm:$0xff]
        %v732 = vld [vmem:[%s5 + $0x30] sm:$0xff]
        %v733 = vld [vmem:[%s5 + $0x38] sm:$0xff]
        %v734 = vld [vmem:[%s5 + $0x40] sm:$0xff]
        %v735 = vld [vmem:[%s5 + $0x48] sm:$0xff]
        %v736 = vld [vmem:[%s5 + $0x50] sm:$0xff]
        %v737 = vld [vmem:[%s5 + $0x58] sm:$0xff]
        %v738 = vld [vmem:[%s5 + $0x60] sm:$0xff]
        %v739 = vld [vmem:[%s5 + $0x68] sm:$0xff]
        %v740 = vld [vmem:[%s5 + $0x70] sm:$0xff]
        %v741 = vld [vmem:[%s5 + $0x78] sm:$0xff]
        %v742 = vld [vmem:[%s5 + $0x80] sm:$0xff]
        %v743 = vld [vmem:[%s6] sm:$0xff]
        %v744 = vld [vmem:[%s6 + $0x8] sm:$0xff]
        %v745 = vld [vmem:[%s6 + $0x10] sm:$0x11]
        %v746 = vld [vmem:[%s707] sm:$0xf]
        %v747 = vld [vmem:[%s707 + $0x4] sm:$0xf]
        %v748 = vld [vmem:[%s1] sm:$0xf]
        %v749 = vld [vmem:[%s1 + $0x4] sm:$0xf]
        %v750 = vld [vmem:[%s1 + $0x8] sm:$0xf]
        %v751 = vld [vmem:[%s1 + $0xc] sm:$0xf]
        %v752 = vld [vmem:[%s1 + $0x10] sm:$0xf]
        %v753 = vld [vmem:[%s1 + $0x14] sm:$0xf]
        %v754 = vld [vmem:[%s1 + $0x18] sm:$0xf]
        %v755 = vld [vmem:[%s1 + $0x1c] sm:$0xf]
        %v756 = vld [vmem:[%s3] sm:$0xff]
        %v757 = vld [vmem:[%s3 + $0x8] sm:$0xff]
        %v760 = vunpack.c.l.b16 %v746
        %v761 = vunpack.c.l.b16 %v747
        %v762 = vpack.c.b16 %v761, %v760
        %v771 = vunpack.c.l.b16 %v748
        %v772 = vunpack.c.l.b16 %v749
        %v773 = vunpack.c.l.b16 %v750
        %v774 = vunpack.c.l.b16 %v751
        %v775 = vunpack.c.l.b16 %v752
        %v776 = vunpack.c.l.b16 %v753
        %v777 = vunpack.c.l.b16 %v754
        %v778 = vunpack.c.l.b16 %v755
        %v779 = vpack.c.b16 %v772, %v771
        %v780 = vpack.c.b16 %v774, %v773
        %v781 = vpack.c.b16 %v776, %v775
        %v782 = vpack.c.b16 %v778, %v777
        %vm787 = vcmask 523264
        %v789 = vsel %vm787, %v762, 0
        %791 = vmatpush.bf16.msra.mxu0 0
        %792 = vmatpush.bf16.msra.mxu0 0
        %793 = vmatpush.bf16.msra.mxu0 0
        %794 = vmatpush.bf16.msra.mxu0 0
        %795 = vmatpush.bf16.msra.mxu0 %v782
        %796 = vmatpush.bf16.msra.mxu0 %v781
        %797 = vmatpush.bf16.msra.mxu0 %v780
        %798 = vmatpush.bf16.msra.mxu0 %v779
        %799 = vmatmul.bf16.gmra.mxu0 %v789
        %v800 = vpop.f32.mrf.mxu0
        %v801 = vadd.f32 %v756, %v800
        %v802 = vpop.f32.mrf.mxu0
        %v803 = vadd.f32 %v757, %v802
        %804 = vdwg.mxu0
        %v805 = vld [vmem:[%s2] sm:$0x1]
        %vm808 = vcmask 1040384
        %v809 = vrot.slane %v801, 7
        %v810 = vrot.slane %v803, 7
        %v811 = vsel %vm808, %v809, %v810
        %v815 = vsel %vm808, %v805, %v809
        %v816 = vld [vmem:[%s7] sm:$0x1]
        %v817 = vld [vmem:[%s8] sm:$0x1]
        %vm818 = vcmask 261120
        %v819 = vsel %vm818, %v815, 0.0
        %820 = vadd.xlane.f32.xlu0 %v819
        %v821 = vpop.xlane.xlu0 %820
        %v822 = vsel %vm818, %v811, 0.0
        %823 = vadd.xlane.f32.xlu0 %v822
        %v824 = vpop.xlane.xlu0 %823
        %vm825 = vcmask 253952
        %v826 = vsel %vm825, %v810, 0.0
        %827 = vadd.xlane.f32.xlu0 %v826
        %v828 = vpop.xlane.xlu0 %827
        %v829 = vrcp.pop 32.0
        %v830 = vmul.f32 32.0, %v829
        %v831 = vsub.f32 1.0, %v830
        %v832 = vmul.f32 %v829, %v831
        %v833 = vadd.f32 %v829, %v832
        %vm834 = vweird.f32 %v829
        %v835 = vsel %vm834, %v829, %v833
        %v836 = vmul.f32 %v821, %v835
        %v837 = vmul.f32 %v824, %v835
        %v838 = vmul.f32 %v828, %v835
        %v839 = vmul.f32 %v815, %v815
        %v840 = vmul.f32 %v811, %v811
        %v841 = vmul.f32 %v810, %v810
        %v842 = vsel %vm818, %v839, 0.0
        %843 = vadd.xlane.f32.xlu0 %v842
        %v844 = vpop.xlane.xlu0 %843
        %v845 = vsel %vm818, %v840, 0.0
        %846 = vadd.xlane.f32.xlu0 %v845
        %v847 = vpop.xlane.xlu0 %846
        %v848 = vsel %vm825, %v841, 0.0
        %849 = vadd.xlane.f32.xlu0 %v848
        %v850 = vpop.xlane.xlu0 %849
        %v851 = vmul.f32 %v844, %v835
        %v852 = vmul.f32 %v847, %v835
        %v853 = vmul.f32 %v850, %v835
        %v854 = vmul.f32 %v836, %v836
        %v855 = vmul.f32 %v837, %v837
        %v856 = vmul.f32 %v838, %v838
        %v857 = vsub.f32 %v851, %v854
        %v858 = vsub.f32 %v852, %v855
        %v859 = vsub.f32 %v853, %v856
        %v860 = vadd.f32 %v857, 1e-05
        %v861 = vadd.f32 %v858, 1e-05
        %v862 = vadd.f32 %v859, 1e-05
        %v863 = vrsqrt.pop %v860
        %v864 = vmul.f32 %v863, %v860
        %v865 = vmul.f32 %v864, %v863
        %v866 = vmul.f32 0.5, %v865
        %v867 = vsub.f32 1.5, %v866
        %v868 = vmul.f32 %v863, %v867
        %vm869 = vweird.f32 %v860
        %vm870 = vweird.f32 %v863
        %vm871 = vmor %vm869, %vm870
        %v872 = vsel %vm871, %v863, %v868
        %v873 = vrsqrt.pop %v861
        %v874 = vmul.f32 %v873, %v861
        %v875 = vmul.f32 %v874, %v873
        %v876 = vmul.f32 0.5, %v875
        %v877 = vsub.f32 1.5, %v876
        %v878 = vmul.f32 %v873, %v877
        %vm879 = vweird.f32 %v861
        %vm880 = vweird.f32 %v873
        %vm881 = vmor %vm879, %vm880
        %v882 = vsel %vm881, %v873, %v878
        %v883 = vrsqrt.pop %v862
        %v884 = vmul.f32 %v883, %v862
        %v885 = vmul.f32 %v884, %v883
        %v886 = vmul.f32 0.5, %v885
        %v887 = vsub.f32 1.5, %v886
        %v888 = vmul.f32 %v883, %v887
        %vm889 = vweird.f32 %v862
        %vm890 = vweird.f32 %v883
        %vm891 = vmor %vm889, %vm890
        %v892 = vsel %vm891, %v883, %v888
        %v893 = vsub.f32 %v815, %v836
        %v894 = vsub.f32 %v811, %v837
        %v895 = vsub.f32 %v810, %v838
        %v896 = vmul.f32 %v893, %v872
        %v897 = vmul.f32 %v894, %v882
        %v898 = vmul.f32 %v895, %v892
        %v900 = vperm.slane %v816, 0
        %v902 = vmul.f32 %v896, %v900
        %v903 = vmul.f32 %v897, %v900
        %v904 = vmul.f32 %v898, %v900
        %v906 = vperm.slane %v817, 0
        %v908 = vadd.f32 %v902, %v906
        %v909 = vadd.f32 %v903, %v906
        %v910 = vadd.f32 %v904, %v906
        %v911 = vld [vmem:[%s9] sm:$0xf]
        %v912 = vld [vmem:[%s9 + $0x4] sm:$0xf]
        %v913 = vld [vmem:[%s9 + $0x8] sm:$0xf]
        %v914 = vld [vmem:[%s9 + $0xc] sm:$0xf]
        %v915 = vpack.c.bf16 %v909, %v908
        %v916 = vpack.c.bf16 %v910, %v910
        %v917 = vld [vmem:[%s10] sm:$0x1]
        %v919 = vperm.slane %v917, 0
        %v925 = vunpack.c.l.b16 %v911
        %v926 = vunpack.c.l.b16 %v912
        %v927 = vunpack.c.l.b16 %v913
        %v928 = vunpack.c.l.b16 %v914
        %v929 = vpack.c.b16 %v926, %v925
        %v930 = vpack.c.b16 %v928, %v927
        %v934 = vsel %vm818, %v915, 0
        %v937 = vsel %vm818, %v916, 0
        %939 = vmatpush.bf16.msra.mxu0 0
        %940 = vmatpush.bf16.msra.mxu0 0
        %941 = vmatpush.bf16.msra.mxu0 0
        %942 = vmatpush.bf16.msra.mxu0 0
        %943 = vmatpush.bf16.msra.mxu0 0
        %944 = vmatpush.bf16.msra.mxu0 0
        %945 = vmatpush.bf16.msra.mxu0 %v930
        %946 = vmatpush.bf16.msra.mxu0 %v929
        %947 = vmatmul.bf16.gmra.mxu0 %v934
        %v948 = vpop.f32.mrf.mxu0
        %v949 = vadd.f32 %v919, %v948
        %v950 = vpop.f32.mrf.mxu0
        %v951 = vadd.f32 %v919, %v950
        %952 = vmatmul.bf16.gmra.mxu0 %v937
        %v953 = vpop.f32.mrf.mxu0
        %v954 = vadd.f32 %v919, %v953
        %v955 = vpop.f32.mrf.mxu0
        %956 = vdwg.mxu0
        %v957 = vpack.c.bf16 %v951, %v949
        %v958 = vpack.c.bf16 %v954, %v954
        %v976 = vunpack.c.l.b16 %v709
        %v977 = vunpack.c.l.b16 %v710
        %v978 = vunpack.c.l.b16 %v711
        %v979 = vunpack.c.l.b16 %v712
        %v980 = vunpack.c.l.b16 %v713
        %v981 = vunpack.c.l.b16 %v714
        %v982 = vunpack.c.l.b16 %v715
        %v983 = vunpack.c.l.b16 %v716
        %v984 = vunpack.c.l.b16 %v717
        %v985 = vunpack.c.l.b16 %v718
        %v986 = vunpack.c.l.b16 %v719
        %v987 = vunpack.c.l.b16 %v720
        %v988 = vunpack.c.l.b16 %v721
        %v989 = vunpack.c.l.b16 %v722
        %v990 = vunpack.c.l.b16 %v723
        %v991 = vunpack.c.l.b16 %v724
        %v992 = vunpack.c.l.b16 %v725
        %v993 = vpack.c.b16 %v977, %v976
        %v994 = vpack.c.b16 %v979, %v978
        %v995 = vpack.c.b16 %v981, %v980
        %v996 = vpack.c.b16 %v983, %v982
        %v997 = vpack.c.b16 %v985, %v984
        %v998 = vpack.c.b16 %v987, %v986
        %v999 = vpack.c.b16 %v989, %v988
        %v1000 = vpack.c.b16 %v991, %v990
        %v1001 = vpack.c.b16 %v992, %v992
        %vm1002 = vcmask 138240
        %v1004 = vsel %vm1002, %v993, 0
        %v1007 = vsel %vm1002, %v994, 0
        %v1010 = vsel %vm1002, %v995, 0
        %v1013 = vsel %vm1002, %v996, 0
        %v1016 = vsel %vm1002, %v997, 0
        %v1019 = vsel %vm1002, %v998, 0
        %v1022 = vsel %vm1002, %v999, 0
        %v1025 = vsel %vm1002, %v1000, 0
        %v1028 = vsel %vm1002, %v1001, 0
        %v1030 = vsel 0, 4294967295, 65535
        %v1031 = vsel %vm808, %v1030, 0
        %v1033 = vand.u32 %v958, %v1031
        %1035 = vmatpush.bf16.msra.mxu0 0
        %1036 = vmatpush.bf16.msra.mxu0 0
        %1037 = vmatpush.bf16.msra.mxu0 0
        %1038 = vmatpush.bf16.msra.mxu0 0
        %1039 = vmatpush.bf16.msra.mxu0 0
        %1040 = vmatpush.bf16.msra.mxu0 0
        %1041 = vmatpush.bf16.msra.mxu0 %v1033
        %1042 = vmatpush.bf16.msra.mxu0 %v957
        %1043 = vmatmul.bf16.gmra.mxu0 %v1004
        %v1044 = vpop.f32.mrf.mxu0
        %v1045 = vadd.f32 0.0, %v1044
        %v1046 = vpop.f32.mrf.mxu0
        %v1047 = vadd.f32 0.0, %v1046
        %1048 = vmatmul.bf16.gmra.mxu0 %v1007
        %v1049 = vpop.f32.mrf.mxu0
        %v1050 = vadd.f32 0.0, %v1049
        %v1051 = vpop.f32.mrf.mxu0
        %v1052 = vadd.f32 0.0, %v1051
        %1053 = vmatmul.bf16.gmra.mxu0 %v1010
        %v1054 = vpop.f32.mrf.mxu0
        %v1055 = vadd.f32 0.0, %v1054
        %v1056 = vpop.f32.mrf.mxu0
        %v1057 = vadd.f32 0.0, %v1056
        %1058 = vmatmul.bf16.gmra.mxu0 %v1013
        %v1059 = vpop.f32.mrf.mxu0
        %v1060 = vadd.f32 0.0, %v1059
        %v1061 = vpop.f32.mrf.mxu0
        %v1062 = vadd.f32 0.0, %v1061
        %1063 = vmatmul.bf16.gmra.mxu0 %v1016
        %v1064 = vpop.f32.mrf.mxu0
        %v1065 = vadd.f32 0.0, %v1064
        %v1066 = vpop.f32.mrf.mxu0
        %v1067 = vadd.f32 0.0, %v1066
        %1068 = vmatmul.bf16.gmra.mxu0 %v1019
        %v1069 = vpop.f32.mrf.mxu0
        %v1070 = vadd.f32 0.0, %v1069
        %v1071 = vpop.f32.mrf.mxu0
        %v1072 = vadd.f32 0.0, %v1071
        %1073 = vmatmul.bf16.gmra.mxu0 %v1022
        %v1074 = vpop.f32.mrf.mxu0
        %v1075 = vadd.f32 0.0, %v1074
        %v1076 = vpop.f32.mrf.mxu0
        %v1077 = vadd.f32 0.0, %v1076
        %1078 = vmatmul.bf16.gmra.mxu0 %v1025
        %v1079 = vpop.f32.mrf.mxu0
        %v1080 = vadd.f32 0.0, %v1079
        %v1081 = vpop.f32.mrf.mxu0
        %v1082 = vadd.f32 0.0, %v1081
        %1083 = vmatmul.bf16.gmra.mxu0 %v1028
        %v1084 = vpop.f32.mrf.mxu0
        %v1085 = vadd.f32 0.0, %v1084
        %v1086 = vpop.f32.mrf.mxu0
        %1087 = vdwg.mxu0
        %v1088 = vmul.f32 %v1045, %v726
        %v1089 = vmul.f32 %v1047, %v727
        %v1090 = vmul.f32 %v1050, %v728
        %v1091 = vmul.f32 %v1052, %v729
        %v1092 = vmul.f32 %v1055, %v730
        %v1093 = vmul.f32 %v1057, %v731
        %v1094 = vmul.f32 %v1060, %v732
        %v1095 = vmul.f32 %v1062, %v733
        %v1096 = vmul.f32 %v1065, %v734
        %v1097 = vmul.f32 %v1067, %v735
        %v1098 = vmul.f32 %v1070, %v736
        %v1099 = vmul.f32 %v1072, %v737
        %v1100 = vmul.f32 %v1075, %v738
        %v1101 = vmul.f32 %v1077, %v739
        %v1102 = vmul.f32 %v1080, %v740
        %v1103 = vmul.f32 %v1082, %v741
        %v1104 = vmul.f32 %v1085, %v742
        %v1105 = vpack.c.bf16 %v1089, %v1088
        %v1106 = vpack.c.bf16 %v1091, %v1090
        %v1107 = vpack.c.bf16 %v1093, %v1092
        %v1108 = vpack.c.bf16 %v1095, %v1094
        %v1109 = vpack.c.bf16 %v1097, %v1096
        %v1110 = vpack.c.bf16 %v1099, %v1098
        %v1111 = vpack.c.bf16 %v1101, %v1100
        %v1112 = vpack.c.bf16 %v1103, %v1102
        %v1113 = vpack.c.bf16 %v1104, %v1104
        %1116 = vrot.lane.b32.xlu0 %v957, 96
        %v1117 = vpop.permute.xlu0 %1116
        %1118 = vrot.lane.b32.xlu0 %v958, 96
        %v1119 = vpop.permute.xlu0 %1118
        %v1121 = vsel %vm818, %v1105, 0
        %v1124 = vsel %vm818, %v1106, 0
        %v1127 = vsel %vm818, %v1107, 0
        %v1130 = vsel %vm818, %v1108, 0
        %v1133 = vsel %vm818, %v1109, 0
        %v1136 = vsel %vm818, %v1110, 0
        %v1139 = vsel %vm818, %v1111, 0
        %v1142 = vsel %vm818, %v1112, 0
        %v1145 = vsel %vm818, %v1113, 0
        %v1148 = vsel %vm818, %v1117, 0
        %v1151 = vsel %vm818, %v1119, 0
        %1153 = vmatpush.bf16.xpose.msra.mxu0 0
        %1154 = vmatpush.bf16.xpose.msra.mxu0 0
        %1155 = vmatpush.bf16.xpose.msra.mxu0 0
        %1156 = vmatpush.bf16.xpose.msra.mxu0 0
        %1157 = vmatpush.bf16.xpose.msra.mxu0 0
        %1158 = vmatpush.bf16.xpose.msra.mxu0 0
        %1159 = vmatpush.bf16.xpose.msra.mxu0 %v1151
        %1160 = vmatpush.bf16.xpose.msra.mxu0 %v1148
        %1161 = vmatmul.bf16.gmra.mxu0 %v1121
        %v1162 = vpop.f32.mrf.mxu0
        %v1163 = vadd.f32 0.0, %v1162
        %v1164 = vpop.f32.mrf.mxu0
        %v1165 = vadd.f32 0.0, %v1164
        %1166 = vmatmul.bf16.gmra.mxu0 %v1124
        %v1167 = vpop.f32.mrf.mxu0
        %v1168 = vadd.f32 0.0, %v1167
        %v1169 = vpop.f32.mrf.mxu0
        %v1170 = vadd.f32 0.0, %v1169
        %1171 = vmatmul.bf16.gmra.mxu0 %v1127
        %v1172 = vpop.f32.mrf.mxu0
        %v1173 = vadd.f32 0.0, %v1172
        %v1174 = vpop.f32.mrf.mxu0
        %v1175 = vadd.f32 0.0, %v1174
        %1176 = vmatmul.bf16.gmra.mxu0 %v1130
        %v1177 = vpop.f32.mrf.mxu0
        %v1178 = vadd.f32 0.0, %v1177
        %v1179 = vpop.f32.mrf.mxu0
        %v1180 = vadd.f32 0.0, %v1179
        %1181 = vmatmul.bf16.gmra.mxu0 %v1133
        %v1182 = vpop.f32.mrf.mxu0
        %v1183 = vadd.f32 0.0, %v1182
        %v1184 = vpop.f32.mrf.mxu0
        %v1185 = vadd.f32 0.0, %v1184
        %1186 = vmatmul.bf16.gmra.mxu0 %v1136
        %v1187 = vpop.f32.mrf.mxu0
        %v1188 = vadd.f32 0.0, %v1187
        %v1189 = vpop.f32.mrf.mxu0
        %v1190 = vadd.f32 0.0, %v1189
        %1191 = vmatmul.bf16.gmra.mxu0 %v1139
        %v1192 = vpop.f32.mrf.mxu0
        %v1193 = vadd.f32 0.0, %v1192
        %v1194 = vpop.f32.mrf.mxu0
        %v1195 = vadd.f32 0.0, %v1194
        %1196 = vmatmul.bf16.gmra.mxu0 %v1142
        %v1197 = vpop.f32.mrf.mxu0
        %v1198 = vadd.f32 0.0, %v1197
        %v1199 = vpop.f32.mrf.mxu0
        %v1200 = vadd.f32 0.0, %v1199
        %1201 = vmatmul.bf16.gmra.mxu0 %v1145
        %v1202 = vpop.f32.mrf.mxu0
        %v1203 = vadd.f32 0.0, %v1202
        %v1204 = vpop.f32.mrf.mxu0
        %1205 = vdwg.mxu0
        %v1206 = vsel %vm1002, %v1163, -inf
        %1207 = vmax.xlane.f32.xlu0 %v1206
        %v1208 = vpop.xlane.xlu0 %1207
        %v1209 = vsel %vm1002, %v1165, -inf
        %1210 = vmax.xlane.f32.xlu0 %v1209
        %v1211 = vpop.xlane.xlu0 %1210
        %v1212 = vsel %vm1002, %v1168, -inf
        %1213 = vmax.xlane.f32.xlu0 %v1212
        %v1214 = vpop.xlane.xlu0 %1213
        %v1215 = vsel %vm1002, %v1170, -inf
        %1216 = vmax.xlane.f32.xlu0 %v1215
        %v1217 = vpop.xlane.xlu0 %1216
        %v1218 = vsel %vm1002, %v1173, -inf
        %1219 = vmax.xlane.f32.xlu0 %v1218
        %v1220 = vpop.xlane.xlu0 %1219
        %v1221 = vsel %vm1002, %v1175, -inf
        %1222 = vmax.xlane.f32.xlu0 %v1221
        %v1223 = vpop.xlane.xlu0 %1222
        %v1224 = vsel %vm1002, %v1178, -inf
        %1225 = vmax.xlane.f32.xlu0 %v1224
        %v1226 = vpop.xlane.xlu0 %1225
        %v1227 = vsel %vm1002, %v1180, -inf
        %1228 = vmax.xlane.f32.xlu0 %v1227
        %v1229 = vpop.xlane.xlu0 %1228
        %v1230 = vsel %vm1002, %v1183, -inf
        %1231 = vmax.xlane.f32.xlu0 %v1230
        %v1232 = vpop.xlane.xlu0 %1231
        %v1233 = vsel %vm1002, %v1185, -inf
        %1234 = vmax.xlane.f32.xlu0 %v1233
        %v1235 = vpop.xlane.xlu0 %1234
        %v1236 = vsel %vm1002, %v1188, -inf
        %1237 = vmax.xlane.f32.xlu0 %v1236
        %v1238 = vpop.xlane.xlu0 %1237
        %v1239 = vsel %vm1002, %v1190, -inf
        %1240 = vmax.xlane.f32.xlu0 %v1239
        %v1241 = vpop.xlane.xlu0 %1240
        %v1242 = vsel %vm1002, %v1193, -inf
        %1243 = vmax.xlane.f32.xlu0 %v1242
        %v1244 = vpop.xlane.xlu0 %1243
        %v1245 = vsel %vm1002, %v1195, -inf
        %1246 = vmax.xlane.f32.xlu0 %v1245
        %v1247 = vpop.xlane.xlu0 %1246
        %v1248 = vsel %vm1002, %v1198, -inf
        %1249 = vmax.xlane.f32.xlu0 %v1248
        %v1250 = vpop.xlane.xlu0 %1249
        %v1251 = vsel %vm1002, %v1200, -inf
        %1252 = vmax.xlane.f32.xlu0 %v1251
        %v1253 = vpop.xlane.xlu0 %1252
        %v1254 = vsel %vm1002, %v1203, -inf
        %1255 = vmax.xlane.f32.xlu0 %v1254
        %v1256 = vpop.xlane.xlu0 %1255
        %v1257 = vsub.f32 %v1163, %v1208
        %v1258 = vsub.f32 %v1165, %v1211
        %v1259 = vsub.f32 %v1168, %v1214
        %v1260 = vsub.f32 %v1170, %v1217
        %v1261 = vsub.f32 %v1173, %v1220
        %v1262 = vsub.f32 %v1175, %v1223
        %v1263 = vsub.f32 %v1178, %v1226
        %v1264 = vsub.f32 %v1180, %v1229
        %v1265 = vsub.f32 %v1183, %v1232
        %v1266 = vsub.f32 %v1185, %v1235
        %v1267 = vsub.f32 %v1188, %v1238
        %v1268 = vsub.f32 %v1190, %v1241
        %v1269 = vsub.f32 %v1193, %v1244
        %v1270 = vsub.f32 %v1195, %v1247
        %v1271 = vsub.f32 %v1198, %v1250
        %v1272 = vsub.f32 %v1200, %v1253
        %v1273 = vsub.f32 %v1203, %v1256
        %v1274 = vmul.f32 %v1257, 1.442695
        %v1275 = vpow.pop %v1274
        %v1276 = vmul.f32 %v1258, 1.442695
        %v1277 = vpow.pop %v1276
        %v1278 = vmul.f32 %v1259, 1.442695
        %v1279 = vpow.pop %v1278
        %v1280 = vmul.f32 %v1260, 1.442695
        %v1281 = vpow.pop %v1280
        %v1282 = vmul.f32 %v1261, 1.442695
        %v1283 = vpow.pop %v1282
        %v1284 = vmul.f32 %v1262, 1.442695
        %v1285 = vpow.pop %v1284
        %v1286 = vmul.f32 %v1263, 1.442695
        %v1287 = vpow.pop %v1286
        %v1288 = vmul.f32 %v1264, 1.442695
        %v1289 = vpow.pop %v1288
        %v1290 = vmul.f32 %v1265, 1.442695
        %v1291 = vpow.pop %v1290
        %v1292 = vmul.f32 %v1266, 1.442695
        %v1293 = vpow.pop %v1292
        %v1294 = vmul.f32 %v1267, 1.442695
        %v1295 = vpow.pop %v1294
        %v1296 = vmul.f32 %v1268, 1.442695
        %v1297 = vpow.pop %v1296
        %v1298 = vmul.f32 %v1269, 1.442695
        %v1299 = vpow.pop %v1298
        %v1300 = vmul.f32 %v1270, 1.442695
        %v1301 = vpow.pop %v1300
        %v1302 = vmul.f32 %v1271, 1.442695
        %v1303 = vpow.pop %v1302
        %v1304 = vmul.f32 %v1272, 1.442695
        %v1305 = vpow.pop %v1304
        %v1306 = vmul.f32 %v1273, 1.442695
        %v1307 = vpow.pop %v1306
        %v1308 = vsel %vm1002, %v1275, 0.0
        %1309 = vadd.xlane.f32.xlu0 %v1308
        %v1310 = vpop.xlane.xlu0 %1309
        %v1311 = vsel %vm1002, %v1277, 0.0
        %1312 = vadd.xlane.f32.xlu0 %v1311
        %v1313 = vpop.xlane.xlu0 %1312
        %v1314 = vsel %vm1002, %v1279, 0.0
        %1315 = vadd.xlane.f32.xlu0 %v1314
        %v1316 = vpop.xlane.xlu0 %1315
        %v1317 = vsel %vm1002, %v1281, 0.0
        %1318 = vadd.xlane.f32.xlu0 %v1317
        %v1319 = vpop.xlane.xlu0 %1318
        %v1320 = vsel %vm1002, %v1283, 0.0
        %1321 = vadd.xlane.f32.xlu0 %v1320
        %v1322 = vpop.xlane.xlu0 %1321
        %v1323 = vsel %vm1002, %v1285, 0.0
        %1324 = vadd.xlane.f32.xlu0 %v1323
        %v1325 = vpop.xlane.xlu0 %1324
        %v1326 = vsel %vm1002, %v1287, 0.0
        %1327 = vadd.xlane.f32.xlu0 %v1326
        %v1328 = vpop.xlane.xlu0 %1327
        %v1329 = vsel %vm1002, %v1289, 0.0
        %1330 = vadd.xlane.f32.xlu0 %v1329
        %v1331 = vpop.xlane.xlu0 %1330
        %v1332 = vsel %vm1002, %v1291, 0.0
        %1333 = vadd.xlane.f32.xlu0 %v1332
        %v1334 = vpop.xlane.xlu0 %1333
        %v1335 = vsel %vm1002, %v1293, 0.0
        %1336 = vadd.xlane.f32.xlu0 %v1335
        %v1337 = vpop.xlane.xlu0 %1336
        %v1338 = vsel %vm1002, %v1295, 0.0
        %1339 = vadd.xlane.f32.xlu0 %v1338
        %v1340 = vpop.xlane.xlu0 %1339
        %v1341 = vsel %vm1002, %v1297, 0.0
        %1342 = vadd.xlane.f32.xlu0 %v1341
        %v1343 = vpop.xlane.xlu0 %1342
        %v1344 = vsel %vm1002, %v1299, 0.0
        %1345 = vadd.xlane.f32.xlu0 %v1344
        %v1346 = vpop.xlane.xlu0 %1345
        %v1347 = vsel %vm1002, %v1301, 0.0
        %1348 = vadd.xlane.f32.xlu0 %v1347
        %v1349 = vpop.xlane.xlu0 %1348
        %v1350 = vsel %vm1002, %v1303, 0.0
        %1351 = vadd.xlane.f32.xlu0 %v1350
        %v1352 = vpop.xlane.xlu0 %1351
        %v1353 = vsel %vm1002, %v1305, 0.0
        %1354 = vadd.xlane.f32.xlu0 %v1353
        %v1355 = vpop.xlane.xlu0 %1354
        %v1356 = vsel %vm1002, %v1307, 0.0
        %1357 = vadd.xlane.f32.xlu0 %v1356
        %v1358 = vpop.xlane.xlu0 %1357
        %v1359 = vrcp.pop %v1310
        %v1360 = vrcp.pop %v1313
        %v1361 = vrcp.pop %v1316
        %v1362 = vrcp.pop %v1319
        %v1363 = vrcp.pop %v1322
        %v1364 = vrcp.pop %v1325
        %v1365 = vrcp.pop %v1328
        %v1366 = vrcp.pop %v1331
        %v1367 = vrcp.pop %v1334
        %v1368 = vrcp.pop %v1337
        %v1369 = vrcp.pop %v1340
        %v1370 = vrcp.pop %v1343
        %v1371 = vrcp.pop %v1346
        %v1372 = vrcp.pop %v1349
        %v1373 = vrcp.pop %v1352
        %v1374 = vrcp.pop %v1355
        %v1375 = vrcp.pop %v1358
        %v1376 = vmul.f32 %v1275, %v1359
        %v1377 = vmul.f32 %v1277, %v1360
        %v1378 = vmul.f32 %v1279, %v1361
        %v1379 = vmul.f32 %v1281, %v1362
        %v1380 = vmul.f32 %v1283, %v1363
        %v1381 = vmul.f32 %v1285, %v1364
        %v1382 = vmul.f32 %v1287, %v1365
        %v1383 = vmul.f32 %v1289, %v1366
        %v1384 = vmul.f32 %v1291, %v1367
        %v1385 = vmul.f32 %v1293, %v1368
        %v1386 = vmul.f32 %v1295, %v1369
        %v1387 = vmul.f32 %v1297, %v1370
        %v1388 = vmul.f32 %v1299, %v1371
        %v1389 = vmul.f32 %v1301, %v1372
        %v1390 = vmul.f32 %v1303, %v1373
        %v1391 = vmul.f32 %v1305, %v1374
        %v1392 = vmul.f32 %v1307, %v1375
        %v1393 = vpack.c.bf16 %v1377, %v1376
        %v1394 = vpack.c.bf16 %v1379, %v1378
        %v1395 = vpack.c.bf16 %v1381, %v1380
        %v1396 = vpack.c.bf16 %v1383, %v1382
        %v1397 = vpack.c.bf16 %v1385, %v1384
        %v1398 = vpack.c.bf16 %v1387, %v1386
        %v1399 = vpack.c.bf16 %v1389, %v1388
        %v1400 = vpack.c.bf16 %v1391, %v1390
        %v1401 = vpack.c.bf16 %v1392, %v1392
        %1402 = vrot.lane.b32.xlu0 %v957, 64
        %v1403 = vpop.permute.xlu0 %1402
        %1404 = vrot.lane.b32.xlu0 %v958, 64
        %v1405 = vpop.permute.xlu0 %1404
        %v1408 = vsel %vm1002, %v1393, 0
        %v1411 = vsel %vm1002, %v1394, 0
        %v1414 = vsel %vm1002, %v1395, 0
        %v1417 = vsel %vm1002, %v1396, 0
        %v1420 = vsel %vm1002, %v1397, 0
        %v1423 = vsel %vm1002, %v1398, 0
        %v1426 = vsel %vm1002, %v1399, 0
        %v1429 = vsel %vm1002, %v1400, 0
        %v1432 = vsel %vm1002, %v1401, 0
        %v1435 = vand.u32 %v1405, %v1031
        %1437 = vmatpush.bf16.msra.mxu0 0
        %1438 = vmatpush.bf16.msra.mxu0 0
        %1439 = vmatpush.bf16.msra.mxu0 0
        %1440 = vmatpush.bf16.msra.mxu0 0
        %1441 = vmatpush.bf16.msra.mxu0 0
        %1442 = vmatpush.bf16.msra.mxu0 0
        %1443 = vmatpush.bf16.msra.mxu0 %v1435
        %1444 = vmatpush.bf16.msra.mxu0 %v1403
        %1445 = vmatmul.bf16.gmra.mxu0 %v1408
        %v1446 = vpop.f32.mrf.mxu0
        %v1447 = vadd.f32 0.0, %v1446
        %v1448 = vpop.f32.mrf.mxu0
        %v1449 = vadd.f32 0.0, %v1448
        %1450 = vmatmul.bf16.gmra.mxu0 %v1411
        %v1451 = vpop.f32.mrf.mxu0
        %v1452 = vadd.f32 0.0, %v1451
        %v1453 = vpop.f32.mrf.mxu0
        %v1454 = vadd.f32 0.0, %v1453
        %1455 = vmatmul.bf16.gmra.mxu0 %v1414
        %v1456 = vpop.f32.mrf.mxu0
        %v1457 = vadd.f32 0.0, %v1456
        %v1458 = vpop.f32.mrf.mxu0
        %v1459 = vadd.f32 0.0, %v1458
        %1460 = vmatmul.bf16.gmra.mxu0 %v1417
        %v1461 = vpop.f32.mrf.mxu0
        %v1462 = vadd.f32 0.0, %v1461
        %v1463 = vpop.f32.mrf.mxu0
        %v1464 = vadd.f32 0.0, %v1463
        %1465 = vmatmul.bf16.gmra.mxu0 %v1420
        %v1466 = vpop.f32.mrf.mxu0
        %v1467 = vadd.f32 0.0, %v1466
        %v1468 = vpop.f32.mrf.mxu0
        %v1469 = vadd.f32 0.0, %v1468
        %1470 = vmatmul.bf16.gmra.mxu0 %v1423
        %v1471 = vpop.f32.mrf.mxu0
        %v1472 = vadd.f32 0.0, %v1471
        %v1473 = vpop.f32.mrf.mxu0
        %v1474 = vadd.f32 0.0, %v1473
        %1475 = vmatmul.bf16.gmra.mxu0 %v1426
        %v1476 = vpop.f32.mrf.mxu0
        %v1477 = vadd.f32 0.0, %v1476
        %v1478 = vpop.f32.mrf.mxu0
        %v1479 = vadd.f32 0.0, %v1478
        %1480 = vmatmul.bf16.gmra.mxu0 %v1429
        %v1481 = vpop.f32.mrf.mxu0
        %v1482 = vadd.f32 0.0, %v1481
        %v1483 = vpop.f32.mrf.mxu0
        %v1484 = vadd.f32 0.0, %v1483
        %1485 = vmatmul.bf16.gmra.mxu0 %v1432
        %v1486 = vpop.f32.mrf.mxu0
        %v1487 = vadd.f32 0.0, %v1486
        %v1488 = vpop.f32.mrf.mxu0
        %1489 = vdwg.mxu0
        %v1490 = vmul.f32 %v1447, %v726
        %v1491 = vmul.f32 %v1449, %v727
        %v1492 = vmul.f32 %v1452, %v728
        %v1493 = vmul.f32 %v1454, %v729
        %v1494 = vmul.f32 %v1457, %v730
        %v1495 = vmul.f32 %v1459, %v731
        %v1496 = vmul.f32 %v1462, %v732
        %v1497 = vmul.f32 %v1464, %v733
        %v1498 = vmul.f32 %v1467, %v734
        %v1499 = vmul.f32 %v1469, %v735
        %v1500 = vmul.f32 %v1472, %v736
        %v1501 = vmul.f32 %v1474, %v737
        %v1502 = vmul.f32 %v1477, %v738
        %v1503 = vmul.f32 %v1479, %v739
        %v1504 = vmul.f32 %v1482, %v740
        %v1505 = vmul.f32 %v1484, %v741
        %v1506 = vmul.f32 %v1487, %v742
        %v1507 = vpack.c.bf16 %v1491, %v1490
        %v1508 = vpack.c.bf16 %v1493, %v1492
        %v1509 = vpack.c.bf16 %v1495, %v1494
        %v1510 = vpack.c.bf16 %v1497, %v1496
        %v1511 = vpack.c.bf16 %v1499, %v1498
        %v1512 = vpack.c.bf16 %v1501, %v1500
        %v1513 = vpack.c.bf16 %v1503, %v1502
        %v1514 = vpack.c.bf16 %v1505, %v1504
        %v1515 = vpack.c.bf16 %v1506, %v1506
        %v1519 = vunpack.c.l.b16 %v743
        %v1520 = vunpack.c.h.b16 %v743
        %v1521 = vunpack.c.l.b16 %v744
        %v1522 = vunpack.c.h.b16 %v744
        %v1523 = vunpack.c.l.b16 %v745
        %v1524 = vunpack.c.h.b16 %v745
        %v1525 = vpack.c.b16 %v1521, %v1519
        %v1526 = vpack.c.b16 %v1522, %v1520
        %v1527 = vpack.c.b16 %v1523, %v1523
        %v1528 = vpack.c.b16 %v1524, %v1524
        %vm1531 = vcmask 64512
        %v1533 = vsel %vm1531, %v1526, 0
        %v1536 = vsel %vm1531, %v1528, 0
        %vm1538 = vcmask 1043456
        %v1540 = vsel %vm1538, %v1515, 0
        %1542 = vmatpush.bf16.msra.mxu0 %v1514
        %1543 = vmatpush.bf16.msra.mxu0 %v1513
        %1544 = vmatpush.bf16.msra.mxu0 %v1512
        %1545 = vmatpush.bf16.msra.mxu0 %v1511
        %1546 = vmatpush.bf16.msra.mxu0 %v1510
        %1547 = vmatpush.bf16.msra.mxu0 %v1509
        %1548 = vmatpush.bf16.msra.mxu0 %v1508
        %1549 = vmatpush.bf16.msra.mxu0 %v1507
        %1550 = vmatmul.bf16.gmra.mxu0 %v1525
        %v1551 = vpop.f32.mrf.mxu0
        %v1552 = vadd.f32 0.0, %v1551
        %v1553 = vpop.f32.mrf.mxu0
        %v1554 = vadd.f32 0.0, %v1553
        %1555 = vmatmul.bf16.gmra.mxu0 %v1527
        %v1556 = vpop.f32.mrf.mxu0
        %v1557 = vadd.f32 0.0, %v1556
        %v1558 = vpop.f32.mrf.mxu0
        %1559 = vdwg.mxu0
        %1560 = vmatpush.bf16.msra.mxu0 0
        %1561 = vmatpush.bf16.msra.mxu0 0
        %1562 = vmatpush.bf16.msra.mxu0 0
        %1563 = vmatpush.bf16.msra.mxu0 0
        %1564 = vmatpush.bf16.msra.mxu0 0
        %1565 = vmatpush.bf16.msra.mxu0 0
        %1566 = vmatpush.bf16.msra.mxu0 0
        %1567 = vmatpush.bf16.msra.mxu0 %v1540
        %1568 = vmatmul.bf16.gmra.mxu0 %v1533
        %v1569 = vpop.f32.mrf.mxu0
        %v1570 = vadd.f32 %v1552, %v1569
        %v1571 = vpop.f32.mrf.mxu0
        %v1572 = vadd.f32 %v1554, %v1571
        %1573 = vmatmul.bf16.gmra.mxu0 %v1536
        %v1574 = vpop.f32.mrf.mxu0
        %v1575 = vadd.f32 %v1557, %v1574
        %v1576 = vpop.f32.mrf.mxu0
        %1577 = vdwg.mxu0
        %v1578 = vld [vmem:[%s11] sm:$0xf]
        %v1579 = vld [vmem:[%s11 + $0x4] sm:$0xf]
        %v1580 = vld [vmem:[%s11 + $0x8] sm:$0xf]
        %v1581 = vld [vmem:[%s11 + $0xc] sm:$0xf]
        %v1582 = vpack.c.bf16 %v1572, %v1570
        %v1583 = vpack.c.bf16 %v1575, %v1575
        %v1588 = vunpack.c.l.b16 %v1578
        %v1589 = vunpack.c.l.b16 %v1579
        %v1590 = vunpack.c.l.b16 %v1580
        %v1591 = vunpack.c.l.b16 %v1581
        %v1592 = vpack.c.b16 %v1589, %v1588
        %v1593 = vpack.c.b16 %v1591, %v1590
        %v1597 = vsel %vm818, %v1582, 0
        %v1600 = vsel %vm818, %v1583, 0
        %1602 = vmatpush.bf16.msra.mxu0 0
        %1603 = vmatpush.bf16.msra.mxu0 0
        %1604 = vmatpush.bf16.msra.mxu0 0
        %1605 = vmatpush.bf16.msra.mxu0 0
        %1606 = vmatpush.bf16.msra.mxu0 0
        %1607 = vmatpush.bf16.msra.mxu0 0
        %1608 = vmatpush.bf16.msra.mxu0 %v1593
        %1609 = vmatpush.bf16.msra.mxu0 %v1592
        %1610 = vmatmul.bf16.gmra.mxu0 %v1597
        %v1611 = vpop.f32.mrf.mxu0
        %v1612 = vadd.f32 0.0, %v1611
        %v1613 = vpop.f32.mrf.mxu0
        %v1614 = vadd.f32 0.0, %v1613
        %1615 = vmatmul.bf16.gmra.mxu0 %v1600
        %v1616 = vpop.f32.mrf.mxu0
        %v1617 = vadd.f32 0.0, %v1616
        %v1618 = vpop.f32.mrf.mxu0
        %1619 = vdwg.mxu0
        %v1620 = vadd.f32 %v815, %v1612
        %v1621 = vadd.f32 %v811, %v1614
        %v1622 = vadd.f32 %v810, %v1617
        %v1623 = vld [vmem:[%s12] sm:$0x1]
        %v1625 = vperm.slane %v1623, 0
        %v1627 = vadd.f32 %v1620, %v1625
        %v1628 = vadd.f32 %v1621, %v1625
        %v1629 = vadd.f32 %v1622, %v1625
        %v1630 = vld [vmem:[%s13] sm:$0x1]
        %v1631 = vld [vmem:[%s14] sm:$0x1]
        %v1632 = vsel %vm818, %v1627, 0.0
        %1633 = vadd.xlane.f32.xlu0 %v1632
        %v1634 = vpop.xlane.xlu0 %1633
        %v1635 = vsel %vm818, %v1628, 0.0
        %1636 = vadd.xlane.f32.xlu0 %v1635
        %v1637 = vpop.xlane.xlu0 %1636
        %v1638 = vsel %vm825, %v1629, 0.0
        %1639 = vadd.xlane.f32.xlu0 %v1638
        %v1640 = vpop.xlane.xlu0 %1639
        %v1641 = vmul.f32 %v1634, %v835
        %v1642 = vmul.f32 %v1637, %v835
        %v1643 = vmul.f32 %v1640, %v835
        %v1644 = vmul.f32 %v1627, %v1627
        %v1645 = vmul.f32 %v1628, %v1628
        %v1646 = vmul.f32 %v1629, %v1629
        %v1647 = vsel %vm818, %v1644, 0.0
        %1648 = vadd.xlane.f32.xlu0 %v1647
        %v1649 = vpop.xlane.xlu0 %1648
        %v1650 = vsel %vm818, %v1645, 0.0
        %1651 = vadd.xlane.f32.xlu0 %v1650
        %v1652 = vpop.xlane.xlu0 %1651
        %v1653 = vsel %vm825, %v1646, 0.0
        %1654 = vadd.xlane.f32.xlu0 %v1653
        %v1655 = vpop.xlane.xlu0 %1654
        %v1656 = vmul.f32 %v1649, %v835
        %v1657 = vmul.f32 %v1652, %v835
        %v1658 = vmul.f32 %v1655, %v835
        %v1659 = vmul.f32 %v1641, %v1641
        %v1660 = vmul.f32 %v1642, %v1642
        %v1661 = vmul.f32 %v1643, %v1643
        %v1662 = vsub.f32 %v1656, %v1659
        %v1663 = vsub.f32 %v1657, %v1660
        %v1664 = vsub.f32 %v1658, %v1661
        %v1665 = vadd.f32 %v1662, 1e-05
        %v1666 = vadd.f32 %v1663, 1e-05
        %v1667 = vadd.f32 %v1664, 1e-05
        %v1668 = vrsqrt.pop %v1665
        %v1669 = vmul.f32 %v1668, %v1665
        %v1670 = vmul.f32 %v1669, %v1668
        %v1671 = vmul.f32 0.5, %v1670
        %v1672 = vsub.f32 1.5, %v1671
        %v1673 = vmul.f32 %v1668, %v1672
        %vm1674 = vweird.f32 %v1665
        %vm1675 = vweird.f32 %v1668
        %vm1676 = vmor %vm1674, %vm1675
        %v1677 = vsel %vm1676, %v1668, %v1673
        %v1678 = vrsqrt.pop %v1666
        %v1679 = vmul.f32 %v1678, %v1666
        %v1680 = vmul.f32 %v1679, %v1678
        %v1681 = vmul.f32 0.5, %v1680
        %v1682 = vsub.f32 1.5, %v1681
        %v1683 = vmul.f32 %v1678, %v1682
        %vm1684 = vweird.f32 %v1666
        %vm1685 = vweird.f32 %v1678
        %vm1686 = vmor %vm1684, %vm1685
        %v1687 = vsel %vm1686, %v1678, %v1683
        %v1688 = vrsqrt.pop %v1667
        %v1689 = vmul.f32 %v1688, %v1667
        %v1690 = vmul.f32 %v1689, %v1688
        %v1691 = vmul.f32 0.5, %v1690
        %v1692 = vsub.f32 1.5, %v1691
        %v1693 = vmul.f32 %v1688, %v1692
        %vm1694 = vweird.f32 %v1667
        %vm1695 = vweird.f32 %v1688
        %vm1696 = vmor %vm1694, %vm1695
        %v1697 = vsel %vm1696, %v1688, %v1693
        %v1698 = vsub.f32 %v1627, %v1641
        %v1699 = vsub.f32 %v1628, %v1642
        %v1700 = vsub.f32 %v1629, %v1643
        %v1701 = vmul.f32 %v1698, %v1677
        %v1702 = vmul.f32 %v1699, %v1687
        %v1703 = vmul.f32 %v1700, %v1697
        %v1705 = vperm.slane %v1630, 0
        %v1707 = vmul.f32 %v1701, %v1705
        %v1708 = vmul.f32 %v1702, %v1705
        %v1709 = vmul.f32 %v1703, %v1705
        %v1711 = vperm.slane %v1631, 0
        %v1713 = vadd.f32 %v1707, %v1711
        %v1714 = vadd.f32 %v1708, %v1711
        %v1715 = vadd.f32 %v1709, %v1711
        %v1716 = vld [vmem:[%s15] sm:$0xf]
        %v1717 = vld [vmem:[%s15 + $0x4] sm:$0xf]
        %v1718 = vld [vmem:[%s15 + $0x8] sm:$0xf]
        %v1719 = vld [vmem:[%s15 + $0xc] sm:$0xf]
        %v1720 = vpack.c.bf16 %v1714, %v1713
        %v1721 = vpack.c.bf16 %v1715, %v1715
        %v1722 = vld [vmem:[%s16] sm:$0x1]
        %v1724 = vperm.slane %v1722, 0
        %v1730 = vunpack.c.l.b16 %v1716
        %v1731 = vunpack.c.l.b16 %v1717
        %v1732 = vunpack.c.l.b16 %v1718
        %v1733 = vunpack.c.l.b16 %v1719
        %v1734 = vpack.c.b16 %v1731, %v1730
        %v1735 = vpack.c.b16 %v1733, %v1732
        %v1739 = vsel %vm818, %v1720, 0
        %v1742 = vsel %vm818, %v1721, 0
        %1744 = vmatpush.bf16.msra.mxu0 0
        %1745 = vmatpush.bf16.msra.mxu0 0
        %1746 = vmatpush.bf16.msra.mxu0 0
        %1747 = vmatpush.bf16.msra.mxu0 0
        %1748 = vmatpush.bf16.msra.mxu0 0
        %1749 = vmatpush.bf16.msra.mxu0 0
        %1750 = vmatpush.bf16.msra.mxu0 %v1735
        %1751 = vmatpush.bf16.msra.mxu0 %v1734
        %1752 = vmatmul.bf16.gmra.mxu0 %v1739
        %v1753 = vpop.f32.mrf.mxu0
        %v1754 = vadd.f32 %v1724, %v1753
        %v1755 = vpop.f32.mrf.mxu0
        %v1756 = vadd.f32 %v1724, %v1755
        %1757 = vmatmul.bf16.gmra.mxu0 %v1742
        %v1758 = vpop.f32.mrf.mxu0
        %v1759 = vadd.f32 %v1724, %v1758
        %v1760 = vpop.f32.mrf.mxu0
        %1761 = vdwg.mxu0
        %v1762 = vmul.f32 %v1754, 0.5
        %v1763 = vmul.f32 %v1756, 0.5
        %v1764 = vmul.f32 %v1759, 0.5
        %v1765 = vmul.f32 %v1754, 0.70710677
        %v1766 = vmul.f32 %v1756, 0.70710677
        %v1767 = vmul.f32 %v1759, 0.70710677
        %v1768 = vmul.f32 %v1765, %v1765
        %v1769 = vmin.f32 16.0, %v1768
        %v1770 = vmul.f32 %v1769, 2.1237322e-06
        %v1771 = vadd.f32 %v1770, 0.00028619796
        %v1772 = vmul.f32 %v1769, %v1771
        %v1773 = vadd.f32 %v1772, 0.0036580483
        %v1774 = vmul.f32 %v1769, %v1773
        %v1775 = vadd.f32 %v1774, 0.05243302
        %v1776 = vmul.f32 %v1769, %v1775
        %v1777 = vadd.f32 %v1776, 0.18741608
        %v1778 = vmul.f32 %v1769, %v1777
        %v1779 = vadd.f32 %v1778, 1.1283791
        %v1780 = vmul.f32 %v1765, %v1779
        %v1781 = vmul.f32 %v1769, 3.8918573e-05
        %v1782 = vadd.f32 %v1781, 0.001143296
        %v1783 = vmul.f32 %v1769, %v1782
        %v1784 = vadd.f32 %v1783, 0.014752088
        %v1785 = vmul.f32 %v1769, %v1784
        %v1786 = vadd.f32 %v1785, 0.112945676
        %v1787 = vmul.f32 %v1769, %v1786
        %v1788 = vadd.f32 %v1787, 0.4994258
        %v1789 = vmul.f32 %v1769, %v1788
        %v1790 = vadd.f32 %v1789, 1.0
        %v1791 = vrcp.pop %v1790
        %v1792 = vmul.f32 %v1790, %v1791
        %v1793 = vsub.f32 1.0, %v1792
        %v1794 = vmul.f32 %v1791, %v1793
        %v1795 = vadd.f32 %v1791, %v1794
        %vm1796 = vweird.f32 %v1790
        %vm1797 = vweird.f32 %v1791
        %vm1798 = vmor %vm1796, %vm1797
        %v1799 = vsel %vm1798, %v1791, %v1795
        %v1800 = vand.u32 2147483647, %v1790
        %vm1801 = vcmp.eq.f32.partialorder %v1800, 8.507059e+37
        %v1802 = vand.u32 %v1790, 2147483648
        %v1803 = vor.u32 1.1754944e-38, %v1802
        %v1804 = vsel %vm1801, %v1803, %v1799
        %v1805 = vmul.f32 %v1780, %v1804
        %v1806 = vmin.f32 %v1805, 1.0
        %v1807 = vmax.f32 %v1806, -1.0
        %v1808 = vmul.f32 %v1766, %v1766
        %v1809 = vmin.f32 16.0, %v1808
        %v1810 = vmul.f32 %v1809, 2.1237322e-06
        %v1811 = vadd.f32 %v1810, 0.00028619796
        %v1812 = vmul.f32 %v1809, %v1811
        %v1813 = vadd.f32 %v1812, 0.0036580483
        %v1814 = vmul.f32 %v1809, %v1813
        %v1815 = vadd.f32 %v1814, 0.05243302
        %v1816 = vmul.f32 %v1809, %v1815
        %v1817 = vadd.f32 %v1816, 0.18741608
        %v1818 = vmul.f32 %v1809, %v1817
        %v1819 = vadd.f32 %v1818, 1.1283791
        %v1820 = vmul.f32 %v1766, %v1819
        %v1821 = vmul.f32 %v1809, 3.8918573e-05
        %v1822 = vadd.f32 %v1821, 0.001143296
        %v1823 = vmul.f32 %v1809, %v1822
        %v1824 = vadd.f32 %v1823, 0.014752088
        %v1825 = vmul.f32 %v1809, %v1824
        %v1826 = vadd.f32 %v1825, 0.112945676
        %v1827 = vmul.f32 %v1809, %v1826
        %v1828 = vadd.f32 %v1827, 0.4994258
        %v1829 = vmul.f32 %v1809, %v1828
        %v1830 = vadd.f32 %v1829, 1.0
        %v1831 = vrcp.pop %v1830
        %v1832 = vmul.f32 %v1830, %v1831
        %v1833 = vsub.f32 1.0, %v1832
        %v1834 = vmul.f32 %v1831, %v1833
        %v1835 = vadd.f32 %v1831, %v1834
        %vm1836 = vweird.f32 %v1830
        %vm1837 = vweird.f32 %v1831
        %vm1838 = vmor %vm1836, %vm1837
        %v1839 = vsel %vm1838, %v1831, %v1835
        %v1840 = vand.u32 2147483647, %v1830
        %vm1841 = vcmp.eq.f32.partialorder %v1840, 8.507059e+37
        %v1842 = vand.u32 %v1830, 2147483648
        %v1843 = vor.u32 1.1754944e-38, %v1842
        %v1844 = vsel %vm1841, %v1843, %v1839
        %v1845 = vmul.f32 %v1820, %v1844
        %v1846 = vmin.f32 %v1845, 1.0
        %v1847 = vmax.f32 %v1846, -1.0
        %v1848 = vmul.f32 %v1767, %v1767
        %v1849 = vmin.f32 16.0, %v1848
        %v1850 = vmul.f32 %v1849, 2.1237322e-06
        %v1851 = vadd.f32 %v1850, 0.00028619796
        %v1852 = vmul.f32 %v1849, %v1851
        %v1853 = vadd.f32 %v1852, 0.0036580483
        %v1854 = vmul.f32 %v1849, %v1853
        %v1855 = vadd.f32 %v1854, 0.05243302
        %v1856 = vmul.f32 %v1849, %v1855
        %v1857 = vadd.f32 %v1856, 0.18741608
        %v1858 = vmul.f32 %v1849, %v1857
        %v1859 = vadd.f32 %v1858, 1.1283791
        %v1860 = vmul.f32 %v1767, %v1859
        %v1861 = vmul.f32 %v1849, 3.8918573e-05
        %v1862 = vadd.f32 %v1861, 0.001143296
        %v1863 = vmul.f32 %v1849, %v1862
        %v1864 = vadd.f32 %v1863, 0.014752088
        %v1865 = vmul.f32 %v1849, %v1864
        %v1866 = vadd.f32 %v1865, 0.112945676
        %v1867 = vmul.f32 %v1849, %v1866
        %v1868 = vadd.f32 %v1867, 0.4994258
        %v1869 = vmul.f32 %v1849, %v1868
        %v1870 = vadd.f32 %v1869, 1.0
        %v1871 = vrcp.pop %v1870
        %v1872 = vmul.f32 %v1870, %v1871
        %v1873 = vsub.f32 1.0, %v1872
        %v1874 = vmul.f32 %v1871, %v1873
        %v1875 = vadd.f32 %v1871, %v1874
        %vm1876 = vweird.f32 %v1870
        %vm1877 = vweird.f32 %v1871
        %vm1878 = vmor %vm1876, %vm1877
        %v1879 = vsel %vm1878, %v1871, %v1875
        %v1880 = vand.u32 2147483647, %v1870
        %vm1881 = vcmp.eq.f32.partialorder %v1880, 8.507059e+37
        %v1882 = vand.u32 %v1870, 2147483648
        %v1883 = vor.u32 1.1754944e-38, %v1882
        %v1884 = vsel %vm1881, %v1883, %v1879
        %v1885 = vmul.f32 %v1860, %v1884
        %v1886 = vmin.f32 %v1885, 1.0
        %v1887 = vmax.f32 %v1886, -1.0
        %v1888 = vadd.f32 %v1807, 1.0
        %v1889 = vadd.f32 %v1847, 1.0
        %v1890 = vadd.f32 %v1887, 1.0
        %v1891 = vmul.f32 %v1762, %v1888
        %v1892 = vmul.f32 %v1763, %v1889
        %v1893 = vmul.f32 %v1764, %v1890
        %v1894 = vld [vmem:[%s17] sm:$0xf]
        %v1895 = vld [vmem:[%s17 + $0x4] sm:$0xf]
        %v1896 = vld [vmem:[%s17 + $0x8] sm:$0xf]
        %v1897 = vld [vmem:[%s17 + $0xc] sm:$0xf]
        %v1898 = vld [vmem:[%s17 + $0x10] sm:$0xf]
        %v1899 = vld [vmem:[%s17 + $0x14] sm:$0xf]
        %v1900 = vld [vmem:[%s17 + $0x18] sm:$0xf]
        %v1901 = vld [vmem:[%s17 + $0x1c] sm:$0xf]
        %v1902 = vpack.c.bf16 %v1892, %v1891
        %v1903 = vpack.c.bf16 %v1893, %v1893
        %v1912 = vunpack.c.l.b16 %v1894
        %v1913 = vunpack.c.l.b16 %v1895
        %v1914 = vunpack.c.l.b16 %v1896
        %v1915 = vunpack.c.l.b16 %v1897
        %v1916 = vunpack.c.l.b16 %v1898
        %v1917 = vunpack.c.l.b16 %v1899
        %v1918 = vunpack.c.l.b16 %v1900
        %v1919 = vunpack.c.l.b16 %v1901
        %v1920 = vpack.c.b16 %v1913, %v1912
        %v1921 = vpack.c.b16 %v1915, %v1914
        %v1922 = vpack.c.b16 %v1917, %v1916
        %v1923 = vpack.c.b16 %v1919, %v1918
        %v1929 = vsel %vm787, %v1902, 0
        %v1932 = vsel %vm787, %v1903, 0
        %1934 = vmatpush.bf16.msra.mxu0 0
        %1935 = vmatpush.bf16.msra.mxu0 0
        %1936 = vmatpush.bf16.msra.mxu0 0
        %1937 = vmatpush.bf16.msra.mxu0 0
        %1938 = vmatpush.bf16.msra.mxu0 %v1923
        %1939 = vmatpush.bf16.msra.mxu0 %v1922
        %1940 = vmatpush.bf16.msra.mxu0 %v1921
        %1941 = vmatpush.bf16.msra.mxu0 %v1920
        %1942 = vmatmul.bf16.gmra.mxu0 %v1929
        %v1943 = vpop.f32.mrf.mxu0
        %v1944 = vadd.f32 0.0, %v1943
        %v1945 = vpop.f32.mrf.mxu0
        %v1946 = vadd.f32 0.0, %v1945
        %1947 = vmatmul.bf16.gmra.mxu0 %v1932
        %v1948 = vpop.f32.mrf.mxu0
        %v1949 = vadd.f32 0.0, %v1948
        %v1950 = vpop.f32.mrf.mxu0
        %1951 = vdwg.mxu0
        %v1952 = vadd.f32 %v1627, %v1944
        %v1953 = vadd.f32 %v1628, %v1946
        %v1954 = vadd.f32 %v1629, %v1949
        %v1955 = vld [vmem:[%s18] sm:$0x1]
        %v1957 = vperm.slane %v1955, 0
        %v1959 = vadd.f32 %v1952, %v1957
        %v1960 = vadd.f32 %v1953, %v1957
        %v1961 = vadd.f32 %v1954, %v1957
        %s1962 = scalar_lea.vmem %s7, 1
        %v1963 = vld [vmem:[%s1962] sm:$0x1]
        %s1964 = scalar_lea.vmem %s8, 1
        %v1965 = vld [vmem:[%s1964] sm:$0x1]
        %v1966 = vsel %vm818, %v1959, 0.0
        %1967 = vadd.xlane.f32.xlu0 %v1966
        %v1968 = vpop.xlane.xlu0 %1967
        %v1969 = vsel %vm818, %v1960, 0.0
        %1970 = vadd.xlane.f32.xlu0 %v1969
        %v1971 = vpop.xlane.xlu0 %1970
        %v1972 = vsel %vm825, %v1961, 0.0
        %1973 = vadd.xlane.f32.xlu0 %v1972
        %v1974 = vpop.xlane.xlu0 %1973
        %v1975 = vmul.f32 %v1968, %v835
        %v1976 = vmul.f32 %v1971, %v835
        %v1977 = vmul.f32 %v1974, %v835
        %v1978 = vmul.f32 %v1959, %v1959
        %v1979 = vmul.f32 %v1960, %v1960
        %v1980 = vmul.f32 %v1961, %v1961
        %v1981 = vsel %vm818, %v1978, 0.0
        %1982 = vadd.xlane.f32.xlu0 %v1981
        %v1983 = vpop.xlane.xlu0 %1982
        %v1984 = vsel %vm818, %v1979, 0.0
        %1985 = vadd.xlane.f32.xlu0 %v1984
        %v1986 = vpop.xlane.xlu0 %1985
        %v1987 = vsel %vm825, %v1980, 0.0
        %1988 = vadd.xlane.f32.xlu0 %v1987
        %v1989 = vpop.xlane.xlu0 %1988
        %v1990 = vmul.f32 %v1983, %v835
        %v1991 = vmul.f32 %v1986, %v835
        %v1992 = vmul.f32 %v1989, %v835
        %v1993 = vmul.f32 %v1975, %v1975
        %v1994 = vmul.f32 %v1976, %v1976
        %v1995 = vmul.f32 %v1977, %v1977
        %v1996 = vsub.f32 %v1990, %v1993
        %v1997 = vsub.f32 %v1991, %v1994
        %v1998 = vsub.f32 %v1992, %v1995
        %v1999 = vadd.f32 %v1996, 1e-05
        %v2000 = vadd.f32 %v1997, 1e-05
        %v2001 = vadd.f32 %v1998, 1e-05
        %v2002 = vrsqrt.pop %v1999
        %v2003 = vmul.f32 %v2002, %v1999
        %v2004 = vmul.f32 %v2003, %v2002
        %v2005 = vmul.f32 0.5, %v2004
        %v2006 = vsub.f32 1.5, %v2005
        %v2007 = vmul.f32 %v2002, %v2006
        %vm2008 = vweird.f32 %v1999
        %vm2009 = vweird.f32 %v2002
        %vm2010 = vmor %vm2008, %vm2009
        %v2011 = vsel %vm2010, %v2002, %v2007
        %v2012 = vrsqrt.pop %v2000
        %v2013 = vmul.f32 %v2012, %v2000
        %v2014 = vmul.f32 %v2013, %v2012
        %v2015 = vmul.f32 0.5, %v2014
        %v2016 = vsub.f32 1.5, %v2015
        %v2017 = vmul.f32 %v2012, %v2016
        %vm2018 = vweird.f32 %v2000
        %vm2019 = vweird.f32 %v2012
        %vm2020 = vmor %vm2018, %vm2019
        %v2021 = vsel %vm2020, %v2012, %v2017
        %v2022 = vrsqrt.pop %v2001
        %v2023 = vmul.f32 %v2022, %v2001
        %v2024 = vmul.f32 %v2023, %v2022
        %v2025 = vmul.f32 0.5, %v2024
        %v2026 = vsub.f32 1.5, %v2025
        %v2027 = vmul.f32 %v2022, %v2026
        %vm2028 = vweird.f32 %v2001
        %vm2029 = vweird.f32 %v2022
        %vm2030 = vmor %vm2028, %vm2029
        %v2031 = vsel %vm2030, %v2022, %v2027
        %v2032 = vsub.f32 %v1959, %v1975
        %v2033 = vsub.f32 %v1960, %v1976
        %v2034 = vsub.f32 %v1961, %v1977
        %v2035 = vmul.f32 %v2032, %v2011
        %v2036 = vmul.f32 %v2033, %v2021
        %v2037 = vmul.f32 %v2034, %v2031
        %v2039 = vperm.slane %v1963, 0
        %v2041 = vmul.f32 %v2035, %v2039
        %v2042 = vmul.f32 %v2036, %v2039
        %v2043 = vmul.f32 %v2037, %v2039
        %v2045 = vperm.slane %v1965, 0
        %v2047 = vadd.f32 %v2041, %v2045
        %v2048 = vadd.f32 %v2042, %v2045
        %v2049 = vadd.f32 %v2043, %v2045
        %s2050 = scalar_lea.vmem %s9, 16
        %v2051 = vld [vmem:[%s2050] sm:$0xf]
        %v2052 = vld [vmem:[%s2050 + $0x4] sm:$0xf]
        %v2053 = vld [vmem:[%s2050 + $0x8] sm:$0xf]
        %v2054 = vld [vmem:[%s2050 + $0xc] sm:$0xf]
        %v2055 = vpack.c.bf16 %v2048, %v2047
        %v2056 = vpack.c.bf16 %v2049, %v2049
        %s2057 = scalar_lea.vmem %s10, 1
        %v2058 = vld [vmem:[%s2057] sm:$0x1]
        %v2060 = vperm.slane %v2058, 0
        %v2066 = vunpack.c.l.b16 %v2051
        %v2067 = vunpack.c.l.b16 %v2052
        %v2068 = vunpack.c.l.b16 %v2053
        %v2069 = vunpack.c.l.b16 %v2054
        %v2070 = vpack.c.b16 %v2067, %v2066
        %v2071 = vpack.c.b16 %v2069, %v2068
        %v2075 = vsel %vm818, %v2055, 0
        %v2078 = vsel %vm818, %v2056, 0
        %2080 = vmatpush.bf16.msra.mxu0 0
        %2081 = vmatpush.bf16.msra.mxu0 0
        %2082 = vmatpush.bf16.msra.mxu0 0
        %2083 = vmatpush.bf16.msra.mxu0 0
        %2084 = vmatpush.bf16.msra.mxu0 0
        %2085 = vmatpush.bf16.msra.mxu0 0
        %2086 = vmatpush.bf16.msra.mxu0 %v2071
        %2087 = vmatpush.bf16.msra.mxu0 %v2070
        %2088 = vmatmul.bf16.gmra.mxu0 %v2075
        %v2089 = vpop.f32.mrf.mxu0
        %v2090 = vadd.f32 %v2060, %v2089
        %v2091 = vpop.f32.mrf.mxu0
        %v2092 = vadd.f32 %v2060, %v2091
        %2093 = vmatmul.bf16.gmra.mxu0 %v2078
        %v2094 = vpop.f32.mrf.mxu0
        %v2095 = vadd.f32 %v2060, %v2094
        %v2096 = vpop.f32.mrf.mxu0
        %2097 = vdwg.mxu0
        %v2098 = vpack.c.bf16 %v2092, %v2090
        %v2099 = vpack.c.bf16 %v2095, %v2095
        %v2101 = vand.u32 %v2099, %v1031
        %2103 = vmatpush.bf16.msra.mxu0 0
        %2104 = vmatpush.bf16.msra.mxu0 0
        %2105 = vmatpush.bf16.msra.mxu0 0
        %2106 = vmatpush.bf16.msra.mxu0 0
        %2107 = vmatpush.bf16.msra.mxu0 0
        %2108 = vmatpush.bf16.msra.mxu0 0
        %2109 = vmatpush.bf16.msra.mxu0 %v2101
        %2110 = vmatpush.bf16.msra.mxu0 %v2098
        %2111 = vmatmul.bf16.gmra.mxu0 %v1004
        %v2112 = vpop.f32.mrf.mxu0
        %v2113 = vadd.f32 0.0, %v2112
        %v2114 = vpop.f32.mrf.mxu0
        %v2115 = vadd.f32 0.0, %v2114
        %2116 = vmatmul.bf16.gmra.mxu0 %v1007
        %v2117 = vpop.f32.mrf.mxu0
        %v2118 = vadd.f32 0.0, %v2117
        %v2119 = vpop.f32.mrf.mxu0
        %v2120 = vadd.f32 0.0, %v2119
        %2121 = vmatmul.bf16.gmra.mxu0 %v1010
        %v2122 = vpop.f32.mrf.mxu0
        %v2123 = vadd.f32 0.0, %v2122
        %v2124 = vpop.f32.mrf.mxu0
        %v2125 = vadd.f32 0.0, %v2124
        %2126 = vmatmul.bf16.gmra.mxu0 %v1013
        %v2127 = vpop.f32.mrf.mxu0
        %v2128 = vadd.f32 0.0, %v2127
        %v2129 = vpop.f32.mrf.mxu0
        %v2130 = vadd.f32 0.0, %v2129
        %2131 = vmatmul.bf16.gmra.mxu0 %v1016
        %v2132 = vpop.f32.mrf.mxu0
        %v2133 = vadd.f32 0.0, %v2132
        %v2134 = vpop.f32.mrf.mxu0
        %v2135 = vadd.f32 0.0, %v2134
        %2136 = vmatmul.bf16.gmra.mxu0 %v1019
        %v2137 = vpop.f32.mrf.mxu0
        %v2138 = vadd.f32 0.0, %v2137
        %v2139 = vpop.f32.mrf.mxu0
        %v2140 = vadd.f32 0.0, %v2139
        %2141 = vmatmul.bf16.gmra.mxu0 %v1022
        %v2142 = vpop.f32.mrf.mxu0
        %v2143 = vadd.f32 0.0, %v2142
        %v2144 = vpop.f32.mrf.mxu0
        %v2145 = vadd.f32 0.0, %v2144
        %2146 = vmatmul.bf16.gmra.mxu0 %v1025
        %v2147 = vpop.f32.mrf.mxu0
        %v2148 = vadd.f32 0.0, %v2147
        %v2149 = vpop.f32.mrf.mxu0
        %v2150 = vadd.f32 0.0, %v2149
        %2151 = vmatmul.bf16.gmra.mxu0 %v1028
        %v2152 = vpop.f32.mrf.mxu0
        %v2153 = vadd.f32 0.0, %v2152
        %v2154 = vpop.f32.mrf.mxu0
        %2155 = vdwg.mxu0
        %v2156 = vmul.f32 %v2113, %v726
        %v2157 = vmul.f32 %v2115, %v727
        %v2158 = vmul.f32 %v2118, %v728
        %v2159 = vmul.f32 %v2120, %v729
        %v2160 = vmul.f32 %v2123, %v730
        %v2161 = vmul.f32 %v2125, %v731
        %v2162 = vmul.f32 %v2128, %v732
        %v2163 = vmul.f32 %v2130, %v733
        %v2164 = vmul.f32 %v2133, %v734
        %v2165 = vmul.f32 %v2135, %v735
        %v2166 = vmul.f32 %v2138, %v736
        %v2167 = vmul.f32 %v2140, %v737
        %v2168 = vmul.f32 %v2143, %v738
        %v2169 = vmul.f32 %v2145, %v739
        %v2170 = vmul.f32 %v2148, %v740
        %v2171 = vmul.f32 %v2150, %v741
        %v2172 = vmul.f32 %v2153, %v742
        %v2173 = vpack.c.bf16 %v2157, %v2156
        %v2174 = vpack.c.bf16 %v2159, %v2158
        %v2175 = vpack.c.bf16 %v2161, %v2160
        %v2176 = vpack.c.bf16 %v2163, %v2162
        %v2177 = vpack.c.bf16 %v2165, %v2164
        %v2178 = vpack.c.bf16 %v2167, %v2166
        %v2179 = vpack.c.bf16 %v2169, %v2168
        %v2180 = vpack.c.bf16 %v2171, %v2170
        %v2181 = vpack.c.bf16 %v2172, %v2172
        %2184 = vrot.lane.b32.xlu0 %v2098, 96
        %v2185 = vpop.permute.xlu0 %2184
        %2186 = vrot.lane.b32.xlu0 %v2099, 96
        %v2187 = vpop.permute.xlu0 %2186
        %v2189 = vsel %vm818, %v2173, 0
        %v2192 = vsel %vm818, %v2174, 0
        %v2195 = vsel %vm818, %v2175, 0
        %v2198 = vsel %vm818, %v2176, 0
        %v2201 = vsel %vm818, %v2177, 0
        %v2204 = vsel %vm818, %v2178, 0
        %v2207 = vsel %vm818, %v2179, 0
        %v2210 = vsel %vm818, %v2180, 0
        %v2213 = vsel %vm818, %v2181, 0
        %v2216 = vsel %vm818, %v2185, 0
        %v2219 = vsel %vm818, %v2187, 0
        %2221 = vmatpush.bf16.xpose.msra.mxu0 0
        %2222 = vmatpush.bf16.xpose.msra.mxu0 0
        %2223 = vmatpush.bf16.xpose.msra.mxu0 0
        %2224 = vmatpush.bf16.xpose.msra.mxu0 0
        %2225 = vmatpush.bf16.xpose.msra.mxu0 0
        %2226 = vmatpush.bf16.xpose.msra.mxu0 0
        %2227 = vmatpush.bf16.xpose.msra.mxu0 %v2219
        %2228 = vmatpush.bf16.xpose.msra.mxu0 %v2216
        %2229 = vmatmul.bf16.gmra.mxu0 %v2189
        %v2230 = vpop.f32.mrf.mxu0
        %v2231 = vadd.f32 0.0, %v2230
        %v2232 = vpop.f32.mrf.mxu0
        %v2233 = vadd.f32 0.0, %v2232
        %2234 = vmatmul.bf16.gmra.mxu0 %v2192
        %v2235 = vpop.f32.mrf.mxu0
        %v2236 = vadd.f32 0.0, %v2235
        %v2237 = vpop.f32.mrf.mxu0
        %v2238 = vadd.f32 0.0, %v2237
        %2239 = vmatmul.bf16.gmra.mxu0 %v2195
        %v2240 = vpop.f32.mrf.mxu0
        %v2241 = vadd.f32 0.0, %v2240
        %v2242 = vpop.f32.mrf.mxu0
        %v2243 = vadd.f32 0.0, %v2242
        %2244 = vmatmul.bf16.gmra.mxu0 %v2198
        %v2245 = vpop.f32.mrf.mxu0
        %v2246 = vadd.f32 0.0, %v2245
        %v2247 = vpop.f32.mrf.mxu0
        %v2248 = vadd.f32 0.0, %v2247
        %2249 = vmatmul.bf16.gmra.mxu0 %v2201
        %v2250 = vpop.f32.mrf.mxu0
        %v2251 = vadd.f32 0.0, %v2250
        %v2252 = vpop.f32.mrf.mxu0
        %v2253 = vadd.f32 0.0, %v2252
        %2254 = vmatmul.bf16.gmra.mxu0 %v2204
        %v2255 = vpop.f32.mrf.mxu0
        %v2256 = vadd.f32 0.0, %v2255
        %v2257 = vpop.f32.mrf.mxu0
        %v2258 = vadd.f32 0.0, %v2257
        %2259 = vmatmul.bf16.gmra.mxu0 %v2207
        %v2260 = vpop.f32.mrf.mxu0
        %v2261 = vadd.f32 0.0, %v2260
        %v2262 = vpop.f32.mrf.mxu0
        %v2263 = vadd.f32 0.0, %v2262
        %2264 = vmatmul.bf16.gmra.mxu0 %v2210
        %v2265 = vpop.f32.mrf.mxu0
        %v2266 = vadd.f32 0.0, %v2265
        %v2267 = vpop.f32.mrf.mxu0
        %v2268 = vadd.f32 0.0, %v2267
        %2269 = vmatmul.bf16.gmra.mxu0 %v2213
        %v2270 = vpop.f32.mrf.mxu0
        %v2271 = vadd.f32 0.0, %v2270
        %v2272 = vpop.f32.mrf.mxu0
        %2273 = vdwg.mxu0
        %v2274 = vsel %vm1002, %v2231, -inf
        %2275 = vmax.xlane.f32.xlu0 %v2274
        %v2276 = vpop.xlane.xlu0 %2275
        %v2277 = vsel %vm1002, %v2233, -inf
        %2278 = vmax.xlane.f32.xlu0 %v2277
        %v2279 = vpop.xlane.xlu0 %2278
        %v2280 = vsel %vm1002, %v2236, -inf
        %2281 = vmax.xlane.f32.xlu0 %v2280
        %v2282 = vpop.xlane.xlu0 %2281
        %v2283 = vsel %vm1002, %v2238, -inf
        %2284 = vmax.xlane.f32.xlu0 %v2283
        %v2285 = vpop.xlane.xlu0 %2284
        %v2286 = vsel %vm1002, %v2241, -inf
        %2287 = vmax.xlane.f32.xlu0 %v2286
        %v2288 = vpop.xlane.xlu0 %2287
        %v2289 = vsel %vm1002, %v2243, -inf
        %2290 = vmax.xlane.f32.xlu0 %v2289
        %v2291 = vpop.xlane.xlu0 %2290
        %v2292 = vsel %vm1002, %v2246, -inf
        %2293 = vmax.xlane.f32.xlu0 %v2292
        %v2294 = vpop.xlane.xlu0 %2293
        %v2295 = vsel %vm1002, %v2248, -inf
        %2296 = vmax.xlane.f32.xlu0 %v2295
        %v2297 = vpop.xlane.xlu0 %2296
        %v2298 = vsel %vm1002, %v2251, -inf
        %2299 = vmax.xlane.f32.xlu0 %v2298
        %v2300 = vpop.xlane.xlu0 %2299
        %v2301 = vsel %vm1002, %v2253, -inf
        %2302 = vmax.xlane.f32.xlu0 %v2301
        %v2303 = vpop.xlane.xlu0 %2302
        %v2304 = vsel %vm1002, %v2256, -inf
        %2305 = vmax.xlane.f32.xlu0 %v2304
        %v2306 = vpop.xlane.xlu0 %2305
        %v2307 = vsel %vm1002, %v2258, -inf
        %2308 = vmax.xlane.f32.xlu0 %v2307
        %v2309 = vpop.xlane.xlu0 %2308
        %v2310 = vsel %vm1002, %v2261, -inf
        %2311 = vmax.xlane.f32.xlu0 %v2310
        %v2312 = vpop.xlane.xlu0 %2311
        %v2313 = vsel %vm1002, %v2263, -inf
        %2314 = vmax.xlane.f32.xlu0 %v2313
        %v2315 = vpop.xlane.xlu0 %2314
        %v2316 = vsel %vm1002, %v2266, -inf
        %2317 = vmax.xlane.f32.xlu0 %v2316
        %v2318 = vpop.xlane.xlu0 %2317
        %v2319 = vsel %vm1002, %v2268, -inf
        %2320 = vmax.xlane.f32.xlu0 %v2319
        %v2321 = vpop.xlane.xlu0 %2320
        %v2322 = vsel %vm1002, %v2271, -inf
        %2323 = vmax.xlane.f32.xlu0 %v2322
        %v2324 = vpop.xlane.xlu0 %2323
        %v2325 = vsub.f32 %v2231, %v2276
        %v2326 = vsub.f32 %v2233, %v2279
        %v2327 = vsub.f32 %v2236, %v2282
        %v2328 = vsub.f32 %v2238, %v2285
        %v2329 = vsub.f32 %v2241, %v2288
        %v2330 = vsub.f32 %v2243, %v2291
        %v2331 = vsub.f32 %v2246, %v2294
        %v2332 = vsub.f32 %v2248, %v2297
        %v2333 = vsub.f32 %v2251, %v2300
        %v2334 = vsub.f32 %v2253, %v2303
        %v2335 = vsub.f32 %v2256, %v2306
        %v2336 = vsub.f32 %v2258, %v2309
        %v2337 = vsub.f32 %v2261, %v2312
        %v2338 = vsub.f32 %v2263, %v2315
        %v2339 = vsub.f32 %v2266, %v2318
        %v2340 = vsub.f32 %v2268, %v2321
        %v2341 = vsub.f32 %v2271, %v2324
        %v2342 = vmul.f32 %v2325, 1.442695
        %v2343 = vpow.pop %v2342
        %v2344 = vmul.f32 %v2326, 1.442695
        %v2345 = vpow.pop %v2344
        %v2346 = vmul.f32 %v2327, 1.442695
        %v2347 = vpow.pop %v2346
        %v2348 = vmul.f32 %v2328, 1.442695
        %v2349 = vpow.pop %v2348
        %v2350 = vmul.f32 %v2329, 1.442695
        %v2351 = vpow.pop %v2350
        %v2352 = vmul.f32 %v2330, 1.442695
        %v2353 = vpow.pop %v2352
        %v2354 = vmul.f32 %v2331, 1.442695
        %v2355 = vpow.pop %v2354
        %v2356 = vmul.f32 %v2332, 1.442695
        %v2357 = vpow.pop %v2356
        %v2358 = vmul.f32 %v2333, 1.442695
        %v2359 = vpow.pop %v2358
        %v2360 = vmul.f32 %v2334, 1.442695
        %v2361 = vpow.pop %v2360
        %v2362 = vmul.f32 %v2335, 1.442695
        %v2363 = vpow.pop %v2362
        %v2364 = vmul.f32 %v2336, 1.442695
        %v2365 = vpow.pop %v2364
        %v2366 = vmul.f32 %v2337, 1.442695
        %v2367 = vpow.pop %v2366
        %v2368 = vmul.f32 %v2338, 1.442695
        %v2369 = vpow.pop %v2368
        %v2370 = vmul.f32 %v2339, 1.442695
        %v2371 = vpow.pop %v2370
        %v2372 = vmul.f32 %v2340, 1.442695
        %v2373 = vpow.pop %v2372
        %v2374 = vmul.f32 %v2341, 1.442695
        %v2375 = vpow.pop %v2374
        %v2376 = vsel %vm1002, %v2343, 0.0
        %2377 = vadd.xlane.f32.xlu0 %v2376
        %v2378 = vpop.xlane.xlu0 %2377
        %v2379 = vsel %vm1002, %v2345, 0.0
        %2380 = vadd.xlane.f32.xlu0 %v2379
        %v2381 = vpop.xlane.xlu0 %2380
        %v2382 = vsel %vm1002, %v2347, 0.0
        %2383 = vadd.xlane.f32.xlu0 %v2382
        %v2384 = vpop.xlane.xlu0 %2383
        %v2385 = vsel %vm1002, %v2349, 0.0
        %2386 = vadd.xlane.f32.xlu0 %v2385
        %v2387 = vpop.xlane.xlu0 %2386
        %v2388 = vsel %vm1002, %v2351, 0.0
        %2389 = vadd.xlane.f32.xlu0 %v2388
        %v2390 = vpop.xlane.xlu0 %2389
        %v2391 = vsel %vm1002, %v2353, 0.0
        %2392 = vadd.xlane.f32.xlu0 %v2391
        %v2393 = vpop.xlane.xlu0 %2392
        %v2394 = vsel %vm1002, %v2355, 0.0
        %2395 = vadd.xlane.f32.xlu0 %v2394
        %v2396 = vpop.xlane.xlu0 %2395
        %v2397 = vsel %vm1002, %v2357, 0.0
        %2398 = vadd.xlane.f32.xlu0 %v2397
        %v2399 = vpop.xlane.xlu0 %2398
        %v2400 = vsel %vm1002, %v2359, 0.0
        %2401 = vadd.xlane.f32.xlu0 %v2400
        %v2402 = vpop.xlane.xlu0 %2401
        %v2403 = vsel %vm1002, %v2361, 0.0
        %2404 = vadd.xlane.f32.xlu0 %v2403
        %v2405 = vpop.xlane.xlu0 %2404
        %v2406 = vsel %vm1002, %v2363, 0.0
        %2407 = vadd.xlane.f32.xlu0 %v2406
        %v2408 = vpop.xlane.xlu0 %2407
        %v2409 = vsel %vm1002, %v2365, 0.0
        %2410 = vadd.xlane.f32.xlu0 %v2409
        %v2411 = vpop.xlane.xlu0 %2410
        %v2412 = vsel %vm1002, %v2367, 0.0
        %2413 = vadd.xlane.f32.xlu0 %v2412
        %v2414 = vpop.xlane.xlu0 %2413
        %v2415 = vsel %vm1002, %v2369, 0.0
        %2416 = vadd.xlane.f32.xlu0 %v2415
        %v2417 = vpop.xlane.xlu0 %2416
        %v2418 = vsel %vm1002, %v2371, 0.0
        %2419 = vadd.xlane.f32.xlu0 %v2418
        %v2420 = vpop.xlane.xlu0 %2419
        %v2421 = vsel %vm1002, %v2373, 0.0
        %2422 = vadd.xlane.f32.xlu0 %v2421
        %v2423 = vpop.xlane.xlu0 %2422
        %v2424 = vsel %vm1002, %v2375, 0.0
        %2425 = vadd.xlane.f32.xlu0 %v2424
        %v2426 = vpop.xlane.xlu0 %2425
        %v2427 = vrcp.pop %v2378
        %v2428 = vrcp.pop %v2381
        %v2429 = vrcp.pop %v2384
        %v2430 = vrcp.pop %v2387
        %v2431 = vrcp.pop %v2390
        %v2432 = vrcp.pop %v2393
        %v2433 = vrcp.pop %v2396
        %v2434 = vrcp.pop %v2399
        %v2435 = vrcp.pop %v2402
        %v2436 = vrcp.pop %v2405
        %v2437 = vrcp.pop %v2408
        %v2438 = vrcp.pop %v2411
        %v2439 = vrcp.pop %v2414
        %v2440 = vrcp.pop %v2417
        %v2441 = vrcp.pop %v2420
        %v2442 = vrcp.pop %v2423
        %v2443 = vrcp.pop %v2426
        %v2444 = vmul.f32 %v2343, %v2427
        %v2445 = vmul.f32 %v2345, %v2428
        %v2446 = vmul.f32 %v2347, %v2429
        %v2447 = vmul.f32 %v2349, %v2430
        %v2448 = vmul.f32 %v2351, %v2431
        %v2449 = vmul.f32 %v2353, %v2432
        %v2450 = vmul.f32 %v2355, %v2433
        %v2451 = vmul.f32 %v2357, %v2434
        %v2452 = vmul.f32 %v2359, %v2435
        %v2453 = vmul.f32 %v2361, %v2436
        %v2454 = vmul.f32 %v2363, %v2437
        %v2455 = vmul.f32 %v2365, %v2438
        %v2456 = vmul.f32 %v2367, %v2439
        %v2457 = vmul.f32 %v2369, %v2440
        %v2458 = vmul.f32 %v2371, %v2441
        %v2459 = vmul.f32 %v2373, %v2442
        %v2460 = vmul.f32 %v2375, %v2443
        %v2461 = vpack.c.bf16 %v2445, %v2444
        %v2462 = vpack.c.bf16 %v2447, %v2446
        %v2463 = vpack.c.bf16 %v2449, %v2448
        %v2464 = vpack.c.bf16 %v2451, %v2450
        %v2465 = vpack.c.bf16 %v2453, %v2452
        %v2466 = vpack.c.bf16 %v2455, %v2454
        %v2467 = vpack.c.bf16 %v2457, %v2456
        %v2468 = vpack.c.bf16 %v2459, %v2458
        %v2469 = vpack.c.bf16 %v2460, %v2460
        %2470 = vrot.lane.b32.xlu0 %v2098, 64
        %v2471 = vpop.permute.xlu0 %2470
        %2472 = vrot.lane.b32.xlu0 %v2099, 64
        %v2473 = vpop.permute.xlu0 %2472
        %v2476 = vsel %vm1002, %v2461, 0
        %v2479 = vsel %vm1002, %v2462, 0
        %v2482 = vsel %vm1002, %v2463, 0
        %v2485 = vsel %vm1002, %v2464, 0
        %v2488 = vsel %vm1002, %v2465, 0
        %v2491 = vsel %vm1002, %v2466, 0
        %v2494 = vsel %vm1002, %v2467, 0
        %v2497 = vsel %vm1002, %v2468, 0
        %v2500 = vsel %vm1002, %v2469, 0
        %v2503 = vand.u32 %v2473, %v1031
        %2505 = vmatpush.bf16.msra.mxu0 0
        %2506 = vmatpush.bf16.msra.mxu0 0
        %2507 = vmatpush.bf16.msra.mxu0 0
        %2508 = vmatpush.bf16.msra.mxu0 0
        %2509 = vmatpush.bf16.msra.mxu0 0
        %2510 = vmatpush.bf16.msra.mxu0 0
        %2511 = vmatpush.bf16.msra.mxu0 %v2503
        %2512 = vmatpush.bf16.msra.mxu0 %v2471
        %2513 = vmatmul.bf16.gmra.mxu0 %v2476
        %v2514 = vpop.f32.mrf.mxu0
        %v2515 = vadd.f32 0.0, %v2514
        %v2516 = vpop.f32.mrf.mxu0
        %v2517 = vadd.f32 0.0, %v2516
        %2518 = vmatmul.bf16.gmra.mxu0 %v2479
        %v2519 = vpop.f32.mrf.mxu0
        %v2520 = vadd.f32 0.0, %v2519
        %v2521 = vpop.f32.mrf.mxu0
        %v2522 = vadd.f32 0.0, %v2521
        %2523 = vmatmul.bf16.gmra.mxu0 %v2482
        %v2524 = vpop.f32.mrf.mxu0
        %v2525 = vadd.f32 0.0, %v2524
        %v2526 = vpop.f32.mrf.mxu0
        %v2527 = vadd.f32 0.0, %v2526
        %2528 = vmatmul.bf16.gmra.mxu0 %v2485
        %v2529 = vpop.f32.mrf.mxu0
        %v2530 = vadd.f32 0.0, %v2529
        %v2531 = vpop.f32.mrf.mxu0
        %v2532 = vadd.f32 0.0, %v2531
        %2533 = vmatmul.bf16.gmra.mxu0 %v2488
        %v2534 = vpop.f32.mrf.mxu0
        %v2535 = vadd.f32 0.0, %v2534
        %v2536 = vpop.f32.mrf.mxu0
        %v2537 = vadd.f32 0.0, %v2536
        %2538 = vmatmul.bf16.gmra.mxu0 %v2491
        %v2539 = vpop.f32.mrf.mxu0
        %v2540 = vadd.f32 0.0, %v2539
        %v2541 = vpop.f32.mrf.mxu0
        %v2542 = vadd.f32 0.0, %v2541
        %2543 = vmatmul.bf16.gmra.mxu0 %v2494
        %v2544 = vpop.f32.mrf.mxu0
        %v2545 = vadd.f32 0.0, %v2544
        %v2546 = vpop.f32.mrf.mxu0
        %v2547 = vadd.f32 0.0, %v2546
        %2548 = vmatmul.bf16.gmra.mxu0 %v2497
        %v2549 = vpop.f32.mrf.mxu0
        %v2550 = vadd.f32 0.0, %v2549
        %v2551 = vpop.f32.mrf.mxu0
        %v2552 = vadd.f32 0.0, %v2551
        %2553 = vmatmul.bf16.gmra.mxu0 %v2500
        %v2554 = vpop.f32.mrf.mxu0
        %v2555 = vadd.f32 0.0, %v2554
        %v2556 = vpop.f32.mrf.mxu0
        %2557 = vdwg.mxu0
        %v2558 = vmul.f32 %v2515, %v726
        %v2559 = vmul.f32 %v2517, %v727
        %v2560 = vmul.f32 %v2520, %v728
        %v2561 = vmul.f32 %v2522, %v729
        %v2562 = vmul.f32 %v2525, %v730
        %v2563 = vmul.f32 %v2527, %v731
        %v2564 = vmul.f32 %v2530, %v732
        %v2565 = vmul.f32 %v2532, %v733
        %v2566 = vmul.f32 %v2535, %v734
        %v2567 = vmul.f32 %v2537, %v735
        %v2568 = vmul.f32 %v2540, %v736
        %v2569 = vmul.f32 %v2542, %v737
        %v2570 = vmul.f32 %v2545, %v738
        %v2571 = vmul.f32 %v2547, %v739
        %v2572 = vmul.f32 %v2550, %v740
        %v2573 = vmul.f32 %v2552, %v741
        %v2574 = vmul.f32 %v2555, %v742
        %v2575 = vpack.c.bf16 %v2559, %v2558
        %v2576 = vpack.c.bf16 %v2561, %v2560
        %v2577 = vpack.c.bf16 %v2563, %v2562
        %v2578 = vpack.c.bf16 %v2565, %v2564
        %v2579 = vpack.c.bf16 %v2567, %v2566
        %v2580 = vpack.c.bf16 %v2569, %v2568
        %v2581 = vpack.c.bf16 %v2571, %v2570
        %v2582 = vpack.c.bf16 %v2573, %v2572
        %v2583 = vpack.c.bf16 %v2574, %v2574
        %v2585 = vsel %vm1538, %v2583, 0
        %2587 = vmatpush.bf16.msra.mxu0 %v2582
        %2588 = vmatpush.bf16.msra.mxu0 %v2581
        %2589 = vmatpush.bf16.msra.mxu0 %v2580
        %2590 = vmatpush.bf16.msra.mxu0 %v2579
        %2591 = vmatpush.bf16.msra.mxu0 %v2578
        %2592 = vmatpush.bf16.msra.mxu0 %v2577
        %2593 = vmatpush.bf16.msra.mxu0 %v2576
        %2594 = vmatpush.bf16.msra.mxu0 %v2575
        %2595 = vmatmul.bf16.gmra.mxu0 %v1525
        %v2596 = vpop.f32.mrf.mxu0
        %v2597 = vadd.f32 0.0, %v2596
        %v2598 = vpop.f32.mrf.mxu0
        %v2599 = vadd.f32 0.0, %v2598
        %2600 = vmatmul.bf16.gmra.mxu0 %v1527
        %v2601 = vpop.f32.mrf.mxu0
        %v2602 = vadd.f32 0.0, %v2601
        %v2603 = vpop.f32.mrf.mxu0
        %2604 = vdwg.mxu0
        %2605 = vmatpush.bf16.msra.mxu0 0
        %2606 = vmatpush.bf16.msra.mxu0 0
        %2607 = vmatpush.bf16.msra.mxu0 0
        %2608 = vmatpush.bf16.msra.mxu0 0
        %2609 = vmatpush.bf16.msra.mxu0 0
        %2610 = vmatpush.bf16.msra.mxu0 0
        %2611 = vmatpush.bf16.msra.mxu0 0
        %2612 = vmatpush.bf16.msra.mxu0 %v2585
        %2613 = vmatmul.bf16.gmra.mxu0 %v1533
        %v2614 = vpop.f32.mrf.mxu0
        %v2615 = vadd.f32 %v2597, %v2614
        %v2616 = vpop.f32.mrf.mxu0
        %v2617 = vadd.f32 %v2599, %v2616
        %2618 = vmatmul.bf16.gmra.mxu0 %v1536
        %v2619 = vpop.f32.mrf.mxu0
        %v2620 = vadd.f32 %v2602, %v2619
        %v2621 = vpop.f32.mrf.mxu0
        %2622 = vdwg.mxu0
        %s2623 = scalar_lea.vmem %s11, 16
        %v2624 = vld [vmem:[%s2623] sm:$0xf]
        %v2625 = vld [vmem:[%s2623 + $0x4] sm:$0xf]
        %v2626 = vld [vmem:[%s2623 + $0x8] sm:$0xf]
        %v2627 = vld [vmem:[%s2623 + $0xc] sm:$0xf]
        %v2628 = vpack.c.bf16 %v2617, %v2615
        %v2629 = vpack.c.bf16 %v2620, %v2620
        %v2634 = vunpack.c.l.b16 %v2624
        %v2635 = vunpack.c.l.b16 %v2625
        %v2636 = vunpack.c.l.b16 %v2626
        %v2637 = vunpack.c.l.b16 %v2627
        %v2638 = vpack.c.b16 %v2635, %v2634
        %v2639 = vpack.c.b16 %v2637, %v2636
        %v2643 = vsel %vm818, %v2628, 0
        %v2646 = vsel %vm818, %v2629, 0
        %2648 = vmatpush.bf16.msra.mxu0 0
        %2649 = vmatpush.bf16.msra.mxu0 0
        %2650 = vmatpush.bf16.msra.mxu0 0
        %2651 = vmatpush.bf16.msra.mxu0 0
        %2652 = vmatpush.bf16.msra.mxu0 0
        %2653 = vmatpush.bf16.msra.mxu0 0
        %2654 = vmatpush.bf16.msra.mxu0 %v2639
        %2655 = vmatpush.bf16.msra.mxu0 %v2638
        %2656 = vmatmul.bf16.gmra.mxu0 %v2643
        %v2657 = vpop.f32.mrf.mxu0
        %v2658 = vadd.f32 0.0, %v2657
        %v2659 = vpop.f32.mrf.mxu0
        %v2660 = vadd.f32 0.0, %v2659
        %2661 = vmatmul.bf16.gmra.mxu0 %v2646
        %v2662 = vpop.f32.mrf.mxu0
        %v2663 = vadd.f32 0.0, %v2662
        %v2664 = vpop.f32.mrf.mxu0
        %2665 = vdwg.mxu0
        %v2666 = vadd.f32 %v1959, %v2658
        %v2667 = vadd.f32 %v1960, %v2660
        %v2668 = vadd.f32 %v1961, %v2663
        %s2669 = scalar_lea.vmem %s12, 1
        %v2670 = vld [vmem:[%s2669] sm:$0x1]
        %v2672 = vperm.slane %v2670, 0
        %v2674 = vadd.f32 %v2666, %v2672
        %v2675 = vadd.f32 %v2667, %v2672
        %v2676 = vadd.f32 %v2668, %v2672
        %s2677 = scalar_lea.vmem %s13, 1
        %v2678 = vld [vmem:[%s2677] sm:$0x1]
        %s2679 = scalar_lea.vmem %s14, 1
        %v2680 = vld [vmem:[%s2679] sm:$0x1]
        %v2681 = vsel %vm818, %v2674, 0.0
        %2682 = vadd.xlane.f32.xlu0 %v2681
        %v2683 = vpop.xlane.xlu0 %2682
        %v2684 = vsel %vm818, %v2675, 0.0
        %2685 = vadd.xlane.f32.xlu0 %v2684
        %v2686 = vpop.xlane.xlu0 %2685
        %v2687 = vsel %vm825, %v2676, 0.0
        %2688 = vadd.xlane.f32.xlu0 %v2687
        %v2689 = vpop.xlane.xlu0 %2688
        %v2690 = vmul.f32 %v2683, %v835
        %v2691 = vmul.f32 %v2686, %v835
        %v2692 = vmul.f32 %v2689, %v835
        %v2693 = vmul.f32 %v2674, %v2674
        %v2694 = vmul.f32 %v2675, %v2675
        %v2695 = vmul.f32 %v2676, %v2676
        %v2696 = vsel %vm818, %v2693, 0.0
        %2697 = vadd.xlane.f32.xlu0 %v2696
        %v2698 = vpop.xlane.xlu0 %2697
        %v2699 = vsel %vm818, %v2694, 0.0
        %2700 = vadd.xlane.f32.xlu0 %v2699
        %v2701 = vpop.xlane.xlu0 %2700
        %v2702 = vsel %vm825, %v2695, 0.0
        %2703 = vadd.xlane.f32.xlu0 %v2702
        %v2704 = vpop.xlane.xlu0 %2703
        %v2705 = vmul.f32 %v2698, %v835
        %v2706 = vmul.f32 %v2701, %v835
        %v2707 = vmul.f32 %v2704, %v835
        %v2708 = vmul.f32 %v2690, %v2690
        %v2709 = vmul.f32 %v2691, %v2691
        %v2710 = vmul.f32 %v2692, %v2692
        %v2711 = vsub.f32 %v2705, %v2708
        %v2712 = vsub.f32 %v2706, %v2709
        %v2713 = vsub.f32 %v2707, %v2710
        %v2714 = vadd.f32 %v2711, 1e-05
        %v2715 = vadd.f32 %v2712, 1e-05
        %v2716 = vadd.f32 %v2713, 1e-05
        %v2717 = vrsqrt.pop %v2714
        %v2718 = vmul.f32 %v2717, %v2714
        %v2719 = vmul.f32 %v2718, %v2717
        %v2720 = vmul.f32 0.5, %v2719
        %v2721 = vsub.f32 1.5, %v2720
        %v2722 = vmul.f32 %v2717, %v2721
        %vm2723 = vweird.f32 %v2714
        %vm2724 = vweird.f32 %v2717
        %vm2725 = vmor %vm2723, %vm2724
        %v2726 = vsel %vm2725, %v2717, %v2722
        %v2727 = vrsqrt.pop %v2715
        %v2728 = vmul.f32 %v2727, %v2715
        %v2729 = vmul.f32 %v2728, %v2727
        %v2730 = vmul.f32 0.5, %v2729
        %v2731 = vsub.f32 1.5, %v2730
        %v2732 = vmul.f32 %v2727, %v2731
        %vm2733 = vweird.f32 %v2715
        %vm2734 = vweird.f32 %v2727
        %vm2735 = vmor %vm2733, %vm2734
        %v2736 = vsel %vm2735, %v2727, %v2732
        %v2737 = vrsqrt.pop %v2716
        %v2738 = vmul.f32 %v2737, %v2716
        %v2739 = vmul.f32 %v2738, %v2737
        %v2740 = vmul.f32 0.5, %v2739
        %v2741 = vsub.f32 1.5, %v2740
        %v2742 = vmul.f32 %v2737, %v2741
        %vm2743 = vweird.f32 %v2716
        %vm2744 = vweird.f32 %v2737
        %vm2745 = vmor %vm2743, %vm2744
        %v2746 = vsel %vm2745, %v2737, %v2742
        %v2747 = vsub.f32 %v2674, %v2690
        %v2748 = vsub.f32 %v2675, %v2691
        %v2749 = vsub.f32 %v2676, %v2692
        %v2750 = vmul.f32 %v2747, %v2726
        %v2751 = vmul.f32 %v2748, %v2736
        %v2752 = vmul.f32 %v2749, %v2746
        %v2754 = vperm.slane %v2678, 0
        %v2756 = vmul.f32 %v2750, %v2754
        %v2757 = vmul.f32 %v2751, %v2754
        %v2758 = vmul.f32 %v2752, %v2754
        %v2760 = vperm.slane %v2680, 0
        %v2762 = vadd.f32 %v2756, %v2760
        %v2763 = vadd.f32 %v2757, %v2760
        %v2764 = vadd.f32 %v2758, %v2760
        %s2765 = scalar_lea.vmem %s15, 16
        %v2766 = vld [vmem:[%s2765] sm:$0xf]
        %v2767 = vld [vmem:[%s2765 + $0x4] sm:$0xf]
        %v2768 = vld [vmem:[%s2765 + $0x8] sm:$0xf]
        %v2769 = vld [vmem:[%s2765 + $0xc] sm:$0xf]
        %v2770 = vpack.c.bf16 %v2763, %v2762
        %v2771 = vpack.c.bf16 %v2764, %v2764
        %s2772 = scalar_lea.vmem %s16, 1
        %v2773 = vld [vmem:[%s2772] sm:$0x1]
        %v2775 = vperm.slane %v2773, 0
        %v2781 = vunpack.c.l.b16 %v2766
        %v2782 = vunpack.c.l.b16 %v2767
        %v2783 = vunpack.c.l.b16 %v2768
        %v2784 = vunpack.c.l.b16 %v2769
        %v2785 = vpack.c.b16 %v2782, %v2781
        %v2786 = vpack.c.b16 %v2784, %v2783
        %v2790 = vsel %vm818, %v2770, 0
        %v2793 = vsel %vm818, %v2771, 0
        %2795 = vmatpush.bf16.msra.mxu0 0
        %2796 = vmatpush.bf16.msra.mxu0 0
        %2797 = vmatpush.bf16.msra.mxu0 0
        %2798 = vmatpush.bf16.msra.mxu0 0
        %2799 = vmatpush.bf16.msra.mxu0 0
        %2800 = vmatpush.bf16.msra.mxu0 0
        %2801 = vmatpush.bf16.msra.mxu0 %v2786
        %2802 = vmatpush.bf16.msra.mxu0 %v2785
        %2803 = vmatmul.bf16.gmra.mxu0 %v2790
        %v2804 = vpop.f32.mrf.mxu0
        %v2805 = vadd.f32 %v2775, %v2804
        %v2806 = vpop.f32.mrf.mxu0
        %v2807 = vadd.f32 %v2775, %v2806
        %2808 = vmatmul.bf16.gmra.mxu0 %v2793
        %v2809 = vpop.f32.mrf.mxu0
        %v2810 = vadd.f32 %v2775, %v2809
        %v2811 = vpop.f32.mrf.mxu0
        %2812 = vdwg.mxu0
        %v2813 = vmul.f32 %v2805, 0.5
        %v2814 = vmul.f32 %v2807, 0.5
        %v2815 = vmul.f32 %v2810, 0.5
        %v2816 = vmul.f32 %v2805, 0.70710677
        %v2817 = vmul.f32 %v2807, 0.70710677
        %v2818 = vmul.f32 %v2810, 0.70710677
        %v2819 = vmul.f32 %v2816, %v2816
        %v2820 = vmin.f32 16.0, %v2819
        %v2821 = vmul.f32 %v2820, 2.1237322e-06
        %v2822 = vadd.f32 %v2821, 0.00028619796
        %v2823 = vmul.f32 %v2820, %v2822
        %v2824 = vadd.f32 %v2823, 0.0036580483
        %v2825 = vmul.f32 %v2820, %v2824
        %v2826 = vadd.f32 %v2825, 0.05243302
        %v2827 = vmul.f32 %v2820, %v2826
        %v2828 = vadd.f32 %v2827, 0.18741608
        %v2829 = vmul.f32 %v2820, %v2828
        %v2830 = vadd.f32 %v2829, 1.1283791
        %v2831 = vmul.f32 %v2816, %v2830
        %v2832 = vmul.f32 %v2820, 3.8918573e-05
        %v2833 = vadd.f32 %v2832, 0.001143296
        %v2834 = vmul.f32 %v2820, %v2833
        %v2835 = vadd.f32 %v2834, 0.014752088
        %v2836 = vmul.f32 %v2820, %v2835
        %v2837 = vadd.f32 %v2836, 0.112945676
        %v2838 = vmul.f32 %v2820, %v2837
        %v2839 = vadd.f32 %v2838, 0.4994258
        %v2840 = vmul.f32 %v2820, %v2839
        %v2841 = vadd.f32 %v2840, 1.0
        %v2842 = vrcp.pop %v2841
        %v2843 = vmul.f32 %v2841, %v2842
        %v2844 = vsub.f32 1.0, %v2843
        %v2845 = vmul.f32 %v2842, %v2844
        %v2846 = vadd.f32 %v2842, %v2845
        %vm2847 = vweird.f32 %v2841
        %vm2848 = vweird.f32 %v2842
        %vm2849 = vmor %vm2847, %vm2848
        %v2850 = vsel %vm2849, %v2842, %v2846
        %v2851 = vand.u32 2147483647, %v2841
        %vm2852 = vcmp.eq.f32.partialorder %v2851, 8.507059e+37
        %v2853 = vand.u32 %v2841, 2147483648
        %v2854 = vor.u32 1.1754944e-38, %v2853
        %v2855 = vsel %vm2852, %v2854, %v2850
        %v2856 = vmul.f32 %v2831, %v2855
        %v2857 = vmin.f32 %v2856, 1.0
        %v2858 = vmax.f32 %v2857, -1.0
        %v2859 = vmul.f32 %v2817, %v2817
        %v2860 = vmin.f32 16.0, %v2859
        %v2861 = vmul.f32 %v2860, 2.1237322e-06
        %v2862 = vadd.f32 %v2861, 0.00028619796
        %v2863 = vmul.f32 %v2860, %v2862
        %v2864 = vadd.f32 %v2863, 0.0036580483
        %v2865 = vmul.f32 %v2860, %v2864
        %v2866 = vadd.f32 %v2865, 0.05243302
        %v2867 = vmul.f32 %v2860, %v2866
        %v2868 = vadd.f32 %v2867, 0.18741608
        %v2869 = vmul.f32 %v2860, %v2868
        %v2870 = vadd.f32 %v2869, 1.1283791
        %v2871 = vmul.f32 %v2817, %v2870
        %v2872 = vmul.f32 %v2860, 3.8918573e-05
        %v2873 = vadd.f32 %v2872, 0.001143296
        %v2874 = vmul.f32 %v2860, %v2873
        %v2875 = vadd.f32 %v2874, 0.014752088
        %v2876 = vmul.f32 %v2860, %v2875
        %v2877 = vadd.f32 %v2876, 0.112945676
        %v2878 = vmul.f32 %v2860, %v2877
        %v2879 = vadd.f32 %v2878, 0.4994258
        %v2880 = vmul.f32 %v2860, %v2879
        %v2881 = vadd.f32 %v2880, 1.0
        %v2882 = vrcp.pop %v2881
        %v2883 = vmul.f32 %v2881, %v2882
        %v2884 = vsub.f32 1.0, %v2883
        %v2885 = vmul.f32 %v2882, %v2884
        %v2886 = vadd.f32 %v2882, %v2885
        %vm2887 = vweird.f32 %v2881
        %vm2888 = vweird.f32 %v2882
        %vm2889 = vmor %vm2887, %vm2888
        %v2890 = vsel %vm2889, %v2882, %v2886
        %v2891 = vand.u32 2147483647, %v2881
        %vm2892 = vcmp.eq.f32.partialorder %v2891, 8.507059e+37
        %v2893 = vand.u32 %v2881, 2147483648
        %v2894 = vor.u32 1.1754944e-38, %v2893
        %v2895 = vsel %vm2892, %v2894, %v2890
        %v2896 = vmul.f32 %v2871, %v2895
        %v2897 = vmin.f32 %v2896, 1.0
        %v2898 = vmax.f32 %v2897, -1.0
        %v2899 = vmul.f32 %v2818, %v2818
        %v2900 = vmin.f32 16.0, %v2899
        %v2901 = vmul.f32 %v2900, 2.1237322e-06
        %v2902 = vadd.f32 %v2901, 0.00028619796
        %v2903 = vmul.f32 %v2900, %v2902
        %v2904 = vadd.f32 %v2903, 0.0036580483
        %v2905 = vmul.f32 %v2900, %v2904
        %v2906 = vadd.f32 %v2905, 0.05243302
        %v2907 = vmul.f32 %v2900, %v2906
        %v2908 = vadd.f32 %v2907, 0.18741608
        %v2909 = vmul.f32 %v2900, %v2908
        %v2910 = vadd.f32 %v2909, 1.1283791
        %v2911 = vmul.f32 %v2818, %v2910
        %v2912 = vmul.f32 %v2900, 3.8918573e-05
        %v2913 = vadd.f32 %v2912, 0.001143296
        %v2914 = vmul.f32 %v2900, %v2913
        %v2915 = vadd.f32 %v2914, 0.014752088
        %v2916 = vmul.f32 %v2900, %v2915
        %v2917 = vadd.f32 %v2916, 0.112945676
        %v2918 = vmul.f32 %v2900, %v2917
        %v2919 = vadd.f32 %v2918, 0.4994258
        %v2920 = vmul.f32 %v2900, %v2919
        %v2921 = vadd.f32 %v2920, 1.0
        %v2922 = vrcp.pop %v2921
        %v2923 = vmul.f32 %v2921, %v2922
        %v2924 = vsub.f32 1.0, %v2923
        %v2925 = vmul.f32 %v2922, %v2924
        %v2926 = vadd.f32 %v2922, %v2925
        %vm2927 = vweird.f32 %v2921
        %vm2928 = vweird.f32 %v2922
        %vm2929 = vmor %vm2927, %vm2928
        %v2930 = vsel %vm2929, %v2922, %v2926
        %v2931 = vand.u32 2147483647, %v2921
        %vm2932 = vcmp.eq.f32.partialorder %v2931, 8.507059e+37
        %v2933 = vand.u32 %v2921, 2147483648
        %v2934 = vor.u32 1.1754944e-38, %v2933
        %v2935 = vsel %vm2932, %v2934, %v2930
        %v2936 = vmul.f32 %v2911, %v2935
        %v2937 = vmin.f32 %v2936, 1.0
        %v2938 = vmax.f32 %v2937, -1.0
        %v2939 = vadd.f32 %v2858, 1.0
        %v2940 = vadd.f32 %v2898, 1.0
        %v2941 = vadd.f32 %v2938, 1.0
        %v2942 = vmul.f32 %v2813, %v2939
        %v2943 = vmul.f32 %v2814, %v2940
        %v2944 = vmul.f32 %v2815, %v2941
        %s2945 = scalar_lea.vmem %s17, 32
        %v2946 = vld [vmem:[%s2945] sm:$0xf]
        %v2947 = vld [vmem:[%s2945 + $0x4] sm:$0xf]
        %v2948 = vld [vmem:[%s2945 + $0x8] sm:$0xf]
        %v2949 = vld [vmem:[%s2945 + $0xc] sm:$0xf]
        %v2950 = vld [vmem:[%s2945 + $0x10] sm:$0xf]
        %v2951 = vld [vmem:[%s2945 + $0x14] sm:$0xf]
        %v2952 = vld [vmem:[%s2945 + $0x18] sm:$0xf]
        %v2953 = vld [vmem:[%s2945 + $0x1c] sm:$0xf]
        %v2954 = vpack.c.bf16 %v2943, %v2942
        %v2955 = vpack.c.bf16 %v2944, %v2944
        %v2964 = vunpack.c.l.b16 %v2946
        %v2965 = vunpack.c.l.b16 %v2947
        %v2966 = vunpack.c.l.b16 %v2948
        %v2967 = vunpack.c.l.b16 %v2949
        %v2968 = vunpack.c.l.b16 %v2950
        %v2969 = vunpack.c.l.b16 %v2951
        %v2970 = vunpack.c.l.b16 %v2952
        %v2971 = vunpack.c.l.b16 %v2953
        %v2972 = vpack.c.b16 %v2965, %v2964
        %v2973 = vpack.c.b16 %v2967, %v2966
        %v2974 = vpack.c.b16 %v2969, %v2968
        %v2975 = vpack.c.b16 %v2971, %v2970
        %v2981 = vsel %vm787, %v2954, 0
        %v2984 = vsel %vm787, %v2955, 0
        %2986 = vmatpush.bf16.msra.mxu0 0
        %2987 = vmatpush.bf16.msra.mxu0 0
        %2988 = vmatpush.bf16.msra.mxu0 0
        %2989 = vmatpush.bf16.msra.mxu0 0
        %2990 = vmatpush.bf16.msra.mxu0 %v2975
        %2991 = vmatpush.bf16.msra.mxu0 %v2974
        %2992 = vmatpush.bf16.msra.mxu0 %v2973
        %2993 = vmatpush.bf16.msra.mxu0 %v2972
        %2994 = vmatmul.bf16.gmra.mxu0 %v2981
        %v2995 = vpop.f32.mrf.mxu0
        %v2996 = vadd.f32 0.0, %v2995
        %v2997 = vpop.f32.mrf.mxu0
        %2998 = vmatmul.bf16.gmra.mxu0 %v2984
        %v2999 = vpop.f32.mrf.mxu0
        %v3000 = vpop.f32.mrf.mxu0
        %3001 = vdwg.mxu0
        %v3002 = vadd.f32 %v2674, %v2996
        %s3003 = scalar_lea.vmem %s18, 1
        %v3004 = vld [vmem:[%s3003] sm:$0x1]
        %v3006 = vperm.slane %v3004, 0
        %v3008 = vadd.f32 %v3002, %v3006
        %v3009 = vld [vmem:[%s19] sm:$0x1]
        %v3010 = vld [vmem:[%s20] sm:$0x1]
        %v3011 = vsel %vm825, %v3008, 0.0
        %3012 = vadd.xlane.f32.xlu0 %v3011
        %v3013 = vpop.xlane.xlu0 %3012
        %v3014 = vmul.f32 %v3013, %v835
        %v3015 = vmul.f32 %v3008, %v3008
        %v3016 = vsel %vm825, %v3015, 0.0
        %3017 = vadd.xlane.f32.xlu0 %v3016
        %v3018 = vpop.xlane.xlu0 %3017
        %v3019 = vmul.f32 %v3018, %v835
        %v3020 = vmul.f32 %v3014, %v3014
        %v3021 = vsub.f32 %v3019, %v3020
        %v3022 = vadd.f32 %v3021, 1e-05
        %v3023 = vrsqrt.pop %v3022
        %v3024 = vmul.f32 %v3023, %v3022
        %v3025 = vmul.f32 %v3024, %v3023
        %v3026 = vmul.f32 0.5, %v3025
        %v3027 = vsub.f32 1.5, %v3026
        %v3028 = vmul.f32 %v3023, %v3027
        %vm3029 = vweird.f32 %v3022
        %vm3030 = vweird.f32 %v3023
        %vm3031 = vmor %vm3029, %vm3030
        %v3032 = vsel %vm3031, %v3023, %v3028
        %v3033 = vsub.f32 %v3008, %v3014
        %v3034 = vmul.f32 %v3033, %v3032
        %v3035 = vmul.f32 %v3034, %v3009
        %v3036 = vadd.f32 %v3035, %v3010
        %v3037 = vld [vmem:[%s21] sm:$0xf]
        %v3038 = vld [vmem:[%s21 + $0x4] sm:$0xf]
        %v3039 = vld [vmem:[%s21 + $0x8] sm:$0xf]
        %v3040 = vld [vmem:[%s21 + $0xc] sm:$0xf]
        %v3041 = vpack.c.bf16 %v3036, %v3036
        %v3042 = vld [vmem:[%s22] sm:$0x1]
        %v3047 = vunpack.c.l.b16 %v3037
        %v3048 = vunpack.c.l.b16 %v3038
        %v3049 = vunpack.c.l.b16 %v3039
        %v3050 = vunpack.c.l.b16 %v3040
        %v3051 = vpack.c.b16 %v3048, %v3047
        %v3052 = vpack.c.b16 %v3050, %v3049
        %v3056 = vsel %vm818, %v3041, 0
        %3058 = vmatpush.bf16.msra.mxu0 0
        %3059 = vmatpush.bf16.msra.mxu0 0
        %3060 = vmatpush.bf16.msra.mxu0 0
        %3061 = vmatpush.bf16.msra.mxu0 0
        %3062 = vmatpush.bf16.msra.mxu0 0
        %3063 = vmatpush.bf16.msra.mxu0 0
        %3064 = vmatpush.bf16.msra.mxu0 %v3052
        %3065 = vmatpush.bf16.msra.mxu0 %v3051
        %3066 = vmatmul.bf16.gmra.mxu0 %v3056
        %v3067 = vpop.f32.mrf.mxu0
        %v3068 = vadd.f32 %v3042, %v3067
        %v3069 = vpop.f32.mrf.mxu0
        %3070 = vdwg.mxu0
        %3071 = vst [vmem:[%s702] sm:$0x1] %v3068
        %s3072 = sand.u32 %s533, 1
        %s3073 = scalar_lea.sflag [#allocation3], %s3072
        %s3074 = sand.u32 %s533, 1
        %s3075 = scalar_lea.vmem [#allocation2], %s3074
        // Predicated region
        $region113: #{vit_forward.1} parent=111 // pred_check
          %p3076 = pneg %p543
        $region114: #{vit_forward.1} parent=111 // pred_check_branch
          %3078 = sbr.rel (%p3076) target = $region116
        $region115: #{vit_forward.1} parent=111 // pred_region
          %3080 = vsyncadd %s3073, 0
          %s3081 = scalar_lea.hbm %s23, %s37
          %s3083 = sshll.u32 %s3075, 4
          %s3084 = int_to_ptr.vmem [resolvable:$true] %s3083
          %s3085 = sshll.u32 %s3081, 4
          %s3086 = int_to_ptr.hbm [resolvable:$true] %s3085
          %3088 = dma.vmem_to_hbm [thread:$0]  %s3084, 16, %s3086, %s3073
        $region116: #{vit_forward.1} parent=111 // pred_fallthru
          _
      $region112: #{vit_forward.1} parent=5 // pred_fallthru
        _
      %p3089 = scmp.le.s32.totalorder 2, %s32
      // Predicated region
      $region117: #{vit_forward.1} parent=5 // pred_check
        %p3090 = pneg %p3089
      $region118: #{vit_forward.1} parent=5 // pred_check_branch
        %3092 = sbr.rel (%p3090) target = $region120
      $region119: #{vit_forward.1} parent=5 // pred_region
        %s3093 = ssub.s32 %s32, 2
        // Predicated region
        $region121: #{vit_forward.1} parent=119 // pred_check
          %p3094 = pneg %p549
        $region122: #{vit_forward.1} parent=119 // pred_check_branch
          %3096 = sbr.rel (%p3094) target = $region124
        $region123: #{vit_forward.1} parent=119 // pred_region
          %s3097 = sand.u32 %s534, 1
          %s3098 = scalar_lea.sflag [#allocation3], %s3097
          %s3099 = sand.u32 %s534, 1
          %s3100 = scalar_lea.vmem [#allocation2], %s3099
          %3102 = dma.done %s3098, 16
        $region124: #{vit_forward.1} parent=119 // pred_fallthru
          _
      $region120: #{vit_forward.1} parent=5 // pred_fallthru
        _
    $region6: #{vit_forward.1} parent=1 // loop_footer
      %s36 = sadd.s32 1, %s32
    $region7: #{vit_forward.1} parent=1 // loop_footer_branch
      %31 = sbr.rel target = $region3
    $region8: #{vit_forward.1} parent=1 // loop_exit
      _
    %3103 = vsyncpa [#allocation3], 1
    %s3104 = scalar_lea.sflag [#allocation3], 1
    %3105 = vsyncpa %s3104, 1

</llo_original>
